<compile_context>
chip_gen: v7x
topology: tpu7x:2x2x1
jax: 0.10.0
libtpu: 0.0.40
codegen_flags: <defaults>
</compile_context>

<pallas_src>
import functools

import jax
import jax.numpy as jnp
from jax import lax
from jax.experimental import pallas as pl
from jax.experimental.pallas import tpu as pltpu

EPS = 1e-5        # torch BatchNorm2d default eps
LANE = 128        # TPU lane width


# ---------------------------------------------------------------------------
# small helpers
# ---------------------------------------------------------------------------
def _round_up(x, m):
    return ((x + m - 1) // m) * m


def _pick_tile(m):
    for t in (1024, 512, 256, 128, 64, 32, 16, 8):
        if m % t == 0:
            return t
    return m


def _compiler_params(block_bytes, semantics):
    # A few double-buffered blocks + headroom; cap below v7x's 64 MiB VMEM.
    limit = int(min(max(8 * block_bytes, 16 * 1024 * 1024), 60 * 1024 * 1024))
    return pltpu.CompilerParams(dimension_semantics=semantics,
                                vmem_limit_bytes=limit)


def _pad_last(a, c):
    pad = c - a.shape[-1]
    if pad == 0:
        return a
    return jnp.pad(a, [(0, 0)] * (a.ndim - 1) + [(0, pad)])


# ---------------------------------------------------------------------------
# Sweep 1: conv (shifted-window tap matmuls) + BatchNorm statistics
# ---------------------------------------------------------------------------
def _conv_stats_kernel(x_ref, w_ref, y_ref, sum_ref, ssq_ref, *, offsets, Ho, Wo):
    @pl.when(pl.program_id(0) == 0)
    def _init():
        sum_ref[...] = jnp.zeros_like(sum_ref)
        ssq_ref[...] = jnp.zeros_like(ssq_ref)

    cpad = y_ref.shape[-1]
    xp = x_ref[0]                                    # (Gh, Gw, Ck)
    acc = jnp.zeros((Ho * Wo, cpad), jnp.float32)
    for t, (dh, dw) in enumerate(offsets):
        xs = xp[dh:dh + Ho, dw:dw + Wo, :]           # (Ho, Wo, Ck), unit stride
        # flatten spatial dims (lane dim untouched); reshape done in f32 then
        # cast back to the (possibly bf16) matmul dtype
        xs2 = xs.astype(jnp.float32).reshape(Ho * Wo, xs.shape[-1]).astype(xp.dtype)
        acc = acc + jnp.dot(xs2, w_ref[t], preferred_element_type=jnp.float32)
    y_ref[0] = acc
    sum_ref[...] = sum_ref[...] + jnp.sum(acc, axis=0, keepdims=True)
    ssq_ref[...] = ssq_ref[...] + jnp.sum(acc * acc, axis=0, keepdims=True)


def conv_stats(x_pad, w_taps, Ho, Wo, offsets):
    """x_pad: (N, Gh, Gw, Ck) spatially padded (or space-to-depth'd) activation.
    w_taps: (T, Ck, Cpad) per-tap weights (Cpad lane-padded to 128).
    Returns (y_raw (N, Ho*Wo, Cpad) f32, sum (1, Cpad), sumsq (1, Cpad))."""
    N, Gh, Gw, Ck = x_pad.shape
    T, Ck2, Cpad = w_taps.shape
    assert Ck2 == Ck and T == len(offsets)
    m_img = Ho * Wo
    itemsize = x_pad.dtype.itemsize
    kernel = functools.partial(_conv_stats_kernel, offsets=tuple(offsets),
                               Ho=Ho, Wo=Wo)
    block_bytes = (Gh * Gw * Ck + T * Ck * Cpad) * itemsize + 2 * m_img * Cpad * 4
    flops = 2 * N * m_img * T * Ck * Cpad
    bytes_accessed = ((N * Gh * Gw * Ck + T * Ck * Cpad) * itemsize
                      + (N * m_img * Cpad + 2 * Cpad) * 4)
    return pl.pallas_call(
        kernel,
        out_shape=(jax.ShapeDtypeStruct((N, m_img, Cpad), jnp.float32),
                   jax.ShapeDtypeStruct((1, Cpad), jnp.float32),
                   jax.ShapeDtypeStruct((1, Cpad), jnp.float32)),
        grid=(N,),
        in_specs=[pl.BlockSpec((1, Gh, Gw, Ck), lambda n: (n, 0, 0, 0)),
                  pl.BlockSpec((T, Ck, Cpad), lambda n: (0, 0, 0))],
        out_specs=(pl.BlockSpec((1, m_img, Cpad), lambda n: (n, 0, 0)),
                   pl.BlockSpec((1, Cpad), lambda n: (0, 0)),
                   pl.BlockSpec((1, Cpad), lambda n: (0, 0))),
        # stats outputs are revisited accumulators -> reduction axis "arbitrary"
        compiler_params=_compiler_params(block_bytes, ("arbitrary",)),
        cost_estimate=pl.CostEstimate(flops=flops, transcendentals=0,
                                      bytes_accessed=bytes_accessed),
    )(x_pad, w_taps)


# ---------------------------------------------------------------------------
# Sweep 2: fused BN affine (+ optional residual) + ReLU, row-tiled, "parallel"
# ---------------------------------------------------------------------------
def _bn_act_kernel(y_ref, sc_ref, sh_ref, o_ref, *, relu):
    y = y_ref[...] * sc_ref[...] + sh_ref[...]
    if relu:
        y = jnp.maximum(y, 0.0)
    o_ref[...] = y


def _bn_res_relu_kernel(y_ref, sc_ref, sh_ref, r_ref, o_ref):
    y = y_ref[...] * sc_ref[...] + sh_ref[...] + r_ref[...]
    o_ref[...] = jnp.maximum(y, 0.0)


def bn_act(y, scale, shift, *, relu=True, residual=None):
    M, Cpad = y.shape
    tm = _pick_tile(M)
    in_specs = [pl.BlockSpec((tm, Cpad), lambda i: (i, 0)),
                pl.BlockSpec((1, Cpad), lambda i: (0, 0)),
                pl.BlockSpec((1, Cpad), lambda i: (0, 0))]
    args = [y, scale, shift]
    if residual is not None:
        kernel = _bn_res_relu_kernel
        in_specs.append(pl.BlockSpec((tm, Cpad), lambda i: (i, 0)))
        args.append(residual)
    else:
        kernel = functools.partial(_bn_act_kernel, relu=relu)
    big = 2 + (residual is not None)
    block_bytes = big * tm * Cpad * 4
    bytes_accessed = big * M * Cpad * 4 + 2 * Cpad * 4
    flops = (3 + (residual is not None)) * M * Cpad
    return pl.pallas_call(
        kernel,
        out_shape=jax.ShapeDtypeStruct((M, Cpad), jnp.float32),
        grid=(M // tm,),
        in_specs=in_specs,
        out_specs=pl.BlockSpec((tm, Cpad), lambda i: (i, 0)),
        compiler_params=_compiler_params(block_bytes, ("parallel",)),
        cost_estimate=pl.CostEstimate(flops=flops, transcendentals=0,
                                      bytes_accessed=bytes_accessed),
    )(*args)


def _bn_affine(s, q, count, gamma_pad, beta_pad):
    # Training-mode BN: biased variance over N*H*W; f32 accumulation upstream,
    # clamp var >= 0 to guard the E[x^2] - E[x]^2 cancellation.
    mean = s / count
    var = jnp.maximum(q / count - mean * mean, 0.0)
    scale = gamma_pad * lax.rsqrt(var + EPS)
    shift = beta_pad - mean * scale
    return scale, shift


# ---------------------------------------------------------------------------
# Weight packing (conv bias intentionally dropped: BN cancels it exactly)
# ---------------------------------------------------------------------------
def _taps_stride1(w_oihw, cpad):
    # (Cout, Cin, 3, 3) -> (9, Cin, cpad); tap order t = kh*3 + kw
    cout, cin = w_oihw.shape[0], w_oihw.shape[1]
    w = jnp.transpose(w_oihw, (2, 3, 1, 0)).reshape(9, cin, cout)
    return _pad_last(w, cpad)


def _taps_stride2_s2d(w_oihw, cpad):
    # stride-2 3x3 conv == stride-1 2x2 conv over space-to-depth(2) input.
    # tap (a, b) in {0,1}^2; depth-block channel order (dr, dc, cin).
    cout, cin = w_oihw.shape[0], w_oihw.shape[1]
    w = jnp.transpose(w_oihw, (2, 3, 1, 0))            # (3,3,cin,cout)
    w4 = jnp.pad(w, ((0, 1), (0, 1), (0, 0), (0, 0)))  # (4,4,cin,cout), zero taps
    taps = []
    for a in range(2):
        for b in range(2):
            blk = w4[2 * a:2 * a + 2, 2 * b:2 * b + 2]  # (dr, dc, cin, cout)
            taps.append(blk.reshape(4 * cin, cout))
    return _pad_last(jnp.stack(taps), cpad)             # (4, 4*cin, cpad)


def _space_to_depth2(x):
    n, h, w, c = x.shape
    x = x.reshape(n, h // 2, 2, w // 2, 2, c)
    x = jnp.transpose(x, (0, 1, 3, 2, 4, 5))
    return x.reshape(n, h // 2, w // 2, 4 * c)


# ---------------------------------------------------------------------------
# One fused conv -> BN(train) [-> +residual] -> ReLU block (two sweeps)
# ---------------------------------------------------------------------------
def _conv_bn_block(x_pad, w_taps, offsets, Ho, Wo, gamma, beta, cpad, *,
                   residual=None, mm_dtype=jnp.float32):
    n = x_pad.shape[0]
    m = n * Ho * Wo
    y_raw, s, q = conv_stats(x_pad.astype(mm_dtype), w_taps.astype(mm_dtype),
                             Ho, Wo, offsets)
    scale, shift = _bn_affine(s, q, float(m),
                              _pad_last(gamma, cpad), _pad_last(beta, cpad))
    return bn_act(y_raw.reshape(m, cpad), scale, shift, relu=True,
                  residual=residual)


# ---------------------------------------------------------------------------
# Parameters (deterministic in-script init mirroring the module's shapes)
# ---------------------------------------------------------------------------
def init_params(key, in_channels, out_channels):
    ks = jax.random.split(key, 6)

    def conv(k, cin, cout):
        kw, kb = jax.random.split(k)
        lim = 1.0 / jnp.sqrt(jnp.float32(cin * 9))
        w = jax.random.uniform(kw, (cout, cin, 3, 3), jnp.float32, -lim, lim)
        b = jax.random.uniform(kb, (1, cout), jnp.float32, -lim, lim)
        return w, b

    def bn(k, c):
        kg, kb = jax.random.split(k)
        g = 1.0 + 0.1 * jax.random.normal(kg, (1, c), jnp.float32)
        be = 0.1 * jax.random.normal(kb, (1, c), jnp.float32)
        return g, be

    res_w1, res_b1 = conv(ks[0], in_channels, in_channels)
    res_g1, res_be1 = bn(ks[1], in_channels)
    res_w2, res_b2 = conv(ks[2], in_channels, in_channels)
    res_g2, res_be2 = bn(ks[3], in_channels)
    down_w, down_b = conv(ks[4], in_channels, out_channels)
    down_g, down_be = bn(ks[5], out_channels)
    return dict(res_w1=res_w1, res_b1=res_b1, res_g1=res_g1, res_be1=res_be1,
                res_w2=res_w2, res_b2=res_b2, res_g2=res_g2, res_be2=res_be2,
                down_w=down_w, down_b=down_b, down_g=down_g, down_be=down_be)


# ---------------------------------------------------------------------------
# DownConv.forward
# ---------------------------------------------------------------------------
def down_conv_forward(x_nchw, p, *, mm_dtype=jnp.float32):
    x = jnp.transpose(x_nchw, (0, 2, 3, 1)).astype(jnp.float32)   # NHWC
    N, H, W, Cin = x.shape
    assert H % 2 == 0 and W % 2 == 0, "space-to-depth down conv needs even H, W"
    Cout = p['down_w'].shape[0]
    cp_in = _round_up(Cin, LANE)      # lane-dense intermediate channel width
    cp_out = _round_up(Cout, LANE)

    offs1 = tuple((kh, kw) for kh in range(3) for kw in range(3))
    offs2 = tuple((a, b) for a in range(2) for b in range(2))

    # ---- ResidualBlock conv1 -> BN -> ReLU
    xp1 = jnp.pad(x, ((0, 0), (1, 1), (1, 1), (0, 0)))
    h1 = _conv_bn_block(xp1, _taps_stride1(p['res_w1'], cp_in), offs1, H, W,
                        p['res_g1'], p['res_be1'], cp_in, mm_dtype=mm_dtype)
    h1_nhwc = h1[:, :Cin].reshape(N, H, W, Cin)

    # ---- ResidualBlock conv2 -> BN -> (+x) -> ReLU
    xp2 = jnp.pad(h1_nhwc, ((0, 0), (1, 1), (1, 1), (0, 0)))
    res = _pad_last(x.reshape(N * H * W, Cin), cp_in)
    bp = _conv_bn_block(xp2, _taps_stride1(p['res_w2'], cp_in), offs1, H, W,
                        p['res_g2'], p['res_be2'], cp_in, residual=res,
                        mm_dtype=mm_dtype)
    before_pool = bp[:, :Cin].reshape(N, H, W, Cin)

    # ---- down: Conv2d(k=3, s=2, p=1) -> BN -> ReLU  (space-to-depth, no
    #      strided HBM im2col)
    bpp = jnp.pad(before_pool, ((0, 0), (1, 1), (1, 1), (0, 0)))
    xd = _space_to_depth2(bpp)
    Ho, Wo = H // 2, W // 2
    d = _conv_bn_block(xd, _taps_stride2_s2d(p['down_w'], cp_out), offs2, Ho, Wo,
                       p['down_g'], p['down_be'], cp_out, mm_dtype=mm_dtype)
    down = d[:, :Cout].reshape(N, Ho, Wo, Cout)

    # back to NCHW like torch
    return (jnp.transpose(down, (0, 3, 1, 2)),
            jnp.transpose(before_pool, (0, 3, 1, 2)))


# ---------------------------------------------------------------------------
# Pure-JAX reference (for correctness check only)
# ---------------------------------------------------------------------------
def _ref_conv(x, w, b, stride):
    y = lax.conv_general_dilated(x, w, (stride, stride), [(1, 1), (1, 1)],
                                 dimension_numbers=('NCHW', 'OIHW', 'NCHW'),
                                 precision=lax.Precision.HIGHEST)
    return y + b.reshape(1, -1, 1, 1)


def _ref_bn(x, g, be):
    mean = jnp.mean(x, axis=(0, 2, 3), keepdims=True)
    var = jnp.mean((x - mean) ** 2, axis=(0, 2, 3), keepdims=True)
    return ((x - mean) * lax.rsqrt(var + EPS) * g.reshape(1, -1, 1, 1)
            + be.reshape(1, -1, 1, 1))


def down_conv_reference(x, p):
    h = jnp.maximum(_ref_bn(_ref_conv(x, p['res_w1'], p['res_b1'], 1),
                            p['res_g1'], p['res_be1']), 0.0)
    h = _ref_bn(_ref_conv(h, p['res_w2'], p['res_b2'], 1), p['res_g2'], p['res_be2'])
    before = jnp.maximum(h + x, 0.0)
    d = jnp.maximum(_ref_bn(_ref_conv(before, p['down_w'], p['down_b'], 2),
                            p['down_g'], p['down_be']), 0.0)
    return d, before


if __name__ == "__main__":
    key = jax.random.PRNGKey(0)
    kx, kp = jax.random.split(key)
    N, Cin, H, W, Cout = 2, 4, 16, 16, 8
    x = jax.random.normal(kx, (N, Cin, H, W), jnp.float32)
    params = init_params(kp, Cin, Cout)

    d_ref, bp_ref = down_conv_reference(x, params)

    # f32 MXU-input path: tight tolerance.
    fwd32 = jax.jit(functools.partial(down_conv_forward, mm_dtype=jnp.float32))
    down, before_pool = jax.block_until_ready(fwd32(x, params))
    assert down.shape == (N, Cout, H // 2, W // 2)
    assert before_pool.shape == (N, Cin, H, W)
    assert jnp.allclose(down, d_ref, atol=5e-3, rtol=5e-3)
    assert jnp.allclose(before_pool, bp_ref, atol=5e-3, rtol=5e-3)

    # bf16 MXU-input path (v6e/v7x perf mode): separate, looser tolerance.
    fwd16 = jax.jit(functools.partial(down_conv_forward, mm_dtype=jnp.bfloat16))
    down16, bp16 = jax.block_until_ready(fwd16(x, params))
    assert jnp.allclose(down16, d_ref, atol=5e-2, rtol=5e-2)
    assert jnp.allclose(bp16, bp_ref, atol=5e-2, rtol=5e-2)

    print("KERNEL_OK")
</pallas_src>

<mosaic_0001>
module attributes {stable_mosaic.version = 11 : i64} {
  func.func @_bn_act_kernel(%arg0: i32, %arg1: memref<512x128xf32, #tpu.memory_space<vmem>>, %arg2: memref<1x128xf32, #tpu.memory_space<vmem>>, %arg3: memref<1x128xf32, #tpu.memory_space<vmem>>, %arg4: memref<512x128xf32, #tpu.memory_space<vmem>>) attributes {dimension_semantics = [#tpu.dimension_semantics<parallel>], iteration_bounds = array<i64: 1>, scalar_prefetch = 0 : i64, scratch_operands = 0 : i64, tpu.core_type = #tpu.core_type<tc>, window_params = [{transform_indices = @transform_0, window_bounds = array<i64: 512, 128>}, {pipeline_mode = #tpu.pipeline_mode<synchronous>, transform_indices = @transform_1, window_bounds = array<i64: 1, 128>}, {pipeline_mode = #tpu.pipeline_mode<synchronous>, transform_indices = @transform_2, window_bounds = array<i64: 1, 128>}, {transform_indices = @transform_3, window_bounds = array<i64: 512, 128>}]} {
    %c0 = arith.constant 0 : index
    %c0_0 = arith.constant 0 : index
    %0 = vector.load %arg1[%c0, %c0_0] : memref<512x128xf32, #tpu.memory_space<vmem>>, vector<512x128xf32>
    %c0_1 = arith.constant 0 : index
    %c0_2 = arith.constant 0 : index
    %1 = vector.load %arg2[%c0_1, %c0_2] : memref<1x128xf32, #tpu.memory_space<vmem>>, vector<1x128xf32>
    %2 = vector.broadcast %1 : vector<1x128xf32> to vector<512x128xf32>
    %3 = arith.mulf %0, %2 : vector<512x128xf32>
    %c0_3 = arith.constant 0 : index
    %c0_4 = arith.constant 0 : index
    %4 = vector.load %arg3[%c0_3, %c0_4] : memref<1x128xf32, #tpu.memory_space<vmem>>, vector<1x128xf32>
    %5 = vector.broadcast %4 : vector<1x128xf32> to vector<512x128xf32>
    %6 = arith.addf %3, %5 : vector<512x128xf32>
    %cst = arith.constant 0.000000e+00 : f32
    %7 = vector.broadcast %cst : f32 to vector<512x128xf32>
    %8 = arith.maximumf %6, %7 : vector<512x128xf32>
    %c0_5 = arith.constant 0 : index
    %c0_6 = arith.constant 0 : index
    %9 = vector.load %arg4[%c0_5, %c0_6] : memref<512x128xf32, #tpu.memory_space<vmem>>, vector<512x128xf32>
    tpu.vector_store %arg4[%c0_5, %c0_6], %8 {strides = array<i32>} : memref<512x128xf32, #tpu.memory_space<vmem>>, vector<512x128xf32>,
    return
  }
  func.func @transform_0(%arg0: i32) -> (i32, i32) {
    %c0_i32 = arith.constant 0 : i32
    %c0_i32_0 = arith.constant 0 : i32
    return %arg0, %c0_i32 : i32, i32
  }
  func.func @transform_1(%arg0: i32) -> (i32, i32) {
    %c0_i32 = arith.constant 0 : i32
    %c0_i32_0 = arith.constant 0 : i32
    %c0_i32_1 = arith.constant 0 : i32
    return %c0_i32, %c0_i32_0 : i32, i32
  }
  func.func @transform_2(%arg0: i32) -> (i32, i32) {
    %c0_i32 = arith.constant 0 : i32
    %c0_i32_0 = arith.constant 0 : i32
    %c0_i32_1 = arith.constant 0 : i32
    return %c0_i32, %c0_i32_0 : i32, i32
  }
  func.func @transform_3(%arg0: i32) -> (i32, i32) {
    %c0_i32 = arith.constant 0 : i32
    %c0_i32_0 = arith.constant 0 : i32
    return %arg0, %c0_i32 : i32, i32
  }
}

module attributes {stable_mosaic.version = 11 : i64} {
  func.func @_conv_stats_kernel(%arg0: i32, %arg1: memref<1x18x18x4xf32, #tpu.memory_space<vmem>>, %arg2: memref<9x4x128xf32, #tpu.memory_space<vmem>>, %arg3: memref<1x256x128xf32, #tpu.memory_space<vmem>>, %arg4: memref<1x128xf32, #tpu.memory_space<vmem>>, %arg5: memref<1x128xf32, #tpu.memory_space<vmem>>) attributes {dimension_semantics = [#tpu.dimension_semantics<arbitrary>], iteration_bounds = array<i64: 2>, scalar_prefetch = 0 : i64, scratch_operands = 0 : i64, tpu.core_type = #tpu.core_type<tc>, window_params = [{transform_indices = @transform_0, window_bounds = array<i64: 1, 18, 18, 4>}, {pipeline_mode = #tpu.pipeline_mode<synchronous>, transform_indices = @transform_1, window_bounds = array<i64: 9, 4, 128>}, {transform_indices = @transform_2, window_bounds = array<i64: 1, 256, 128>}, {pipeline_mode = #tpu.pipeline_mode<synchronous>, transform_indices = @transform_3, window_bounds = array<i64: 1, 128>}, {pipeline_mode = #tpu.pipeline_mode<synchronous>, transform_indices = @transform_4, window_bounds = array<i64: 1, 128>}]} {
    %c0_i32 = arith.constant 0 : i32
    %0 = arith.cmpi eq, %arg0, %c0_i32 : i32
    %1 = arith.extui %0 : i1 to i32
    %c0_i32_0 = arith.constant 0 : i32
    %2 = arith.cmpi ne, %1, %c0_i32_0 : i32
    scf.if %2 {
      %cst_45 = arith.constant 0.000000e+00 : f32
      %74 = vector.broadcast %cst_45 : f32 to vector<1x128xf32>
      %c0_46 = arith.constant 0 : index
      %c0_47 = arith.constant 0 : index
      %75 = vector.load %arg4[%c0_46, %c0_47] : memref<1x128xf32, #tpu.memory_space<vmem>>, vector<1x128xf32>
      tpu.vector_store %arg4[%c0_46, %c0_47], %74 {strides = array<i32>} : memref<1x128xf32, #tpu.memory_space<vmem>>, vector<1x128xf32>,
      %cst_48 = arith.constant 0.000000e+00 : f32
      %76 = vector.broadcast %cst_48 : f32 to vector<1x128xf32>
      %c0_49 = arith.constant 0 : index
      %c0_50 = arith.constant 0 : index
      %77 = vector.load %arg5[%c0_49, %c0_50] : memref<1x128xf32, #tpu.memory_space<vmem>>, vector<1x128xf32>
      tpu.vector_store %arg5[%c0_49, %c0_50], %76 {strides = array<i32>} : memref<1x128xf32, #tpu.memory_space<vmem>>, vector<1x128xf32>,
    } else {
    }
    %c0 = arith.constant 0 : index
    %c0_1 = arith.constant 0 : index
    %c0_2 = arith.constant 0 : index
    %c0_3 = arith.constant 0 : index
    %3 = vector.load %arg1[%c0, %c0_1, %c0_2, %c0_3] : memref<1x18x18x4xf32, #tpu.memory_space<vmem>>, vector<1x18x18x4xf32>
    %4 = vector.shape_cast %3 : vector<1x18x18x4xf32> to vector<18x18x4xf32>
    %cst = arith.constant 0.000000e+00 : f32
    %5 = vector.broadcast %cst : f32 to vector<256x128xf32>
    %6 = vector.extract_strided_slice %4 {offsets = [0, 0, 0], sizes = [16, 16, 4], strides = [1, 1, 1]} : vector<18x18x4xf32> to vector<16x16x4xf32>
    %7 = vector.shape_cast %6 : vector<16x16x4xf32> to vector<256x4xf32>
    %c0_4 = arith.constant 0 : index
    %c0_5 = arith.constant 0 : index
    %c0_6 = arith.constant 0 : index
    %8 = vector.load %arg2[%c0_4, %c0_5, %c0_6] : memref<9x4x128xf32, #tpu.memory_space<vmem>>, vector<1x4x128xf32>
    %9 = vector.shape_cast %8 : vector<1x4x128xf32> to vector<4x128xf32>
    %cst_7 = arith.constant dense<0.000000e+00> : vector<256x128xf32>
    %10 = tpu.matmul %7, %9, %cst_7 {dimension_numbers = #tpu.dot_dimension_numbers<[1], [0], [0], [1], [0, 0, 1, 1], [], []>} : vector<256x4xf32>, vector<4x128xf32>, vector<256x128xf32> -> vector<256x128xf32>
    %11 = arith.addf %5, %10 : vector<256x128xf32>
    %12 = vector.extract_strided_slice %4 {offsets = [0, 1, 0], sizes = [16, 16, 4], strides = [1, 1, 1]} : vector<18x18x4xf32> to vector<16x16x4xf32>
    %13 = vector.shape_cast %12 : vector<16x16x4xf32> to vector<256x4xf32>
    %c1 = arith.constant 1 : index
    %c0_8 = arith.constant 0 : index
    %c0_9 = arith.constant 0 : index
    %14 = vector.load %arg2[%c1, %c0_8, %c0_9] : memref<9x4x128xf32, #tpu.memory_space<vmem>>, vector<1x4x128xf32>
    %15 = vector.shape_cast %14 : vector<1x4x128xf32> to vector<4x128xf32>
    %cst_10 = arith.constant dense<0.000000e+00> : vector<256x128xf32>
    %16 = tpu.matmul %13, %15, %cst_10 {dimension_numbers = #tpu.dot_dimension_numbers<[1], [0], [0], [1], [0, 0, 1, 1], [], []>} : vector<256x4xf32>, vector<4x128xf32>, vector<256x128xf32> -> vector<256x128xf32>
    %17 = arith.addf %11, %16 : vector<256x128xf32>
    %18 = vector.extract_strided_slice %4 {offsets = [0, 2, 0], sizes = [16, 16, 4], strides = [1, 1, 1]} : vector<18x18x4xf32> to vector<16x16x4xf32>
    %19 = vector.shape_cast %18 : vector<16x16x4xf32> to vector<256x4xf32>
    %c2 = arith.constant 2 : index
    %c0_11 = arith.constant 0 : index
    %c0_12 = arith.constant 0 : index
    %20 = vector.load %arg2[%c2, %c0_11, %c0_12] : memref<9x4x128xf32, #tpu.memory_space<vmem>>, vector<1x4x128xf32>
    %21 = vector.shape_cast %20 : vector<1x4x128xf32> to vector<4x128xf32>
    %cst_13 = arith.constant dense<0.000000e+00> : vector<256x128xf32>
    %22 = tpu.matmul %19, %21, %cst_13 {dimension_numbers = #tpu.dot_dimension_numbers<[1], [0], [0], [1], [0, 0, 1, 1], [], []>} : vector<256x4xf32>, vector<4x128xf32>, vector<256x128xf32> -> vector<256x128xf32>
    %23 = arith.addf %17, %22 : vector<256x128xf32>
    %24 = vector.extract_strided_slice %4 {offsets = [1, 0, 0], sizes = [16, 16, 4], strides = [1, 1, 1]} : vector<18x18x4xf32> to vector<16x16x4xf32>
    %25 = vector.shape_cast %24 : vector<16x16x4xf32> to vector<256x4xf32>
    %c3 = arith.constant 3 : index
    %c0_14 = arith.constant 0 : index
    %c0_15 = arith.constant 0 : index
    %26 = vector.load %arg2[%c3, %c0_14, %c0_15] : memref<9x4x128xf32, #tpu.memory_space<vmem>>, vector<1x4x128xf32>
    %27 = vector.shape_cast %26 : vector<1x4x128xf32> to vector<4x128xf32>
    %cst_16 = arith.constant dense<0.000000e+00> : vector<256x128xf32>
    %28 = tpu.matmul %25, %27, %cst_16 {dimension_numbers = #tpu.dot_dimension_numbers<[1], [0], [0], [1], [0, 0, 1, 1], [], []>} : vector<256x4xf32>, vector<4x128xf32>, vector<256x128xf32> -> vector<256x128xf32>
    %29 = arith.addf %23, %28 : vector<256x128xf32>
    %30 = vector.extract_strided_slice %4 {offsets = [1, 1, 0], sizes = [16, 16, 4], strides = [1, 1, 1]} : vector<18x18x4xf32> to vector<16x16x4xf32>
    %31 = vector.shape_cast %30 : vector<16x16x4xf32> to vector<256x4xf32>
    %c4 = arith.constant 4 : index
    %c0_17 = arith.constant 0 : index
    %c0_18 = arith.constant 0 : index
    %32 = vector.load %arg2[%c4, %c0_17, %c0_18] : memref<9x4x128xf32, #tpu.memory_space<vmem>>, vector<1x4x128xf32>
    %33 = vector.shape_cast %32 : vector<1x4x128xf32> to vector<4x128xf32>
    %cst_19 = arith.constant dense<0.000000e+00> : vector<256x128xf32>
    %34 = tpu.matmul %31, %33, %cst_19 {dimension_numbers = #tpu.dot_dimension_numbers<[1], [0], [0], [1], [0, 0, 1, 1], [], []>} : vector<256x4xf32>, vector<4x128xf32>, vector<256x128xf32> -> vector<256x128xf32>
    %35 = arith.addf %29, %34 : vector<256x128xf32>
    %36 = vector.extract_strided_slice %4 {offsets = [1, 2, 0], sizes = [16, 16, 4], strides = [1, 1, 1]} : vector<18x18x4xf32> to vector<16x16x4xf32>
    %37 = vector.shape_cast %36 : vector<16x16x4xf32> to vector<256x4xf32>
    %c5 = arith.constant 5 : index
    %c0_20 = arith.constant 0 : index
    %c0_21 = arith.constant 0 : index
    %38 = vector.load %arg2[%c5, %c0_20, %c0_21] : memref<9x4x128xf32, #tpu.memory_space<vmem>>, vector<1x4x128xf32>
    %39 = vector.shape_cast %38 : vector<1x4x128xf32> to vector<4x128xf32>
    %cst_22 = arith.constant dense<0.000000e+00> : vector<256x128xf32>
    %40 = tpu.matmul %37, %39, %cst_22 {dimension_numbers = #tpu.dot_dimension_numbers<[1], [0], [0], [1], [0, 0, 1, 1], [], []>} : vector<256x4xf32>, vector<4x128xf32>, vector<256x128xf32> -> vector<256x128xf32>
    %41 = arith.addf %35, %40 : vector<256x128xf32>
    %42 = vector.extract_strided_slice %4 {offsets = [2, 0, 0], sizes = [16, 16, 4], strides = [1, 1, 1]} : vector<18x18x4xf32> to vector<16x16x4xf32>
    %43 = vector.shape_cast %42 : vector<16x16x4xf32> to vector<256x4xf32>
    %c6 = arith.constant 6 : index
    %c0_23 = arith.constant 0 : index
    %c0_24 = arith.constant 0 : index
    %44 = vector.load %arg2[%c6, %c0_23, %c0_24] : memref<9x4x128xf32, #tpu.memory_space<vmem>>, vector<1x4x128xf32>
    %45 = vector.shape_cast %44 : vector<1x4x128xf32> to vector<4x128xf32>
    %cst_25 = arith.constant dense<0.000000e+00> : vector<256x128xf32>
    %46 = tpu.matmul %43, %45, %cst_25 {dimension_numbers = #tpu.dot_dimension_numbers<[1], [0], [0], [1], [0, 0, 1, 1], [], []>} : vector<256x4xf32>, vector<4x128xf32>, vector<256x128xf32> -> vector<256x128xf32>
    %47 = arith.addf %41, %46 : vector<256x128xf32>
    %48 = vector.extract_strided_slice %4 {offsets = [2, 1, 0], sizes = [16, 16, 4], strides = [1, 1, 1]} : vector<18x18x4xf32> to vector<16x16x4xf32>
    %49 = vector.shape_cast %48 : vector<16x16x4xf32> to vector<256x4xf32>
    %c7 = arith.constant 7 : index
    %c0_26 = arith.constant 0 : index
    %c0_27 = arith.constant 0 : index
    %50 = vector.load %arg2[%c7, %c0_26, %c0_27] : memref<9x4x128xf32, #tpu.memory_space<vmem>>, vector<1x4x128xf32>
    %51 = vector.shape_cast %50 : vector<1x4x128xf32> to vector<4x128xf32>
    %cst_28 = arith.constant dense<0.000000e+00> : vector<256x128xf32>
    %52 = tpu.matmul %49, %51, %cst_28 {dimension_numbers = #tpu.dot_dimension_numbers<[1], [0], [0], [1], [0, 0, 1, 1], [], []>} : vector<256x4xf32>, vector<4x128xf32>, vector<256x128xf32> -> vector<256x128xf32>
    %53 = arith.addf %47, %52 : vector<256x128xf32>
    %54 = vector.extract_strided_slice %4 {offsets = [2, 2, 0], sizes = [16, 16, 4], strides = [1, 1, 1]} : vector<18x18x4xf32> to vector<16x16x4xf32>
    %55 = vector.shape_cast %54 : vector<16x16x4xf32> to vector<256x4xf32>
    %c8 = arith.constant 8 : index
    %c0_29 = arith.constant 0 : index
    %c0_30 = arith.constant 0 : index
    %56 = vector.load %arg2[%c8, %c0_29, %c0_30] : memref<9x4x128xf32, #tpu.memory_space<vmem>>, vector<1x4x128xf32>
    %57 = vector.shape_cast %56 : vector<1x4x128xf32> to vector<4x128xf32>
    %cst_31 = arith.constant dense<0.000000e+00> : vector<256x128xf32>
    %58 = tpu.matmul %55, %57, %cst_31 {dimension_numbers = #tpu.dot_dimension_numbers<[1], [0], [0], [1], [0, 0, 1, 1], [], []>} : vector<256x4xf32>, vector<4x128xf32>, vector<256x128xf32> -> vector<256x128xf32>
    %59 = arith.addf %53, %58 : vector<256x128xf32>
    %c0_32 = arith.constant 0 : index
    %c0_33 = arith.constant 0 : index
    %c0_34 = arith.constant 0 : index
    %60 = vector.load %arg3[%c0_32, %c0_33, %c0_34] : memref<1x256x128xf32, #tpu.memory_space<vmem>>, vector<1x256x128xf32>
    %61 = vector.shape_cast %60 : vector<1x256x128xf32> to vector<256x128xf32>
    %62 = vector.shape_cast %59 : vector<256x128xf32> to vector<1x256x128xf32>
    tpu.vector_store %arg3[%c0_32, %c0_33, %c0_34], %62 {strides = array<i32>} : memref<1x256x128xf32, #tpu.memory_space<vmem>>, vector<1x256x128xf32>,
    %c0_35 = arith.constant 0 : index
    %c0_36 = arith.constant 0 : index
    %63 = vector.load %arg4[%c0_35, %c0_36] : memref<1x128xf32, #tpu.memory_space<vmem>>, vector<1x128xf32>
    %cst_37 = arith.constant dense<0.000000e+00> : vector<128xf32>
    %64 = vector.multi_reduction <add>, %59, %cst_37 [0] : vector<256x128xf32> to vector<128xf32>
    %65 = vector.shape_cast %64 : vector<128xf32> to vector<1x128xf32>
    %66 = arith.addf %63, %65 : vector<1x128xf32>
    %c0_38 = arith.constant 0 : index
    %c0_39 = arith.constant 0 : index
    %67 = vector.load %arg4[%c0_38, %c0_39] : memref<1x128xf32, #tpu.memory_space<vmem>>, vector<1x128xf32>
    tpu.vector_store %arg4[%c0_38, %c0_39], %66 {strides = array<i32>} : memref<1x128xf32, #tpu.memory_space<vmem>>, vector<1x128xf32>,
    %c0_40 = arith.constant 0 : index
    %c0_41 = arith.constant 0 : index
    %68 = vector.load %arg5[%c0_40, %c0_41] : memref<1x128xf32, #tpu.memory_space<vmem>>, vector<1x128xf32>
    %69 = arith.mulf %59, %59 : vector<256x128xf32>
    %cst_42 = arith.constant dense<0.000000e+00> : vector<128xf32>
    %70 = vector.multi_reduction <add>, %69, %cst_42 [0] : vector<256x128xf32> to vector<128xf32>
    %71 = vector.shape_cast %70 : vector<128xf32> to vector<1x128xf32>
    %72 = arith.addf %68, %71 : vector<1x128xf32>
    %c0_43 = arith.constant 0 : index
    %c0_44 = arith.constant 0 : index
    %73 = vector.load %arg5[%c0_43, %c0_44] : memref<1x128xf32, #tpu.memory_space<vmem>>, vector<1x128xf32>
    tpu.vector_store %arg5[%c0_43, %c0_44], %72 {strides = array<i32>} : memref<1x128xf32, #tpu.memory_space<vmem>>, vector<1x128xf32>,
    return
  }
  func.func @transform_0(%arg0: i32) -> (i32, i32, i32, i32) {
    %c0_i32 = arith.constant 0 : i32
    %c0_i32_0 = arith.constant 0 : i32
    %c0_i32_1 = arith.constant 0 : i32
    %c0_i32_2 = arith.constant 0 : i32
    return %arg0, %c0_i32, %c0_i32_0, %c0_i32_1 : i32, i32, i32, i32
  }
  func.func @transform_1(%arg0: i32) -> (i32, i32, i32) {
    %c0_i32 = arith.constant 0 : i32
    %c0_i32_0 = arith.constant 0 : i32
    %c0_i32_1 = arith.constant 0 : i32
    %c0_i32_2 = arith.constant 0 : i32
    return %c0_i32, %c0_i32_0, %c0_i32_1 : i32, i32, i32
  }
  func.func @transform_2(%arg0: i32) -> (i32, i32, i32) {
    %c0_i32 = arith.constant 0 : i32
    %c0_i32_0 = arith.constant 0 : i32
    %c0_i32_1 = arith.constant 0 : i32
    return %arg0, %c0_i32, %c0_i32_0 : i32, i32, i32
  }
  func.func @transform_3(%arg0: i32) -> (i32, i32) {
    %c0_i32 = arith.constant 0 : i32
    %c0_i32_0 = arith.constant 0 : i32
    %c0_i32_1 = arith.constant 0 : i32
    return %c0_i32, %c0_i32_0 : i32, i32
  }
  func.func @transform_4(%arg0: i32) -> (i32, i32) {
    %c0_i32 = arith.constant 0 : i32
    %c0_i32_0 = arith.constant 0 : i32
    %c0_i32_1 = arith.constant 0 : i32
    return %c0_i32, %c0_i32_0 : i32, i32
  }
}

module attributes {stable_mosaic.version = 11 : i64} {
  func.func @_bn_res_relu_kernel(%arg0: i32, %arg1: memref<512x128xf32, #tpu.memory_space<vmem>>, %arg2: memref<1x128xf32, #tpu.memory_space<vmem>>, %arg3: memref<1x128xf32, #tpu.memory_space<vmem>>, %arg4: memref<512x128xf32, #tpu.memory_space<vmem>>, %arg5: memref<512x128xf32, #tpu.memory_space<vmem>>) attributes {dimension_semantics = [#tpu.dimension_semantics<parallel>], iteration_bounds = array<i64: 1>, scalar_prefetch = 0 : i64, scratch_operands = 0 : i64, tpu.core_type = #tpu.core_type<tc>, window_params = [{transform_indices = @transform_0, window_bounds = array<i64: 512, 128>}, {pipeline_mode = #tpu.pipeline_mode<synchronous>, transform_indices = @transform_1, window_bounds = array<i64: 1, 128>}, {pipeline_mode = #tpu.pipeline_mode<synchronous>, transform_indices = @transform_2, window_bounds = array<i64: 1, 128>}, {transform_indices = @transform_3, window_bounds = array<i64: 512, 128>}, {transform_indices = @transform_4, window_bounds = array<i64: 512, 128>}]} {
    %c0 = arith.constant 0 : index
    %c0_0 = arith.constant 0 : index
    %0 = vector.load %arg1[%c0, %c0_0] : memref<512x128xf32, #tpu.memory_space<vmem>>, vector<512x128xf32>
    %c0_1 = arith.constant 0 : index
    %c0_2 = arith.constant 0 : index
    %1 = vector.load %arg2[%c0_1, %c0_2] : memref<1x128xf32, #tpu.memory_space<vmem>>, vector<1x128xf32>
    %2 = vector.broadcast %1 : vector<1x128xf32> to vector<512x128xf32>
    %3 = arith.mulf %0, %2 : vector<512x128xf32>
    %c0_3 = arith.constant 0 : index
    %c0_4 = arith.constant 0 : index
    %4 = vector.load %arg3[%c0_3, %c0_4] : memref<1x128xf32, #tpu.memory_space<vmem>>, vector<1x128xf32>
    %5 = vector.broadcast %4 : vector<1x128xf32> to vector<512x128xf32>
    %6 = arith.addf %3, %5 : vector<512x128xf32>
    %c0_5 = arith.constant 0 : index
    %c0_6 = arith.constant 0 : index
    %7 = vector.load %arg4[%c0_5, %c0_6] : memref<512x128xf32, #tpu.memory_space<vmem>>, vector<512x128xf32>
    %8 = arith.addf %6, %7 : vector<512x128xf32>
    %cst = arith.constant 0.000000e+00 : f32
    %9 = vector.broadcast %cst : f32 to vector<512x128xf32>
    %10 = arith.maximumf %8, %9 : vector<512x128xf32>
    %c0_7 = arith.constant 0 : index
    %c0_8 = arith.constant 0 : index
    %11 = vector.load %arg5[%c0_7, %c0_8] : memref<512x128xf32, #tpu.memory_space<vmem>>, vector<512x128xf32>
    tpu.vector_store %arg5[%c0_7, %c0_8], %10 {strides = array<i32>} : memref<512x128xf32, #tpu.memory_space<vmem>>, vector<512x128xf32>,
    return
  }
  func.func @transform_0(%arg0: i32) -> (i32, i32) {
    %c0_i32 = arith.constant 0 : i32
    %c0_i32_0 = arith.constant 0 : i32
    return %arg0, %c0_i32 : i32, i32
  }
  func.func @transform_1(%arg0: i32) -> (i32, i32) {
    %c0_i32 = arith.constant 0 : i32
    %c0_i32_0 = arith.constant 0 : i32
    %c0_i32_1 = arith.constant 0 : i32
    return %c0_i32, %c0_i32_0 : i32, i32
  }
  func.func @transform_2(%arg0: i32) -> (i32, i32) {
    %c0_i32 = arith.constant 0 : i32
    %c0_i32_0 = arith.constant 0 : i32
    %c0_i32_1 = arith.constant 0 : i32
    return %c0_i32, %c0_i32_0 : i32, i32
  }
  func.func @transform_3(%arg0: i32) -> (i32, i32) {
    %c0_i32 = arith.constant 0 : i32
    %c0_i32_0 = arith.constant 0 : i32
    return %arg0, %c0_i32 : i32, i32
  }
  func.func @transform_4(%arg0: i32) -> (i32, i32) {
    %c0_i32 = arith.constant 0 : i32
    %c0_i32_0 = arith.constant 0 : i32
    return %arg0, %c0_i32 : i32, i32
  }
}

module attributes {stable_mosaic.version = 11 : i64} {
  func.func @_conv_stats_kernel(%arg0: i32, %arg1: memref<1x9x9x16xf32, #tpu.memory_space<vmem>>, %arg2: memref<4x16x128xf32, #tpu.memory_space<vmem>>, %arg3: memref<1x64x128xf32, #tpu.memory_space<vmem>>, %arg4: memref<1x128xf32, #tpu.memory_space<vmem>>, %arg5: memref<1x128xf32, #tpu.memory_space<vmem>>) attributes {dimension_semantics = [#tpu.dimension_semantics<arbitrary>], iteration_bounds = array<i64: 2>, scalar_prefetch = 0 : i64, scratch_operands = 0 : i64, tpu.core_type = #tpu.core_type<tc>, window_params = [{transform_indices = @transform_0, window_bounds = array<i64: 1, 9, 9, 16>}, {pipeline_mode = #tpu.pipeline_mode<synchronous>, transform_indices = @transform_1, window_bounds = array<i64: 4, 16, 128>}, {transform_indices = @transform_2, window_bounds = array<i64: 1, 64, 128>}, {pipeline_mode = #tpu.pipeline_mode<synchronous>, transform_indices = @transform_3, window_bounds = array<i64: 1, 128>}, {pipeline_mode = #tpu.pipeline_mode<synchronous>, transform_indices = @transform_4, window_bounds = array<i64: 1, 128>}]} {
    %c0_i32 = arith.constant 0 : i32
    %0 = arith.cmpi eq, %arg0, %c0_i32 : i32
    %1 = arith.extui %0 : i1 to i32
    %c0_i32_0 = arith.constant 0 : i32
    %2 = arith.cmpi ne, %1, %c0_i32_0 : i32
    scf.if %2 {
      %cst_30 = arith.constant 0.000000e+00 : f32
      %44 = vector.broadcast %cst_30 : f32 to vector<1x128xf32>
      %c0_31 = arith.constant 0 : index
      %c0_32 = arith.constant 0 : index
      %45 = vector.load %arg4[%c0_31, %c0_32] : memref<1x128xf32, #tpu.memory_space<vmem>>, vector<1x128xf32>
      tpu.vector_store %arg4[%c0_31, %c0_32], %44 {strides = array<i32>} : memref<1x128xf32, #tpu.memory_space<vmem>>, vector<1x128xf32>,
      %cst_33 = arith.constant 0.000000e+00 : f32
      %46 = vector.broadcast %cst_33 : f32 to vector<1x128xf32>
      %c0_34 = arith.constant 0 : index
      %c0_35 = arith.constant 0 : index
      %47 = vector.load %arg5[%c0_34, %c0_35] : memref<1x128xf32, #tpu.memory_space<vmem>>, vector<1x128xf32>
      tpu.vector_store %arg5[%c0_34, %c0_35], %46 {strides = array<i32>} : memref<1x128xf32, #tpu.memory_space<vmem>>, vector<1x128xf32>,
    } else {
    }
    %c0 = arith.constant 0 : index
    %c0_1 = arith.constant 0 : index
    %c0_2 = arith.constant 0 : index
    %c0_3 = arith.constant 0 : index
    %3 = vector.load %arg1[%c0, %c0_1, %c0_2, %c0_3] : memref<1x9x9x16xf32, #tpu.memory_space<vmem>>, vector<1x9x9x16xf32>
    %4 = vector.shape_cast %3 : vector<1x9x9x16xf32> to vector<9x9x16xf32>
    %cst = arith.constant 0.000000e+00 : f32
    %5 = vector.broadcast %cst : f32 to vector<64x128xf32>
    %6 = vector.extract_strided_slice %4 {offsets = [0, 0, 0], sizes = [8, 8, 16], strides = [1, 1, 1]} : vector<9x9x16xf32> to vector<8x8x16xf32>
    %7 = vector.shape_cast %6 : vector<8x8x16xf32> to vector<64x16xf32>
    %c0_4 = arith.constant 0 : index
    %c0_5 = arith.constant 0 : index
    %c0_6 = arith.constant 0 : index
    %8 = vector.load %arg2[%c0_4, %c0_5, %c0_6] : memref<4x16x128xf32, #tpu.memory_space<vmem>>, vector<1x16x128xf32>
    %9 = vector.shape_cast %8 : vector<1x16x128xf32> to vector<16x128xf32>
    %cst_7 = arith.constant dense<0.000000e+00> : vector<64x128xf32>
    %10 = tpu.matmul %7, %9, %cst_7 {dimension_numbers = #tpu.dot_dimension_numbers<[1], [0], [0], [1], [0, 0, 1, 1], [], []>} : vector<64x16xf32>, vector<16x128xf32>, vector<64x128xf32> -> vector<64x128xf32>
    %11 = arith.addf %5, %10 : vector<64x128xf32>
    %12 = vector.extract_strided_slice %4 {offsets = [0, 1, 0], sizes = [8, 8, 16], strides = [1, 1, 1]} : vector<9x9x16xf32> to vector<8x8x16xf32>
    %13 = vector.shape_cast %12 : vector<8x8x16xf32> to vector<64x16xf32>
    %c1 = arith.constant 1 : index
    %c0_8 = arith.constant 0 : index
    %c0_9 = arith.constant 0 : index
    %14 = vector.load %arg2[%c1, %c0_8, %c0_9] : memref<4x16x128xf32, #tpu.memory_space<vmem>>, vector<1x16x128xf32>
    %15 = vector.shape_cast %14 : vector<1x16x128xf32> to vector<16x128xf32>
    %cst_10 = arith.constant dense<0.000000e+00> : vector<64x128xf32>
    %16 = tpu.matmul %13, %15, %cst_10 {dimension_numbers = #tpu.dot_dimension_numbers<[1], [0], [0], [1], [0, 0, 1, 1], [], []>} : vector<64x16xf32>, vector<16x128xf32>, vector<64x128xf32> -> vector<64x128xf32>
    %17 = arith.addf %11, %16 : vector<64x128xf32>
    %18 = vector.extract_strided_slice %4 {offsets = [1, 0, 0], sizes = [8, 8, 16], strides = [1, 1, 1]} : vector<9x9x16xf32> to vector<8x8x16xf32>
    %19 = vector.shape_cast %18 : vector<8x8x16xf32> to vector<64x16xf32>
    %c2 = arith.constant 2 : index
    %c0_11 = arith.constant 0 : index
    %c0_12 = arith.constant 0 : index
    %20 = vector.load %arg2[%c2, %c0_11, %c0_12] : memref<4x16x128xf32, #tpu.memory_space<vmem>>, vector<1x16x128xf32>
    %21 = vector.shape_cast %20 : vector<1x16x128xf32> to vector<16x128xf32>
    %cst_13 = arith.constant dense<0.000000e+00> : vector<64x128xf32>
    %22 = tpu.matmul %19, %21, %cst_13 {dimension_numbers = #tpu.dot_dimension_numbers<[1], [0], [0], [1], [0, 0, 1, 1], [], []>} : vector<64x16xf32>, vector<16x128xf32>, vector<64x128xf32> -> vector<64x128xf32>
    %23 = arith.addf %17, %22 : vector<64x128xf32>
    %24 = vector.extract_strided_slice %4 {offsets = [1, 1, 0], sizes = [8, 8, 16], strides = [1, 1, 1]} : vector<9x9x16xf32> to vector<8x8x16xf32>
    %25 = vector.shape_cast %24 : vector<8x8x16xf32> to vector<64x16xf32>
    %c3 = arith.constant 3 : index
    %c0_14 = arith.constant 0 : index
    %c0_15 = arith.constant 0 : index
    %26 = vector.load %arg2[%c3, %c0_14, %c0_15] : memref<4x16x128xf32, #tpu.memory_space<vmem>>, vector<1x16x128xf32>
    %27 = vector.shape_cast %26 : vector<1x16x128xf32> to vector<16x128xf32>
    %cst_16 = arith.constant dense<0.000000e+00> : vector<64x128xf32>
    %28 = tpu.matmul %25, %27, %cst_16 {dimension_numbers = #tpu.dot_dimension_numbers<[1], [0], [0], [1], [0, 0, 1, 1], [], []>} : vector<64x16xf32>, vector<16x128xf32>, vector<64x128xf32> -> vector<64x128xf32>
    %29 = arith.addf %23, %28 : vector<64x128xf32>
    %c0_17 = arith.constant 0 : index
    %c0_18 = arith.constant 0 : index
    %c0_19 = arith.constant 0 : index
    %30 = vector.load %arg3[%c0_17, %c0_18, %c0_19] : memref<1x64x128xf32, #tpu.memory_space<vmem>>, vector<1x64x128xf32>
    %31 = vector.shape_cast %30 : vector<1x64x128xf32> to vector<64x128xf32>
    %32 = vector.shape_cast %29 : vector<64x128xf32> to vector<1x64x128xf32>
    tpu.vector_store %arg3[%c0_17, %c0_18, %c0_19], %32 {strides = array<i32>} : memref<1x64x128xf32, #tpu.memory_space<vmem>>, vector<1x64x128xf32>,
    %c0_20 = arith.constant 0 : index
    %c0_21 = arith.constant 0 : index
    %33 = vector.load %arg4[%c0_20, %c0_21] : memref<1x128xf32, #tpu.memory_space<vmem>>, vector<1x128xf32>
    %cst_22 = arith.constant dense<0.000000e+00> : vector<128xf32>
    %34 = vector.multi_reduction <add>, %29, %cst_22 [0] : vector<64x128xf32> to vector<128xf32>
    %35 = vector.shape_cast %34 : vector<128xf32> to vector<1x128xf32>
    %36 = arith.addf %33, %35 : vector<1x128xf32>
    %c0_23 = arith.constant 0 : index
    %c0_24 = arith.constant 0 : index
    %37 = vector.load %arg4[%c0_23, %c0_24] : memref<1x128xf32, #tpu.memory_space<vmem>>, vector<1x128xf32>
    tpu.vector_store %arg4[%c0_23, %c0_24], %36 {strides = array<i32>} : memref<1x128xf32, #tpu.memory_space<vmem>>, vector<1x128xf32>,
    %c0_25 = arith.constant 0 : index
    %c0_26 = arith.constant 0 : index
    %38 = vector.load %arg5[%c0_25, %c0_26] : memref<1x128xf32, #tpu.memory_space<vmem>>, vector<1x128xf32>
    %39 = arith.mulf %29, %29 : vector<64x128xf32>
    %cst_27 = arith.constant dense<0.000000e+00> : vector<128xf32>
    %40 = vector.multi_reduction <add>, %39, %cst_27 [0] : vector<64x128xf32> to vector<128xf32>
    %41 = vector.shape_cast %40 : vector<128xf32> to vector<1x128xf32>
    %42 = arith.addf %38, %41 : vector<1x128xf32>
    %c0_28 = arith.constant 0 : index
    %c0_29 = arith.constant 0 : index
    %43 = vector.load %arg5[%c0_28, %c0_29] : memref<1x128xf32, #tpu.memory_space<vmem>>, vector<1x128xf32>
    tpu.vector_store %arg5[%c0_28, %c0_29], %42 {strides = array<i32>} : memref<1x128xf32, #tpu.memory_space<vmem>>, vector<1x128xf32>,
    return
  }
  func.func @transform_0(%arg0: i32) -> (i32, i32, i32, i32) {
    %c0_i32 = arith.constant 0 : i32
    %c0_i32_0 = arith.constant 0 : i32
    %c0_i32_1 = arith.constant 0 : i32
    %c0_i32_2 = arith.constant 0 : i32
    return %arg0, %c0_i32, %c0_i32_0, %c0_i32_1 : i32, i32, i32, i32
  }
  func.func @transform_1(%arg0: i32) -> (i32, i32, i32) {
    %c0_i32 = arith.constant 0 : i32
    %c0_i32_0 = arith.constant 0 : i32
    %c0_i32_1 = arith.constant 0 : i32
    %c0_i32_2 = arith.constant 0 : i32
    return %c0_i32, %c0_i32_0, %c0_i32_1 : i32, i32, i32
  }
  func.func @transform_2(%arg0: i32) -> (i32, i32, i32) {
    %c0_i32 = arith.constant 0 : i32
    %c0_i32_0 = arith.constant 0 : i32
    %c0_i32_1 = arith.constant 0 : i32
    return %arg0, %c0_i32, %c0_i32_0 : i32, i32, i32
  }
  func.func @transform_3(%arg0: i32) -> (i32, i32) {
    %c0_i32 = arith.constant 0 : i32
    %c0_i32_0 = arith.constant 0 : i32
    %c0_i32_1 = arith.constant 0 : i32
    return %c0_i32, %c0_i32_0 : i32, i32
  }
  func.func @transform_4(%arg0: i32) -> (i32, i32) {
    %c0_i32 = arith.constant 0 : i32
    %c0_i32_0 = arith.constant 0 : i32
    %c0_i32_1 = arith.constant 0 : i32
    return %c0_i32, %c0_i32_0 : i32, i32
  }
}

module attributes {stable_mosaic.version = 11 : i64} {
  func.func @_bn_act_kernel(%arg0: i32, %arg1: memref<128x128xf32, #tpu.memory_space<vmem>>, %arg2: memref<1x128xf32, #tpu.memory_space<vmem>>, %arg3: memref<1x128xf32, #tpu.memory_space<vmem>>, %arg4: memref<128x128xf32, #tpu.memory_space<vmem>>) attributes {dimension_semantics = [#tpu.dimension_semantics<parallel>], iteration_bounds = array<i64: 1>, scalar_prefetch = 0 : i64, scratch_operands = 0 : i64, tpu.core_type = #tpu.core_type<tc>, window_params = [{transform_indices = @transform_0, window_bounds = array<i64: 128, 128>}, {pipeline_mode = #tpu.pipeline_mode<synchronous>, transform_indices = @transform_1, window_bounds = array<i64: 1, 128>}, {pipeline_mode = #tpu.pipeline_mode<synchronous>, transform_indices = @transform_2, window_bounds = array<i64: 1, 128>}, {transform_indices = @transform_3, window_bounds = array<i64: 128, 128>}]} {
    %c0 = arith.constant 0 : index
    %c0_0 = arith.constant 0 : index
    %0 = vector.load %arg1[%c0, %c0_0] : memref<128x128xf32, #tpu.memory_space<vmem>>, vector<128x128xf32>
    %c0_1 = arith.constant 0 : index
    %c0_2 = arith.constant 0 : index
    %1 = vector.load %arg2[%c0_1, %c0_2] : memref<1x128xf32, #tpu.memory_space<vmem>>, vector<1x128xf32>
    %2 = vector.broadcast %1 : vector<1x128xf32> to vector<128x128xf32>
    %3 = arith.mulf %0, %2 : vector<128x128xf32>
    %c0_3 = arith.constant 0 : index
    %c0_4 = arith.constant 0 : index
    %4 = vector.load %arg3[%c0_3, %c0_4] : memref<1x128xf32, #tpu.memory_space<vmem>>, vector<1x128xf32>
    %5 = vector.broadcast %4 : vector<1x128xf32> to vector<128x128xf32>
    %6 = arith.addf %3, %5 : vector<128x128xf32>
    %cst = arith.constant 0.000000e+00 : f32
    %7 = vector.broadcast %cst : f32 to vector<128x128xf32>
    %8 = arith.maximumf %6, %7 : vector<128x128xf32>
    %c0_5 = arith.constant 0 : index
    %c0_6 = arith.constant 0 : index
    %9 = vector.load %arg4[%c0_5, %c0_6] : memref<128x128xf32, #tpu.memory_space<vmem>>, vector<128x128xf32>
    tpu.vector_store %arg4[%c0_5, %c0_6], %8 {strides = array<i32>} : memref<128x128xf32, #tpu.memory_space<vmem>>, vector<128x128xf32>,
    return
  }
  func.func @transform_0(%arg0: i32) -> (i32, i32) {
    %c0_i32 = arith.constant 0 : i32
    %c0_i32_0 = arith.constant 0 : i32
    return %arg0, %c0_i32 : i32, i32
  }
  func.func @transform_1(%arg0: i32) -> (i32, i32) {
    %c0_i32 = arith.constant 0 : i32
    %c0_i32_0 = arith.constant 0 : i32
    %c0_i32_1 = arith.constant 0 : i32
    return %c0_i32, %c0_i32_0 : i32, i32
  }
  func.func @transform_2(%arg0: i32) -> (i32, i32) {
    %c0_i32 = arith.constant 0 : i32
    %c0_i32_0 = arith.constant 0 : i32
    %c0_i32_1 = arith.constant 0 : i32
    return %c0_i32, %c0_i32_0 : i32, i32
  }
  func.func @transform_3(%arg0: i32) -> (i32, i32) {
    %c0_i32 = arith.constant 0 : i32
    %c0_i32_0 = arith.constant 0 : i32
    return %arg0, %c0_i32 : i32, i32
  }
}

</mosaic_0001>

<llo_original>
// kernel: down_conv_forward.7
$region0: #{down_conv_forward.7}
  #allocation0 [shape = 'u32[]', space=smem, size = 0x4, offset = 0x4, fixed_abs, tag = 'smem constant byte address 0x4 - core index']
  #allocation1 [shape = 'u32[144,128]{1,0:T(1,128)}', space=vmem, size = 0x12000, scoped, tag = 'internal scratch']
  %s0 = inlined_call_operand.vmem [shape: f32[512,128], index: 0, kind: input, shape index: {}]
  %s1 = inlined_call_operand.vmem [shape: f32[1,128], index: 1, kind: input, shape index: {}]
  %s2 = inlined_call_operand.vmem [shape: f32[1,128], index: 2, kind: input, shape index: {}]
  %s3 = inlined_call_operand.vmem [shape: f32[512,128], index: 3, kind: output, shape index: {}]
  %s4 = sld [smem:[#allocation0]]
  $region22: #{down_conv_forward.7} parent=0
    _
  %s6 = ssub.s32 1, %s4
  %s7 = scalar_select 0, %s6, %s4
  // Predicated region
  $region2: #{down_conv_forward.7} parent=0 // pred_check
    _
  $region3: #{down_conv_forward.7} parent=0 // pred_check_branch
    %9 = sbr.rel (0) target = $region5
  $region4: #{down_conv_forward.7} parent=0 // pred_region
    _
  $region5: #{down_conv_forward.7} parent=0 // pred_fallthru
    _
  // Predicated region
  $region6: #{down_conv_forward.7} parent=0 // pred_check
    _
  $region7: #{down_conv_forward.7} parent=0 // pred_check_branch
    %11 = sbr.rel (0) target = $region9
  $region8: #{down_conv_forward.7} parent=0 // pred_region
    _
  $region9: #{down_conv_forward.7} parent=0 // pred_fallthru
    _
  // Predicated region
  $region10: #{down_conv_forward.7} parent=0 // pred_check
    _
  $region11: #{down_conv_forward.7} parent=0 // pred_check_branch
    %13 = sbr.rel (0) target = $region13
  $region12: #{down_conv_forward.7} parent=0 // pred_region
    _
  $region13: #{down_conv_forward.7} parent=0 // pred_fallthru
    _
  %v14 = vld [vmem:[%s0] sm:$0xff]
  %v15 = vld [vmem:[%s0 + $0x8] sm:$0xff]
  %v16 = vld [vmem:[%s0 + $0x10] sm:$0xff]
  %v17 = vld [vmem:[%s0 + $0x18] sm:$0xff]
  %v18 = vld [vmem:[%s0 + $0x20] sm:$0xff]
  %v19 = vld [vmem:[%s0 + $0x28] sm:$0xff]
  %v20 = vld [vmem:[%s0 + $0x30] sm:$0xff]
  %v21 = vld [vmem:[%s0 + $0x38] sm:$0xff]
  %v22 = vld [vmem:[%s0 + $0x40] sm:$0xff]
  %v23 = vld [vmem:[%s0 + $0x48] sm:$0xff]
  %v24 = vld [vmem:[%s0 + $0x50] sm:$0xff]
  %v25 = vld [vmem:[%s0 + $0x58] sm:$0xff]
  %v26 = vld [vmem:[%s0 + $0x60] sm:$0xff]
  %v27 = vld [vmem:[%s0 + $0x68] sm:$0xff]
  %v28 = vld [vmem:[%s0 + $0x70] sm:$0xff]
  %v29 = vld [vmem:[%s0 + $0x78] sm:$0xff]
  %v30 = vld [vmem:[%s0 + $0x80] sm:$0xff]
  %v31 = vld [vmem:[%s0 + $0x88] sm:$0xff]
  %v32 = vld [vmem:[%s0 + $0x90] sm:$0xff]
  %v33 = vld [vmem:[%s0 + $0x98] sm:$0xff]
  %v34 = vld [vmem:[%s0 + $0xa0] sm:$0xff]
  %v35 = vld [vmem:[%s0 + $0xa8] sm:$0xff]
  %v36 = vld [vmem:[%s0 + $0xb0] sm:$0xff]
  %v37 = vld [vmem:[%s0 + $0xb8] sm:$0xff]
  %v38 = vld [vmem:[%s0 + $0xc0] sm:$0xff]
  %v39 = vld [vmem:[%s0 + $0xc8] sm:$0xff]
  %v40 = vld [vmem:[%s0 + $0xd0] sm:$0xff]
  %v41 = vld [vmem:[%s0 + $0xd8] sm:$0xff]
  %v42 = vld [vmem:[%s0 + $0xe0] sm:$0xff]
  %v43 = vld [vmem:[%s0 + $0xe8] sm:$0xff]
  %v44 = vld [vmem:[%s0 + $0xf0] sm:$0xff]
  %v45 = vld [vmem:[%s0 + $0xf8] sm:$0xff]
  %v46 = vld [vmem:[%s0 + $0x100] sm:$0xff]
  %v47 = vld [vmem:[%s0 + $0x108] sm:$0xff]
  %v48 = vld [vmem:[%s0 + $0x110] sm:$0xff]
  %v49 = vld [vmem:[%s0 + $0x118] sm:$0xff]
  %v50 = vld [vmem:[%s0 + $0x120] sm:$0xff]
  %v51 = vld [vmem:[%s0 + $0x128] sm:$0xff]
  %v52 = vld [vmem:[%s0 + $0x130] sm:$0xff]
  %v53 = vld [vmem:[%s0 + $0x138] sm:$0xff]
  %v54 = vld [vmem:[%s0 + $0x140] sm:$0xff]
  %v55 = vld [vmem:[%s0 + $0x148] sm:$0xff]
  %v56 = vld [vmem:[%s0 + $0x150] sm:$0xff]
  %v57 = vld [vmem:[%s0 + $0x158] sm:$0xff]
  %v58 = vld [vmem:[%s0 + $0x160] sm:$0xff]
  %v59 = vld [vmem:[%s0 + $0x168] sm:$0xff]
  %v60 = vld [vmem:[%s0 + $0x170] sm:$0xff]
  %v61 = vld [vmem:[%s0 + $0x178] sm:$0xff]
  %v62 = vld [vmem:[%s0 + $0x180] sm:$0xff]
  %v63 = vld [vmem:[%s0 + $0x188] sm:$0xff]
  %v64 = vld [vmem:[%s0 + $0x190] sm:$0xff]
  %v65 = vld [vmem:[%s0 + $0x198] sm:$0xff]
  %v66 = vld [vmem:[%s0 + $0x1a0] sm:$0xff]
  %v67 = vld [vmem:[%s0 + $0x1a8] sm:$0xff]
  %v68 = vld [vmem:[%s0 + $0x1b0] sm:$0xff]
  %v69 = vld [vmem:[%s0 + $0x1b8] sm:$0xff]
  %v70 = vld [vmem:[%s0 + $0x1c0] sm:$0xff]
  %v71 = vld [vmem:[%s0 + $0x1c8] sm:$0xff]
  %v72 = vld [vmem:[%s0 + $0x1d0] sm:$0xff]
  %v73 = vld [vmem:[%s0 + $0x1d8] sm:$0xff]
  %v74 = vld [vmem:[%s0 + $0x1e0] sm:$0xff]
  %v75 = vld [vmem:[%s0 + $0x1e8] sm:$0xff]
  %v76 = vld [vmem:[%s0 + $0x1f0] sm:$0xff]
  %v77 = vld [vmem:[%s0 + $0x1f8] sm:$0xff]
  %v78 = vld [vmem:[%s1] sm:$0x1]
  %v80 = vlaneseq
  %v81 = vshrl.u32 %v80, 7
  %v82 = vsub.s32 0, %v81
  %v83 = vrot.slane %v78, %v82
  %v85 = vmul.f32 %v14, %v83
  %v86 = vmul.f32 %v15, %v83
  %v87 = vmul.f32 %v16, %v83
  %v88 = vmul.f32 %v17, %v83
  %v89 = vmul.f32 %v18, %v83
  %v90 = vmul.f32 %v19, %v83
  %v91 = vmul.f32 %v20, %v83
  %v92 = vmul.f32 %v21, %v83
  %v93 = vmul.f32 %v22, %v83
  %v94 = vmul.f32 %v23, %v83
  %v95 = vmul.f32 %v24, %v83
  %v96 = vmul.f32 %v25, %v83
  %v97 = vmul.f32 %v26, %v83
  %v98 = vmul.f32 %v27, %v83
  %v99 = vmul.f32 %v28, %v83
  %v100 = vmul.f32 %v29, %v83
  %v101 = vmul.f32 %v30, %v83
  %v102 = vmul.f32 %v31, %v83
  %v103 = vmul.f32 %v32, %v83
  %v104 = vmul.f32 %v33, %v83
  %v105 = vmul.f32 %v34, %v83
  %v106 = vmul.f32 %v35, %v83
  %v107 = vmul.f32 %v36, %v83
  %v108 = vmul.f32 %v37, %v83
  %v109 = vmul.f32 %v38, %v83
  %v110 = vmul.f32 %v39, %v83
  %v111 = vmul.f32 %v40, %v83
  %v112 = vmul.f32 %v41, %v83
  %v113 = vmul.f32 %v42, %v83
  %v114 = vmul.f32 %v43, %v83
  %v115 = vmul.f32 %v44, %v83
  %v116 = vmul.f32 %v45, %v83
  %v117 = vmul.f32 %v46, %v83
  %v118 = vmul.f32 %v47, %v83
  %v119 = vmul.f32 %v48, %v83
  %v120 = vmul.f32 %v49, %v83
  %v121 = vmul.f32 %v50, %v83
  %v122 = vmul.f32 %v51, %v83
  %v123 = vmul.f32 %v52, %v83
  %v124 = vmul.f32 %v53, %v83
  %v125 = vmul.f32 %v54, %v83
  %v126 = vmul.f32 %v55, %v83
  %v127 = vmul.f32 %v56, %v83
  %v128 = vmul.f32 %v57, %v83
  %v129 = vmul.f32 %v58, %v83
  %v130 = vmul.f32 %v59, %v83
  %v131 = vmul.f32 %v60, %v83
  %v132 = vmul.f32 %v61, %v83
  %v133 = vmul.f32 %v62, %v83
  %v134 = vmul.f32 %v63, %v83
  %v135 = vmul.f32 %v64, %v83
  %v136 = vmul.f32 %v65, %v83
  %v137 = vmul.f32 %v66, %v83
  %v138 = vmul.f32 %v67, %v83
  %v139 = vmul.f32 %v68, %v83
  %v140 = vmul.f32 %v69, %v83
  %v141 = vmul.f32 %v70, %v83
  %v142 = vmul.f32 %v71, %v83
  %v143 = vmul.f32 %v72, %v83
  %v144 = vmul.f32 %v73, %v83
  %v145 = vmul.f32 %v74, %v83
  %v146 = vmul.f32 %v75, %v83
  %v147 = vmul.f32 %v76, %v83
  %v148 = vmul.f32 %v77, %v83
  %v149 = vld [vmem:[%s2] sm:$0x1]
  %v151 = vlaneseq
  %v152 = vshrl.u32 %v151, 7
  %v153 = vsub.s32 0, %v152
  %v154 = vrot.slane %v149, %v153
  %v156 = vadd.f32 %v85, %v154
  %v157 = vadd.f32 %v86, %v154
  %v158 = vadd.f32 %v87, %v154
  %v159 = vadd.f32 %v88, %v154
  %v160 = vadd.f32 %v89, %v154
  %v161 = vadd.f32 %v90, %v154
  %v162 = vadd.f32 %v91, %v154
  %v163 = vadd.f32 %v92, %v154
  %v164 = vadd.f32 %v93, %v154
  %v165 = vadd.f32 %v94, %v154
  %v166 = vadd.f32 %v95, %v154
  %v167 = vadd.f32 %v96, %v154
  %v168 = vadd.f32 %v97, %v154
  %v169 = vadd.f32 %v98, %v154
  %v170 = vadd.f32 %v99, %v154
  %v171 = vadd.f32 %v100, %v154
  %v172 = vadd.f32 %v101, %v154
  %v173 = vadd.f32 %v102, %v154
  %v174 = vadd.f32 %v103, %v154
  %v175 = vadd.f32 %v104, %v154
  %v176 = vadd.f32 %v105, %v154
  %v177 = vadd.f32 %v106, %v154
  %v178 = vadd.f32 %v107, %v154
  %v179 = vadd.f32 %v108, %v154
  %v180 = vadd.f32 %v109, %v154
  %v181 = vadd.f32 %v110, %v154
  %v182 = vadd.f32 %v111, %v154
  %v183 = vadd.f32 %v112, %v154
  %v184 = vadd.f32 %v113, %v154
  %v185 = vadd.f32 %v114, %v154
  %v186 = vadd.f32 %v115, %v154
  %v187 = vadd.f32 %v116, %v154
  %v188 = vadd.f32 %v117, %v154
  %v189 = vadd.f32 %v118, %v154
  %v190 = vadd.f32 %v119, %v154
  %v191 = vadd.f32 %v120, %v154
  %v192 = vadd.f32 %v121, %v154
  %v193 = vadd.f32 %v122, %v154
  %v194 = vadd.f32 %v123, %v154
  %v195 = vadd.f32 %v124, %v154
  %v196 = vadd.f32 %v125, %v154
  %v197 = vadd.f32 %v126, %v154
  %v198 = vadd.f32 %v127, %v154
  %v199 = vadd.f32 %v128, %v154
  %v200 = vadd.f32 %v129, %v154
  %v201 = vadd.f32 %v130, %v154
  %v202 = vadd.f32 %v131, %v154
  %v203 = vadd.f32 %v132, %v154
  %v204 = vadd.f32 %v133, %v154
  %v205 = vadd.f32 %v134, %v154
  %v206 = vadd.f32 %v135, %v154
  %v207 = vadd.f32 %v136, %v154
  %v208 = vadd.f32 %v137, %v154
  %v209 = vadd.f32 %v138, %v154
  %v210 = vadd.f32 %v139, %v154
  %v211 = vadd.f32 %v140, %v154
  %v212 = vadd.f32 %v141, %v154
  %v213 = vadd.f32 %v142, %v154
  %v214 = vadd.f32 %v143, %v154
  %v215 = vadd.f32 %v144, %v154
  %v216 = vadd.f32 %v145, %v154
  %v217 = vadd.f32 %v146, %v154
  %v218 = vadd.f32 %v147, %v154
  %v219 = vadd.f32 %v148, %v154
  %v220 = vmax.f32 %v156, 0.0
  %v221 = vmax.f32 %v157, 0.0
  %v222 = vmax.f32 %v158, 0.0
  %v223 = vmax.f32 %v159, 0.0
  %v224 = vmax.f32 %v160, 0.0
  %v225 = vmax.f32 %v161, 0.0
  %v226 = vmax.f32 %v162, 0.0
  %v227 = vmax.f32 %v163, 0.0
  %v228 = vmax.f32 %v164, 0.0
  %v229 = vmax.f32 %v165, 0.0
  %v230 = vmax.f32 %v166, 0.0
  %v231 = vmax.f32 %v167, 0.0
  %v232 = vmax.f32 %v168, 0.0
  %v233 = vmax.f32 %v169, 0.0
  %v234 = vmax.f32 %v170, 0.0
  %v235 = vmax.f32 %v171, 0.0
  %v236 = vmax.f32 %v172, 0.0
  %v237 = vmax.f32 %v173, 0.0
  %v238 = vmax.f32 %v174, 0.0
  %v239 = vmax.f32 %v175, 0.0
  %v240 = vmax.f32 %v176, 0.0
  %v241 = vmax.f32 %v177, 0.0
  %v242 = vmax.f32 %v178, 0.0
  %v243 = vmax.f32 %v179, 0.0
  %v244 = vmax.f32 %v180, 0.0
  %v245 = vmax.f32 %v181, 0.0
  %v246 = vmax.f32 %v182, 0.0
  %v247 = vmax.f32 %v183, 0.0
  %v248 = vmax.f32 %v184, 0.0
  %v249 = vmax.f32 %v185, 0.0
  %v250 = vmax.f32 %v186, 0.0
  %v251 = vmax.f32 %v187, 0.0
  %v252 = vmax.f32 %v188, 0.0
  %v253 = vmax.f32 %v189, 0.0
  %v254 = vmax.f32 %v190, 0.0
  %v255 = vmax.f32 %v191, 0.0
  %v256 = vmax.f32 %v192, 0.0
  %v257 = vmax.f32 %v193, 0.0
  %v258 = vmax.f32 %v194, 0.0
  %v259 = vmax.f32 %v195, 0.0
  %v260 = vmax.f32 %v196, 0.0
  %v261 = vmax.f32 %v197, 0.0
  %v262 = vmax.f32 %v198, 0.0
  %v263 = vmax.f32 %v199, 0.0
  %v264 = vmax.f32 %v200, 0.0
  %v265 = vmax.f32 %v201, 0.0
  %v266 = vmax.f32 %v202, 0.0
  %v267 = vmax.f32 %v203, 0.0
  %v268 = vmax.f32 %v204, 0.0
  %v269 = vmax.f32 %v205, 0.0
  %v270 = vmax.f32 %v206, 0.0
  %v271 = vmax.f32 %v207, 0.0
  %v272 = vmax.f32 %v208, 0.0
  %v273 = vmax.f32 %v209, 0.0
  %v274 = vmax.f32 %v210, 0.0
  %v275 = vmax.f32 %v211, 0.0
  %v276 = vmax.f32 %v212, 0.0
  %v277 = vmax.f32 %v213, 0.0
  %v278 = vmax.f32 %v214, 0.0
  %v279 = vmax.f32 %v215, 0.0
  %v280 = vmax.f32 %v216, 0.0
  %v281 = vmax.f32 %v217, 0.0
  %v282 = vmax.f32 %v218, 0.0
  %v283 = vmax.f32 %v219, 0.0
  %284 = vst [vmem:[%s3] sm:$0xff] %v220
  %285 = vst [vmem:[%s3 + $0x8] sm:$0xff] %v221
  %286 = vst [vmem:[%s3 + $0x10] sm:$0xff] %v222
  %287 = vst [vmem:[%s3 + $0x18] sm:$0xff] %v223
  %288 = vst [vmem:[%s3 + $0x20] sm:$0xff] %v224
  %289 = vst [vmem:[%s3 + $0x28] sm:$0xff] %v225
  %290 = vst [vmem:[%s3 + $0x30] sm:$0xff] %v226
  %291 = vst [vmem:[%s3 + $0x38] sm:$0xff] %v227
  %292 = vst [vmem:[%s3 + $0x40] sm:$0xff] %v228
  %293 = vst [vmem:[%s3 + $0x48] sm:$0xff] %v229
  %294 = vst [vmem:[%s3 + $0x50] sm:$0xff] %v230
  %295 = vst [vmem:[%s3 + $0x58] sm:$0xff] %v231
  %296 = vst [vmem:[%s3 + $0x60] sm:$0xff] %v232
  %297 = vst [vmem:[%s3 + $0x68] sm:$0xff] %v233
  %298 = vst [vmem:[%s3 + $0x70] sm:$0xff] %v234
  %299 = vst [vmem:[%s3 + $0x78] sm:$0xff] %v235
  %300 = vst [vmem:[%s3 + $0x80] sm:$0xff] %v236
  %301 = vst [vmem:[%s3 + $0x88] sm:$0xff] %v237
  %302 = vst [vmem:[%s3 + $0x90] sm:$0xff] %v238
  %303 = vst [vmem:[%s3 + $0x98] sm:$0xff] %v239
  %304 = vst [vmem:[%s3 + $0xa0] sm:$0xff] %v240
  %305 = vst [vmem:[%s3 + $0xa8] sm:$0xff] %v241
  %306 = vst [vmem:[%s3 + $0xb0] sm:$0xff] %v242
  %307 = vst [vmem:[%s3 + $0xb8] sm:$0xff] %v243
  %308 = vst [vmem:[%s3 + $0xc0] sm:$0xff] %v244
  %309 = vst [vmem:[%s3 + $0xc8] sm:$0xff] %v245
  %310 = vst [vmem:[%s3 + $0xd0] sm:$0xff] %v246
  %311 = vst [vmem:[%s3 + $0xd8] sm:$0xff] %v247
  %312 = vst [vmem:[%s3 + $0xe0] sm:$0xff] %v248
  %313 = vst [vmem:[%s3 + $0xe8] sm:$0xff] %v249
  %314 = vst [vmem:[%s3 + $0xf0] sm:$0xff] %v250
  %315 = vst [vmem:[%s3 + $0xf8] sm:$0xff] %v251
  %316 = vst [vmem:[%s3 + $0x100] sm:$0xff] %v252
  %317 = vst [vmem:[%s3 + $0x108] sm:$0xff] %v253
  %318 = vst [vmem:[%s3 + $0x110] sm:$0xff] %v254
  %319 = vst [vmem:[%s3 + $0x118] sm:$0xff] %v255
  %320 = vst [vmem:[%s3 + $0x120] sm:$0xff] %v256
  %321 = vst [vmem:[%s3 + $0x128] sm:$0xff] %v257
  %322 = vst [vmem:[%s3 + $0x130] sm:$0xff] %v258
  %323 = vst [vmem:[%s3 + $0x138] sm:$0xff] %v259
  %324 = vst [vmem:[%s3 + $0x140] sm:$0xff] %v260
  %325 = vst [vmem:[%s3 + $0x148] sm:$0xff] %v261
  %326 = vst [vmem:[%s3 + $0x150] sm:$0xff] %v262
  %327 = vst [vmem:[%s3 + $0x158] sm:$0xff] %v263
  %328 = vst [vmem:[%s3 + $0x160] sm:$0xff] %v264
  %329 = vst [vmem:[%s3 + $0x168] sm:$0xff] %v265
  %330 = vst [vmem:[%s3 + $0x170] sm:$0xff] %v266
  %331 = vst [vmem:[%s3 + $0x178] sm:$0xff] %v267
  %332 = vst [vmem:[%s3 + $0x180] sm:$0xff] %v268
  %333 = vst [vmem:[%s3 + $0x188] sm:$0xff] %v269
  %334 = vst [vmem:[%s3 + $0x190] sm:$0xff] %v270
  %335 = vst [vmem:[%s3 + $0x198] sm:$0xff] %v271
  %336 = vst [vmem:[%s3 + $0x1a0] sm:$0xff] %v272
  %337 = vst [vmem:[%s3 + $0x1a8] sm:$0xff] %v273
  %338 = vst [vmem:[%s3 + $0x1b0] sm:$0xff] %v274
  %339 = vst [vmem:[%s3 + $0x1b8] sm:$0xff] %v275
  %340 = vst [vmem:[%s3 + $0x1c0] sm:$0xff] %v276
  %341 = vst [vmem:[%s3 + $0x1c8] sm:$0xff] %v277
  %342 = vst [vmem:[%s3 + $0x1d0] sm:$0xff] %v278
  %343 = vst [vmem:[%s3 + $0x1d8] sm:$0xff] %v279
  %344 = vst [vmem:[%s3 + $0x1e0] sm:$0xff] %v280
  %345 = vst [vmem:[%s3 + $0x1e8] sm:$0xff] %v281
  %346 = vst [vmem:[%s3 + $0x1f0] sm:$0xff] %v282
  %347 = vst [vmem:[%s3 + $0x1f8] sm:$0xff] %v283
  // Predicated region
  $region14: #{down_conv_forward.7} parent=0 // pred_check
    _
  $region15: #{down_conv_forward.7} parent=0 // pred_check_branch
    %349 = sbr.rel (0) target = $region17
  $region16: #{down_conv_forward.7} parent=0 // pred_region
    _
  $region17: #{down_conv_forward.7} parent=0 // pred_fallthru
    _
  // Predicated region
  $region18: #{down_conv_forward.7} parent=0 // pred_check
    _
  $region19: #{down_conv_forward.7} parent=0 // pred_check_branch
    %351 = sbr.rel (0) target = $region21
  $region20: #{down_conv_forward.7} parent=0 // pred_region
    _
  $region21: #{down_conv_forward.7} parent=0 // pred_fallthru
    _

// kernel: down_conv_forward.9
$region0: #{down_conv_forward.9}
  #allocation0 [shape = 'u32[]', space=smem, size = 0x4, offset = 0x4, fixed_abs, tag = 'smem constant byte address 0x4 - core index']
  #allocation1 [shape = 'u32[144,128]{1,0:T(1,128)}', space=vmem, size = 0x12000, scoped, tag = 'internal scratch']
  %s0 = inlined_call_operand.vmem [shape: f32[512,128], index: 0, kind: input, shape index: {}]
  %s1 = inlined_call_operand.vmem [shape: f32[1,128], index: 1, kind: input, shape index: {}]
  %s2 = inlined_call_operand.vmem [shape: f32[1,128], index: 2, kind: input, shape index: {}]
  %s3 = inlined_call_operand.vmem [shape: f32[512,128], index: 3, kind: input, shape index: {}]
  %s4 = inlined_call_operand.vmem [shape: f32[512,128], index: 4, kind: output, shape index: {}]
  %s5 = sld [smem:[#allocation0]]
  $region26: #{down_conv_forward.9} parent=0
    _
  %s7 = ssub.s32 1, %s5
  %s8 = scalar_select 0, %s7, %s5
  // Predicated region
  $region2: #{down_conv_forward.9} parent=0 // pred_check
    _
  $region3: #{down_conv_forward.9} parent=0 // pred_check_branch
    %10 = sbr.rel (0) target = $region5
  $region4: #{down_conv_forward.9} parent=0 // pred_region
    _
  $region5: #{down_conv_forward.9} parent=0 // pred_fallthru
    _
  // Predicated region
  $region6: #{down_conv_forward.9} parent=0 // pred_check
    _
  $region7: #{down_conv_forward.9} parent=0 // pred_check_branch
    %12 = sbr.rel (0) target = $region9
  $region8: #{down_conv_forward.9} parent=0 // pred_region
    _
  $region9: #{down_conv_forward.9} parent=0 // pred_fallthru
    _
  // Predicated region
  $region10: #{down_conv_forward.9} parent=0 // pred_check
    _
  $region11: #{down_conv_forward.9} parent=0 // pred_check_branch
    %14 = sbr.rel (0) target = $region13
  $region12: #{down_conv_forward.9} parent=0 // pred_region
    _
  $region13: #{down_conv_forward.9} parent=0 // pred_fallthru
    _
  // Predicated region
  $region14: #{down_conv_forward.9} parent=0 // pred_check
    _
  $region15: #{down_conv_forward.9} parent=0 // pred_check_branch
    %16 = sbr.rel (0) target = $region17
  $region16: #{down_conv_forward.9} parent=0 // pred_region
    _
  $region17: #{down_conv_forward.9} parent=0 // pred_fallthru
    _
  %v17 = vld [vmem:[%s0] sm:$0xff]
  %v18 = vld [vmem:[%s0 + $0x8] sm:$0xff]
  %v19 = vld [vmem:[%s0 + $0x10] sm:$0xff]
  %v20 = vld [vmem:[%s0 + $0x18] sm:$0xff]
  %v21 = vld [vmem:[%s0 + $0x20] sm:$0xff]
  %v22 = vld [vmem:[%s0 + $0x28] sm:$0xff]
  %v23 = vld [vmem:[%s0 + $0x30] sm:$0xff]
  %v24 = vld [vmem:[%s0 + $0x38] sm:$0xff]
  %v25 = vld [vmem:[%s0 + $0x40] sm:$0xff]
  %v26 = vld [vmem:[%s0 + $0x48] sm:$0xff]
  %v27 = vld [vmem:[%s0 + $0x50] sm:$0xff]
  %v28 = vld [vmem:[%s0 + $0x58] sm:$0xff]
  %v29 = vld [vmem:[%s0 + $0x60] sm:$0xff]
  %v30 = vld [vmem:[%s0 + $0x68] sm:$0xff]
  %v31 = vld [vmem:[%s0 + $0x70] sm:$0xff]
  %v32 = vld [vmem:[%s0 + $0x78] sm:$0xff]
  %v33 = vld [vmem:[%s0 + $0x80] sm:$0xff]
  %v34 = vld [vmem:[%s0 + $0x88] sm:$0xff]
  %v35 = vld [vmem:[%s0 + $0x90] sm:$0xff]
  %v36 = vld [vmem:[%s0 + $0x98] sm:$0xff]
  %v37 = vld [vmem:[%s0 + $0xa0] sm:$0xff]
  %v38 = vld [vmem:[%s0 + $0xa8] sm:$0xff]
  %v39 = vld [vmem:[%s0 + $0xb0] sm:$0xff]
  %v40 = vld [vmem:[%s0 + $0xb8] sm:$0xff]
  %v41 = vld [vmem:[%s0 + $0xc0] sm:$0xff]
  %v42 = vld [vmem:[%s0 + $0xc8] sm:$0xff]
  %v43 = vld [vmem:[%s0 + $0xd0] sm:$0xff]
  %v44 = vld [vmem:[%s0 + $0xd8] sm:$0xff]
  %v45 = vld [vmem:[%s0 + $0xe0] sm:$0xff]
  %v46 = vld [vmem:[%s0 + $0xe8] sm:$0xff]
  %v47 = vld [vmem:[%s0 + $0xf0] sm:$0xff]
  %v48 = vld [vmem:[%s0 + $0xf8] sm:$0xff]
  %v49 = vld [vmem:[%s0 + $0x100] sm:$0xff]
  %v50 = vld [vmem:[%s0 + $0x108] sm:$0xff]
  %v51 = vld [vmem:[%s0 + $0x110] sm:$0xff]
  %v52 = vld [vmem:[%s0 + $0x118] sm:$0xff]
  %v53 = vld [vmem:[%s0 + $0x120] sm:$0xff]
  %v54 = vld [vmem:[%s0 + $0x128] sm:$0xff]
  %v55 = vld [vmem:[%s0 + $0x130] sm:$0xff]
  %v56 = vld [vmem:[%s0 + $0x138] sm:$0xff]
  %v57 = vld [vmem:[%s0 + $0x140] sm:$0xff]
  %v58 = vld [vmem:[%s0 + $0x148] sm:$0xff]
  %v59 = vld [vmem:[%s0 + $0x150] sm:$0xff]
  %v60 = vld [vmem:[%s0 + $0x158] sm:$0xff]
  %v61 = vld [vmem:[%s0 + $0x160] sm:$0xff]
  %v62 = vld [vmem:[%s0 + $0x168] sm:$0xff]
  %v63 = vld [vmem:[%s0 + $0x170] sm:$0xff]
  %v64 = vld [vmem:[%s0 + $0x178] sm:$0xff]
  %v65 = vld [vmem:[%s0 + $0x180] sm:$0xff]
  %v66 = vld [vmem:[%s0 + $0x188] sm:$0xff]
  %v67 = vld [vmem:[%s0 + $0x190] sm:$0xff]
  %v68 = vld [vmem:[%s0 + $0x198] sm:$0xff]
  %v69 = vld [vmem:[%s0 + $0x1a0] sm:$0xff]
  %v70 = vld [vmem:[%s0 + $0x1a8] sm:$0xff]
  %v71 = vld [vmem:[%s0 + $0x1b0] sm:$0xff]
  %v72 = vld [vmem:[%s0 + $0x1b8] sm:$0xff]
  %v73 = vld [vmem:[%s0 + $0x1c0] sm:$0xff]
  %v74 = vld [vmem:[%s0 + $0x1c8] sm:$0xff]
  %v75 = vld [vmem:[%s0 + $0x1d0] sm:$0xff]
  %v76 = vld [vmem:[%s0 + $0x1d8] sm:$0xff]
  %v77 = vld [vmem:[%s0 + $0x1e0] sm:$0xff]
  %v78 = vld [vmem:[%s0 + $0x1e8] sm:$0xff]
  %v79 = vld [vmem:[%s0 + $0x1f0] sm:$0xff]
  %v80 = vld [vmem:[%s0 + $0x1f8] sm:$0xff]
  %v81 = vld [vmem:[%s1] sm:$0x1]
  %v83 = vlaneseq
  %v84 = vshrl.u32 %v83, 7
  %v85 = vsub.s32 0, %v84
  %v86 = vrot.slane %v81, %v85
  %v88 = vmul.f32 %v17, %v86
  %v89 = vmul.f32 %v18, %v86
  %v90 = vmul.f32 %v19, %v86
  %v91 = vmul.f32 %v20, %v86
  %v92 = vmul.f32 %v21, %v86
  %v93 = vmul.f32 %v22, %v86
  %v94 = vmul.f32 %v23, %v86
  %v95 = vmul.f32 %v24, %v86
  %v96 = vmul.f32 %v25, %v86
  %v97 = vmul.f32 %v26, %v86
  %v98 = vmul.f32 %v27, %v86
  %v99 = vmul.f32 %v28, %v86
  %v100 = vmul.f32 %v29, %v86
  %v101 = vmul.f32 %v30, %v86
  %v102 = vmul.f32 %v31, %v86
  %v103 = vmul.f32 %v32, %v86
  %v104 = vmul.f32 %v33, %v86
  %v105 = vmul.f32 %v34, %v86
  %v106 = vmul.f32 %v35, %v86
  %v107 = vmul.f32 %v36, %v86
  %v108 = vmul.f32 %v37, %v86
  %v109 = vmul.f32 %v38, %v86
  %v110 = vmul.f32 %v39, %v86
  %v111 = vmul.f32 %v40, %v86
  %v112 = vmul.f32 %v41, %v86
  %v113 = vmul.f32 %v42, %v86
  %v114 = vmul.f32 %v43, %v86
  %v115 = vmul.f32 %v44, %v86
  %v116 = vmul.f32 %v45, %v86
  %v117 = vmul.f32 %v46, %v86
  %v118 = vmul.f32 %v47, %v86
  %v119 = vmul.f32 %v48, %v86
  %v120 = vmul.f32 %v49, %v86
  %v121 = vmul.f32 %v50, %v86
  %v122 = vmul.f32 %v51, %v86
  %v123 = vmul.f32 %v52, %v86
  %v124 = vmul.f32 %v53, %v86
  %v125 = vmul.f32 %v54, %v86
  %v126 = vmul.f32 %v55, %v86
  %v127 = vmul.f32 %v56, %v86
  %v128 = vmul.f32 %v57, %v86
  %v129 = vmul.f32 %v58, %v86
  %v130 = vmul.f32 %v59, %v86
  %v131 = vmul.f32 %v60, %v86
  %v132 = vmul.f32 %v61, %v86
  %v133 = vmul.f32 %v62, %v86
  %v134 = vmul.f32 %v63, %v86
  %v135 = vmul.f32 %v64, %v86
  %v136 = vmul.f32 %v65, %v86
  %v137 = vmul.f32 %v66, %v86
  %v138 = vmul.f32 %v67, %v86
  %v139 = vmul.f32 %v68, %v86
  %v140 = vmul.f32 %v69, %v86
  %v141 = vmul.f32 %v70, %v86
  %v142 = vmul.f32 %v71, %v86
  %v143 = vmul.f32 %v72, %v86
  %v144 = vmul.f32 %v73, %v86
  %v145 = vmul.f32 %v74, %v86
  %v146 = vmul.f32 %v75, %v86
  %v147 = vmul.f32 %v76, %v86
  %v148 = vmul.f32 %v77, %v86
  %v149 = vmul.f32 %v78, %v86
  %v150 = vmul.f32 %v79, %v86
  %v151 = vmul.f32 %v80, %v86
  %v152 = vld [vmem:[%s2] sm:$0x1]
  %v154 = vlaneseq
  %v155 = vshrl.u32 %v154, 7
  %v156 = vsub.s32 0, %v155
  %v157 = vrot.slane %v152, %v156
  %v159 = vadd.f32 %v88, %v157
  %v160 = vadd.f32 %v89, %v157
  %v161 = vadd.f32 %v90, %v157
  %v162 = vadd.f32 %v91, %v157
  %v163 = vadd.f32 %v92, %v157
  %v164 = vadd.f32 %v93, %v157
  %v165 = vadd.f32 %v94, %v157
  %v166 = vadd.f32 %v95, %v157
  %v167 = vadd.f32 %v96, %v157
  %v168 = vadd.f32 %v97, %v157
  %v169 = vadd.f32 %v98, %v157
  %v170 = vadd.f32 %v99, %v157
  %v171 = vadd.f32 %v100, %v157
  %v172 = vadd.f32 %v101, %v157
  %v173 = vadd.f32 %v102, %v157
  %v174 = vadd.f32 %v103, %v157
  %v175 = vadd.f32 %v104, %v157
  %v176 = vadd.f32 %v105, %v157
  %v177 = vadd.f32 %v106, %v157
  %v178 = vadd.f32 %v107, %v157
  %v179 = vadd.f32 %v108, %v157
  %v180 = vadd.f32 %v109, %v157
  %v181 = vadd.f32 %v110, %v157
  %v182 = vadd.f32 %v111, %v157
  %v183 = vadd.f32 %v112, %v157
  %v184 = vadd.f32 %v113, %v157
  %v185 = vadd.f32 %v114, %v157
  %v186 = vadd.f32 %v115, %v157
  %v187 = vadd.f32 %v116, %v157
  %v188 = vadd.f32 %v117, %v157
  %v189 = vadd.f32 %v118, %v157
  %v190 = vadd.f32 %v119, %v157
  %v191 = vadd.f32 %v120, %v157
  %v192 = vadd.f32 %v121, %v157
  %v193 = vadd.f32 %v122, %v157
  %v194 = vadd.f32 %v123, %v157
  %v195 = vadd.f32 %v124, %v157
  %v196 = vadd.f32 %v125, %v157
  %v197 = vadd.f32 %v126, %v157
  %v198 = vadd.f32 %v127, %v157
  %v199 = vadd.f32 %v128, %v157
  %v200 = vadd.f32 %v129, %v157
  %v201 = vadd.f32 %v130, %v157
  %v202 = vadd.f32 %v131, %v157
  %v203 = vadd.f32 %v132, %v157
  %v204 = vadd.f32 %v133, %v157
  %v205 = vadd.f32 %v134, %v157
  %v206 = vadd.f32 %v135, %v157
  %v207 = vadd.f32 %v136, %v157
  %v208 = vadd.f32 %v137, %v157
  %v209 = vadd.f32 %v138, %v157
  %v210 = vadd.f32 %v139, %v157
  %v211 = vadd.f32 %v140, %v157
  %v212 = vadd.f32 %v141, %v157
  %v213 = vadd.f32 %v142, %v157
  %v214 = vadd.f32 %v143, %v157
  %v215 = vadd.f32 %v144, %v157
  %v216 = vadd.f32 %v145, %v157
  %v217 = vadd.f32 %v146, %v157
  %v218 = vadd.f32 %v147, %v157
  %v219 = vadd.f32 %v148, %v157
  %v220 = vadd.f32 %v149, %v157
  %v221 = vadd.f32 %v150, %v157
  %v222 = vadd.f32 %v151, %v157
  %v223 = vld [vmem:[%s3] sm:$0xff]
  %v224 = vld [vmem:[%s3 + $0x8] sm:$0xff]
  %v225 = vld [vmem:[%s3 + $0x10] sm:$0xff]
  %v226 = vld [vmem:[%s3 + $0x18] sm:$0xff]
  %v227 = vld [vmem:[%s3 + $0x20] sm:$0xff]
  %v228 = vld [vmem:[%s3 + $0x28] sm:$0xff]
  %v229 = vld [vmem:[%s3 + $0x30] sm:$0xff]
  %v230 = vld [vmem:[%s3 + $0x38] sm:$0xff]
  %v231 = vld [vmem:[%s3 + $0x40] sm:$0xff]
  %v232 = vld [vmem:[%s3 + $0x48] sm:$0xff]
  %v233 = vld [vmem:[%s3 + $0x50] sm:$0xff]
  %v234 = vld [vmem:[%s3 + $0x58] sm:$0xff]
  %v235 = vld [vmem:[%s3 + $0x60] sm:$0xff]
  %v236 = vld [vmem:[%s3 + $0x68] sm:$0xff]
  %v237 = vld [vmem:[%s3 + $0x70] sm:$0xff]
  %v238 = vld [vmem:[%s3 + $0x78] sm:$0xff]
  %v239 = vld [vmem:[%s3 + $0x80] sm:$0xff]
  %v240 = vld [vmem:[%s3 + $0x88] sm:$0xff]
  %v241 = vld [vmem:[%s3 + $0x90] sm:$0xff]
  %v242 = vld [vmem:[%s3 + $0x98] sm:$0xff]
  %v243 = vld [vmem:[%s3 + $0xa0] sm:$0xff]
  %v244 = vld [vmem:[%s3 + $0xa8] sm:$0xff]
  %v245 = vld [vmem:[%s3 + $0xb0] sm:$0xff]
  %v246 = vld [vmem:[%s3 + $0xb8] sm:$0xff]
  %v247 = vld [vmem:[%s3 + $0xc0] sm:$0xff]
  %v248 = vld [vmem:[%s3 + $0xc8] sm:$0xff]
  %v249 = vld [vmem:[%s3 + $0xd0] sm:$0xff]
  %v250 = vld [vmem:[%s3 + $0xd8] sm:$0xff]
  %v251 = vld [vmem:[%s3 + $0xe0] sm:$0xff]
  %v252 = vld [vmem:[%s3 + $0xe8] sm:$0xff]
  %v253 = vld [vmem:[%s3 + $0xf0] sm:$0xff]
  %v254 = vld [vmem:[%s3 + $0xf8] sm:$0xff]
  %v255 = vld [vmem:[%s3 + $0x100] sm:$0xff]
  %v256 = vld [vmem:[%s3 + $0x108] sm:$0xff]
  %v257 = vld [vmem:[%s3 + $0x110] sm:$0xff]
  %v258 = vld [vmem:[%s3 + $0x118] sm:$0xff]
  %v259 = vld [vmem:[%s3 + $0x120] sm:$0xff]
  %v260 = vld [vmem:[%s3 + $0x128] sm:$0xff]
  %v261 = vld [vmem:[%s3 + $0x130] sm:$0xff]
  %v262 = vld [vmem:[%s3 + $0x138] sm:$0xff]
  %v263 = vld [vmem:[%s3 + $0x140] sm:$0xff]
  %v264 = vld [vmem:[%s3 + $0x148] sm:$0xff]
  %v265 = vld [vmem:[%s3 + $0x150] sm:$0xff]
  %v266 = vld [vmem:[%s3 + $0x158] sm:$0xff]
  %v267 = vld [vmem:[%s3 + $0x160] sm:$0xff]
  %v268 = vld [vmem:[%s3 + $0x168] sm:$0xff]
  %v269 = vld [vmem:[%s3 + $0x170] sm:$0xff]
  %v270 = vld [vmem:[%s3 + $0x178] sm:$0xff]
  %v271 = vld [vmem:[%s3 + $0x180] sm:$0xff]
  %v272 = vld [vmem:[%s3 + $0x188] sm:$0xff]
  %v273 = vld [vmem:[%s3 + $0x190] sm:$0xff]
  %v274 = vld [vmem:[%s3 + $0x198] sm:$0xff]
  %v275 = vld [vmem:[%s3 + $0x1a0] sm:$0xff]
  %v276 = vld [vmem:[%s3 + $0x1a8] sm:$0xff]
  %v277 = vld [vmem:[%s3 + $0x1b0] sm:$0xff]
  %v278 = vld [vmem:[%s3 + $0x1b8] sm:$0xff]
  %v279 = vld [vmem:[%s3 + $0x1c0] sm:$0xff]
  %v280 = vld [vmem:[%s3 + $0x1c8] sm:$0xff]
  %v281 = vld [vmem:[%s3 + $0x1d0] sm:$0xff]
  %v282 = vld [vmem:[%s3 + $0x1d8] sm:$0xff]
  %v283 = vld [vmem:[%s3 + $0x1e0] sm:$0xff]
  %v284 = vld [vmem:[%s3 + $0x1e8] sm:$0xff]
  %v285 = vld [vmem:[%s3 + $0x1f0] sm:$0xff]
  %v286 = vld [vmem:[%s3 + $0x1f8] sm:$0xff]
  %v287 = vadd.f32 %v159, %v223
  %v288 = vadd.f32 %v160, %v224
  %v289 = vadd.f32 %v161, %v225
  %v290 = vadd.f32 %v162, %v226
  %v291 = vadd.f32 %v163, %v227
  %v292 = vadd.f32 %v164, %v228
  %v293 = vadd.f32 %v165, %v229
  %v294 = vadd.f32 %v166, %v230
  %v295 = vadd.f32 %v167, %v231
  %v296 = vadd.f32 %v168, %v232
  %v297 = vadd.f32 %v169, %v233
  %v298 = vadd.f32 %v170, %v234
  %v299 = vadd.f32 %v171, %v235
  %v300 = vadd.f32 %v172, %v236
  %v301 = vadd.f32 %v173, %v237
  %v302 = vadd.f32 %v174, %v238
  %v303 = vadd.f32 %v175, %v239
  %v304 = vadd.f32 %v176, %v240
  %v305 = vadd.f32 %v177, %v241
  %v306 = vadd.f32 %v178, %v242
  %v307 = vadd.f32 %v179, %v243
  %v308 = vadd.f32 %v180, %v244
  %v309 = vadd.f32 %v181, %v245
  %v310 = vadd.f32 %v182, %v246
  %v311 = vadd.f32 %v183, %v247
  %v312 = vadd.f32 %v184, %v248
  %v313 = vadd.f32 %v185, %v249
  %v314 = vadd.f32 %v186, %v250
  %v315 = vadd.f32 %v187, %v251
  %v316 = vadd.f32 %v188, %v252
  %v317 = vadd.f32 %v189, %v253
  %v318 = vadd.f32 %v190, %v254
  %v319 = vadd.f32 %v191, %v255
  %v320 = vadd.f32 %v192, %v256
  %v321 = vadd.f32 %v193, %v257
  %v322 = vadd.f32 %v194, %v258
  %v323 = vadd.f32 %v195, %v259
  %v324 = vadd.f32 %v196, %v260
  %v325 = vadd.f32 %v197, %v261
  %v326 = vadd.f32 %v198, %v262
  %v327 = vadd.f32 %v199, %v263
  %v328 = vadd.f32 %v200, %v264
  %v329 = vadd.f32 %v201, %v265
  %v330 = vadd.f32 %v202, %v266
  %v331 = vadd.f32 %v203, %v267
  %v332 = vadd.f32 %v204, %v268
  %v333 = vadd.f32 %v205, %v269
  %v334 = vadd.f32 %v206, %v270
  %v335 = vadd.f32 %v207, %v271
  %v336 = vadd.f32 %v208, %v272
  %v337 = vadd.f32 %v209, %v273
  %v338 = vadd.f32 %v210, %v274
  %v339 = vadd.f32 %v211, %v275
  %v340 = vadd.f32 %v212, %v276
  %v341 = vadd.f32 %v213, %v277
  %v342 = vadd.f32 %v214, %v278
  %v343 = vadd.f32 %v215, %v279
  %v344 = vadd.f32 %v216, %v280
  %v345 = vadd.f32 %v217, %v281
  %v346 = vadd.f32 %v218, %v282
  %v347 = vadd.f32 %v219, %v283
  %v348 = vadd.f32 %v220, %v284
  %v349 = vadd.f32 %v221, %v285
  %v350 = vadd.f32 %v222, %v286
  %v351 = vmax.f32 %v287, 0.0
  %v352 = vmax.f32 %v288, 0.0
  %v353 = vmax.f32 %v289, 0.0
  %v354 = vmax.f32 %v290, 0.0
  %v355 = vmax.f32 %v291, 0.0
  %v356 = vmax.f32 %v292, 0.0
  %v357 = vmax.f32 %v293, 0.0
  %v358 = vmax.f32 %v294, 0.0
  %v359 = vmax.f32 %v295, 0.0
  %v360 = vmax.f32 %v296, 0.0
  %v361 = vmax.f32 %v297, 0.0
  %v362 = vmax.f32 %v298, 0.0
  %v363 = vmax.f32 %v299, 0.0
  %v364 = vmax.f32 %v300, 0.0
  %v365 = vmax.f32 %v301, 0.0
  %v366 = vmax.f32 %v302, 0.0
  %v367 = vmax.f32 %v303, 0.0
  %v368 = vmax.f32 %v304, 0.0
  %v369 = vmax.f32 %v305, 0.0
  %v370 = vmax.f32 %v306, 0.0
  %v371 = vmax.f32 %v307, 0.0
  %v372 = vmax.f32 %v308, 0.0
  %v373 = vmax.f32 %v309, 0.0
  %v374 = vmax.f32 %v310, 0.0
  %v375 = vmax.f32 %v311, 0.0
  %v376 = vmax.f32 %v312, 0.0
  %v377 = vmax.f32 %v313, 0.0
  %v378 = vmax.f32 %v314, 0.0
  %v379 = vmax.f32 %v315, 0.0
  %v380 = vmax.f32 %v316, 0.0
  %v381 = vmax.f32 %v317, 0.0
  %v382 = vmax.f32 %v318, 0.0
  %v383 = vmax.f32 %v319, 0.0
  %v384 = vmax.f32 %v320, 0.0
  %v385 = vmax.f32 %v321, 0.0
  %v386 = vmax.f32 %v322, 0.0
  %v387 = vmax.f32 %v323, 0.0
  %v388 = vmax.f32 %v324, 0.0
  %v389 = vmax.f32 %v325, 0.0
  %v390 = vmax.f32 %v326, 0.0
  %v391 = vmax.f32 %v327, 0.0
  %v392 = vmax.f32 %v328, 0.0
  %v393 = vmax.f32 %v329, 0.0
  %v394 = vmax.f32 %v330, 0.0
  %v395 = vmax.f32 %v331, 0.0
  %v396 = vmax.f32 %v332, 0.0
  %v397 = vmax.f32 %v333, 0.0
  %v398 = vmax.f32 %v334, 0.0
  %v399 = vmax.f32 %v335, 0.0
  %v400 = vmax.f32 %v336, 0.0
  %v401 = vmax.f32 %v337, 0.0
  %v402 = vmax.f32 %v338, 0.0
  %v403 = vmax.f32 %v339, 0.0
  %v404 = vmax.f32 %v340, 0.0
  %v405 = vmax.f32 %v341, 0.0
  %v406 = vmax.f32 %v342, 0.0
  %v407 = vmax.f32 %v343, 0.0
  %v408 = vmax.f32 %v344, 0.0
  %v409 = vmax.f32 %v345, 0.0
  %v410 = vmax.f32 %v346, 0.0
  %v411 = vmax.f32 %v347, 0.0
  %v412 = vmax.f32 %v348, 0.0
  %v413 = vmax.f32 %v349, 0.0
  %v414 = vmax.f32 %v350, 0.0
  %415 = vst [vmem:[%s4] sm:$0xff] %v351
  %416 = vst [vmem:[%s4 + $0x8] sm:$0xff] %v352
  %417 = vst [vmem:[%s4 + $0x10] sm:$0xff] %v353
  %418 = vst [vmem:[%s4 + $0x18] sm:$0xff] %v354
  %419 = vst [vmem:[%s4 + $0x20] sm:$0xff] %v355
  %420 = vst [vmem:[%s4 + $0x28] sm:$0xff] %v356
  %421 = vst [vmem:[%s4 + $0x30] sm:$0xff] %v357
  %422 = vst [vmem:[%s4 + $0x38] sm:$0xff] %v358
  %423 = vst [vmem:[%s4 + $0x40] sm:$0xff] %v359
  %424 = vst [vmem:[%s4 + $0x48] sm:$0xff] %v360
  %425 = vst [vmem:[%s4 + $0x50] sm:$0xff] %v361
  %426 = vst [vmem:[%s4 + $0x58] sm:$0xff] %v362
  %427 = vst [vmem:[%s4 + $0x60] sm:$0xff] %v363
  %428 = vst [vmem:[%s4 + $0x68] sm:$0xff] %v364
  %429 = vst [vmem:[%s4 + $0x70] sm:$0xff] %v365
  %430 = vst [vmem:[%s4 + $0x78] sm:$0xff] %v366
  %431 = vst [vmem:[%s4 + $0x80] sm:$0xff] %v367
  %432 = vst [vmem:[%s4 + $0x88] sm:$0xff] %v368
  %433 = vst [vmem:[%s4 + $0x90] sm:$0xff] %v369
  %434 = vst [vmem:[%s4 + $0x98] sm:$0xff] %v370
  %435 = vst [vmem:[%s4 + $0xa0] sm:$0xff] %v371
  %436 = vst [vmem:[%s4 + $0xa8] sm:$0xff] %v372
  %437 = vst [vmem:[%s4 + $0xb0] sm:$0xff] %v373
  %438 = vst [vmem:[%s4 + $0xb8] sm:$0xff] %v374
  %439 = vst [vmem:[%s4 + $0xc0] sm:$0xff] %v375
  %440 = vst [vmem:[%s4 + $0xc8] sm:$0xff] %v376
  %441 = vst [vmem:[%s4 + $0xd0] sm:$0xff] %v377
  %442 = vst [vmem:[%s4 + $0xd8] sm:$0xff] %v378
  %443 = vst [vmem:[%s4 + $0xe0] sm:$0xff] %v379
  %444 = vst [vmem:[%s4 + $0xe8] sm:$0xff] %v380
  %445 = vst [vmem:[%s4 + $0xf0] sm:$0xff] %v381
  %446 = vst [vmem:[%s4 + $0xf8] sm:$0xff] %v382
  %447 = vst [vmem:[%s4 + $0x100] sm:$0xff] %v383
  %448 = vst [vmem:[%s4 + $0x108] sm:$0xff] %v384
  %449 = vst [vmem:[%s4 + $0x110] sm:$0xff] %v385
  %450 = vst [vmem:[%s4 + $0x118] sm:$0xff] %v386
  %451 = vst [vmem:[%s4 + $0x120] sm:$0xff] %v387
  %452 = vst [vmem:[%s4 + $0x128] sm:$0xff] %v388
  %453 = vst [vmem:[%s4 + $0x130] sm:$0xff] %v389
  %454 = vst [vmem:[%s4 + $0x138] sm:$0xff] %v390
  %455 = vst [vmem:[%s4 + $0x140] sm:$0xff] %v391
  %456 = vst [vmem:[%s4 + $0x148] sm:$0xff] %v392
  %457 = vst [vmem:[%s4 + $0x150] sm:$0xff] %v393
  %458 = vst [vmem:[%s4 + $0x158] sm:$0xff] %v394
  %459 = vst [vmem:[%s4 + $0x160] sm:$0xff] %v395
  %460 = vst [vmem:[%s4 + $0x168] sm:$0xff] %v396
  %461 = vst [vmem:[%s4 + $0x170] sm:$0xff] %v397
  %462 = vst [vmem:[%s4 + $0x178] sm:$0xff] %v398
  %463 = vst [vmem:[%s4 + $0x180] sm:$0xff] %v399
  %464 = vst [vmem:[%s4 + $0x188] sm:$0xff] %v400
  %465 = vst [vmem:[%s4 + $0x190] sm:$0xff] %v401
  %466 = vst [vmem:[%s4 + $0x198] sm:$0xff] %v402
  %467 = vst [vmem:[%s4 + $0x1a0] sm:$0xff] %v403
  %468 = vst [vmem:[%s4 + $0x1a8] sm:$0xff] %v404
  %469 = vst [vmem:[%s4 + $0x1b0] sm:$0xff] %v405
  %470 = vst [vmem:[%s4 + $0x1b8] sm:$0xff] %v406
  %471 = vst [vmem:[%s4 + $0x1c0] sm:$0xff] %v407
  %472 = vst [vmem:[%s4 + $0x1c8] sm:$0xff] %v408
  %473 = vst [vmem:[%s4 + $0x1d0] sm:$0xff] %v409
  %474 = vst [vmem:[%s4 + $0x1d8] sm:$0xff] %v410
  %475 = vst [vmem:[%s4 + $0x1e0] sm:$0xff] %v411
  %476 = vst [vmem:[%s4 + $0x1e8] sm:$0xff] %v412
  %477 = vst [vmem:[%s4 + $0x1f0] sm:$0xff] %v413
  %478 = vst [vmem:[%s4 + $0x1f8] sm:$0xff] %v414
  // Predicated region
  $region18: #{down_conv_forward.9} parent=0 // pred_check
    _
  $region19: #{down_conv_forward.9} parent=0 // pred_check_branch
    %480 = sbr.rel (0) target = $region21
  $region20: #{down_conv_forward.9} parent=0 // pred_region
    _
  $region21: #{down_conv_forward.9} parent=0 // pred_fallthru
    _
  // Predicated region
  $region22: #{down_conv_forward.9} parent=0 // pred_check
    _
  $region23: #{down_conv_forward.9} parent=0 // pred_check_branch
    %482 = sbr.rel (0) target = $region25
  $region24: #{down_conv_forward.9} parent=0 // pred_region
    _
  $region25: #{down_conv_forward.9} parent=0 // pred_fallthru
    _

// kernel: down_conv_forward.6
$region0: #{down_conv_forward.6}
  #allocation0 [shape = 'u32[]', space=smem, size = 0x4, offset = 0x4, fixed_abs, tag = 'smem constant byte address 0x4 - core index']
  #allocation1 [shape = 'u32[144,128]{1,0:T(1,128)}', space=vmem, size = 0x12000, scoped, tag = 'internal scratch']
  %s0 = inlined_call_operand.vmem [shape: f32[2,18,18,4], index: 0, kind: input, shape index: {}]
  %s1 = inlined_call_operand.vmem [shape: f32[9,4,128], index: 1, kind: input, shape index: {}]
  %s2 = inlined_call_operand.vmem [shape: f32[2,256,128], index: 2, kind: output, shape index: {0}]
  %s3 = inlined_call_operand.vmem [shape: f32[1,128], index: 3, kind: output, shape index: {1}]
  %s4 = inlined_call_operand.vmem [shape: f32[1,128], index: 4, kind: output, shape index: {2}]
  %5 = xla_tuple %s2, %s3, %s4
  %s6 = sld [smem:[#allocation0]]
  $region61: #{down_conv_forward.6} parent=0
    _
  %s8 = ssub.s32 1, %s6
  %s9 = scalar_select 0, %s8, %s6
  loop: start=0, step=1, limit=4
  $region2: #{down_conv_forward.6} parent=0 // loop_pre_header
    _
  $region3: #{down_conv_forward.6} parent=0 // loop_header
    %s11 = sphi 0, %s15
    %p12 = scmp.ge.s32.totalorder %s11, 4
    %s21 = sphi 0, %s23
    %s24 = sphi 0, %s21
    %s25 = sphi 0, %s24
    %s41 = sphi 0, %s25
    %s45 = sphi 0, %s45
    %s47 = sphi 0, %s45
    %s48 = sphi 0, %s47
    %s62 = sphi 0, %s48
    %s68 = sphi 0, %s70
    %s71 = sphi 0, %s68
    %s72 = sphi 0, %s71
    %s88 = sphi 0, %s72
    %s92 = sphi 0, %s92
    %s94 = sphi 0, %s92
    %s95 = sphi 0, %s94
    %s109 = sphi 0, %s95
    %s113 = sphi 0, %s113
    %s115 = sphi 0, %s113
    %s116 = sphi 0, %s115
    %s130 = sphi 0, %s116
  $region4: #{down_conv_forward.6} parent=0 // loop_header_branch
    %14 = sbr.rel (%p12) target = $region8
  $region5: #{down_conv_forward.6} parent=0 // loop_body
    %s16 = ssub.s32 %s11, 1
    %s17 = ssub.s32 %s11, 2
    %s18 = sadd.s32 %s11, 1
    %s19 = ssub.s32 %s11, %s18
    %p20 = scmp.eq.s32.totalorder %s19, 0
    %s22 = sadd.s32 %s21, 1
    %s23 = scalar_select %p20, %s21, %s22
    %p26 = pneg %p20
    %p27 = scmp.eq.s32.totalorder %s11, 1
    %p28 = por %p26, %p27
    %p29 = scmp.ne.s32.totalorder %s21, %s24
    %p30 = scmp.eq.s32.totalorder %s11, 0
    %p31 = por %p29, %p30
    %p32 = scmp.ne.s32.totalorder %s21, %s24
    %p33 = scmp.eq.s32.totalorder %s16, 1
    %p34 = por %p32, %p33
    %p35 = scmp.ne.s32.totalorder %s24, %s25
    %p36 = scmp.eq.s32.totalorder %s16, 0
    %p37 = por %p35, %p36
    %p38 = scmp.ne.s32.totalorder %s24, %s25
    %p39 = scmp.eq.s32.totalorder %s17, 1
    %p40 = por %p38, %p39
    %p42 = scmp.ne.s32.totalorder %s25, %s41
    %p43 = scmp.eq.s32.totalorder %s17, 0
    %p44 = por %p42, %p43
    %s46 = sadd.s32 %s45, 1
    %p49 = scmp.eq.s32.totalorder %s11, 1
    %p50 = scmp.ne.s32.totalorder %s45, %s47
    %p51 = scmp.eq.s32.totalorder %s11, 0
    %p52 = por %p50, %p51
    %p53 = scmp.ne.s32.totalorder %s45, %s47
    %p54 = scmp.eq.s32.totalorder %s16, 1
    %p55 = por %p53, %p54
    %p56 = scmp.ne.s32.totalorder %s47, %s48
    %p57 = scmp.eq.s32.totalorder %s16, 0
    %p58 = por %p56, %p57
    %p59 = scmp.ne.s32.totalorder %s47, %s48
    %p60 = scmp.eq.s32.totalorder %s17, 1
    %p61 = por %p59, %p60
    %p63 = scmp.ne.s32.totalorder %s48, %s62
    %p64 = scmp.eq.s32.totalorder %s17, 0
    %p65 = por %p63, %p64
    %s66 = ssub.s32 %s11, %s18
    %p67 = scmp.eq.s32.totalorder %s66, 0
    %s69 = sadd.s32 %s68, 1
    %s70 = scalar_select %p67, %s68, %s69
    %p73 = pneg %p67
    %p74 = scmp.eq.s32.totalorder %s11, 1
    %p75 = por %p73, %p74
    %p76 = scmp.ne.s32.totalorder %s68, %s71
    %p77 = scmp.eq.s32.totalorder %s11, 0
    %p78 = por %p76, %p77
    %p79 = scmp.ne.s32.totalorder %s68, %s71
    %p80 = scmp.eq.s32.totalorder %s16, 1
    %p81 = por %p79, %p80
    %p82 = scmp.ne.s32.totalorder %s71, %s72
    %p83 = scmp.eq.s32.totalorder %s16, 0
    %p84 = por %p82, %p83
    %p85 = scmp.ne.s32.totalorder %s71, %s72
    %p86 = scmp.eq.s32.totalorder %s17, 1
    %p87 = por %p85, %p86
    %p89 = scmp.ne.s32.totalorder %s72, %s88
    %p90 = scmp.eq.s32.totalorder %s17, 0
    %p91 = por %p89, %p90
    %s93 = sadd.s32 %s92, 1
    %p96 = scmp.eq.s32.totalorder %s11, 1
    %p97 = scmp.ne.s32.totalorder %s92, %s94
    %p98 = scmp.eq.s32.totalorder %s11, 0
    %p99 = por %p97, %p98
    %p100 = scmp.ne.s32.totalorder %s92, %s94
    %p101 = scmp.eq.s32.totalorder %s16, 1
    %p102 = por %p100, %p101
    %p103 = scmp.ne.s32.totalorder %s94, %s95
    %p104 = scmp.eq.s32.totalorder %s16, 0
    %p105 = por %p103, %p104
    %p106 = scmp.ne.s32.totalorder %s94, %s95
    %p107 = scmp.eq.s32.totalorder %s17, 1
    %p108 = por %p106, %p107
    %p110 = scmp.ne.s32.totalorder %s95, %s109
    %p111 = scmp.eq.s32.totalorder %s17, 0
    %p112 = por %p110, %p111
    %s114 = sadd.s32 %s113, 1
    %p117 = scmp.eq.s32.totalorder %s11, 1
    %p118 = scmp.ne.s32.totalorder %s113, %s115
    %p119 = scmp.eq.s32.totalorder %s11, 0
    %p120 = por %p118, %p119
    %p121 = scmp.ne.s32.totalorder %s113, %s115
    %p122 = scmp.eq.s32.totalorder %s16, 1
    %p123 = por %p121, %p122
    %p124 = scmp.ne.s32.totalorder %s115, %s116
    %p125 = scmp.eq.s32.totalorder %s16, 0
    %p126 = por %p124, %p125
    %p127 = scmp.ne.s32.totalorder %s115, %s116
    %p128 = scmp.eq.s32.totalorder %s17, 1
    %p129 = por %p127, %p128
    %p131 = scmp.ne.s32.totalorder %s116, %s130
    %p132 = scmp.eq.s32.totalorder %s17, 0
    %p133 = por %p131, %p132
    %p134 = scmp.le.s32.totalorder 1, %s11
    %p135 = scmp.lt.s32.totalorder %s11, 3
    %p136 = pnand %p134, %p135
    %p137 = pneg %p136
    // Predicated region
    $region9: #{down_conv_forward.6} parent=5 // pred_check
      _
    $region10: #{down_conv_forward.6} parent=5 // pred_check_branch
      %139 = sbr.rel (%p136) target = $region12
    $region11: #{down_conv_forward.6} parent=5 // pred_region
      %s140 = ssub.s32 %s11, 1
      // Predicated region
      $region13: #{down_conv_forward.6} parent=11 // pred_check
        %p141 = pneg %p58
      $region14: #{down_conv_forward.6} parent=11 // pred_check_branch
        %143 = sbr.rel (%p141) target = $region16
      $region15: #{down_conv_forward.6} parent=11 // pred_region
        _
      $region16: #{down_conv_forward.6} parent=11 // pred_fallthru
        _
    $region12: #{down_conv_forward.6} parent=5 // pred_fallthru
      _
    %p144 = scmp.lt.s32.totalorder %s11, 2
    // Predicated region
    $region17: #{down_conv_forward.6} parent=5 // pred_check
      %p145 = pneg %p144
    $region18: #{down_conv_forward.6} parent=5 // pred_check_branch
      %147 = sbr.rel (%p145) target = $region20
    $region19: #{down_conv_forward.6} parent=5 // pred_region
      // Predicated region
      $region21: #{down_conv_forward.6} parent=19 // pred_check
        %p148 = pneg %p31
      $region22: #{down_conv_forward.6} parent=19 // pred_check_branch
        %150 = sbr.rel (%p148) target = $region24
      $region23: #{down_conv_forward.6} parent=19 // pred_region
        %p151 = scmp.lt.s32.totalorder %s11, 1
        %s152 = scalar_select %p151, %s11, 1
        %s153 = smul.addr %s152, 54
        %s154 = smul.addr %s153, 8
        %s155 = scalar_lea.vmem %s0, %s154
      $region24: #{down_conv_forward.6} parent=19 // pred_fallthru
        _
    $region20: #{down_conv_forward.6} parent=5 // pred_fallthru
      _
    %p156 = scmp.le.s32.totalorder 1, %s11
    %p157 = scmp.lt.s32.totalorder %s11, 3
    %p158 = pnand %p156, %p157
    %p159 = pneg %p158
    // Predicated region
    $region25: #{down_conv_forward.6} parent=5 // pred_check
      _
    $region26: #{down_conv_forward.6} parent=5 // pred_check_branch
      %161 = sbr.rel (%p158) target = $region28
    $region27: #{down_conv_forward.6} parent=5 // pred_region
      %s162 = ssub.s32 %s11, 1
      %p163 = scmp.lt.s32.totalorder %s16, 1
      %s164 = scalar_select %p163, %s16, 1
      %s165 = smul.addr %s164, 54
      %s166 = smul.addr %s165, 8
      %s167 = scalar_lea.vmem %s0, %s166
      %p168 = pneg %p37
      %p169 = pneg %p34
      %p170 = pneg %p58
      %p171 = pneg %p55
      %p172 = pneg %p84
      %p173 = pneg %p81
      %p174 = scmp.lt.s32.totalorder %s16, 1
      %s175 = scalar_select %p174, %s16, 1
      %s176 = smul.addr %s175, 32
      %s177 = smul.addr %s176, 8
      %s178 = scalar_lea.vmem %s2, %s177
      %p179 = pneg %p105
      %p180 = pneg %p102
      %p181 = pneg %p126
      %p182 = pneg %p123
      %p183 = scmp.lt.s32.totalorder %s16, 1
      %s184 = scalar_select %p183, %s16, 1
      %s185 = smul.addr %s184, 54
      %s186 = smul.addr %s185, 8
      %s187 = scalar_lea.vmem %s0, %s186
      %p188 = scmp.lt.s32.totalorder %s16, 1
      %s189 = scalar_select %p188, %s16, 1
      %s190 = smul.addr %s189, 32
      %s191 = smul.addr %s190, 8
      %s192 = scalar_lea.vmem %s2, %s191
      %p193 = scmp.eq.s32.totalorder %s16, 0
      // Predicated region
      $region29: #{down_conv_forward.6} parent=27 // pred_check
        %p194 = pneg %p193
      $region30: #{down_conv_forward.6} parent=27 // pred_check_branch
        %196 = sbr.rel (%p194) target = $region32
      $region31: #{down_conv_forward.6} parent=27 // pred_region
        %197 = vst [vmem:[%s3] sm:$0x1] 0.0
        %198 = vst [vmem:[%s4] sm:$0x1] 0.0
      $region32: #{down_conv_forward.6} parent=27 // pred_fallthru
        _
      %v199 = vld [vmem:[%s187] sm:$0xff]
      %v200 = vld [vmem:[%s187 + $0x8] sm:$0xff]
      %v201 = vld [vmem:[%s187 + $0x10] sm:$0x3]
      %v202 = vld [vmem:[%s187 + $0x18] sm:$0xff]
      %v203 = vld [vmem:[%s187 + $0x20] sm:$0xff]
      %v204 = vld [vmem:[%s187 + $0x28] sm:$0x3]
      %v205 = vld [vmem:[%s187 + $0x30] sm:$0xff]
      %v206 = vld [vmem:[%s187 + $0x38] sm:$0xff]
      %v207 = vld [vmem:[%s187 + $0x40] sm:$0x3]
      %v208 = vld [vmem:[%s187 + $0x48] sm:$0xff]
      %v209 = vld [vmem:[%s187 + $0x50] sm:$0xff]
      %v210 = vld [vmem:[%s187 + $0x58] sm:$0x3]
      %v211 = vld [vmem:[%s187 + $0x60] sm:$0xff]
      %v212 = vld [vmem:[%s187 + $0x68] sm:$0xff]
      %v213 = vld [vmem:[%s187 + $0x70] sm:$0x3]
      %v214 = vld [vmem:[%s187 + $0x78] sm:$0xff]
      %v215 = vld [vmem:[%s187 + $0x80] sm:$0xff]
      %v216 = vld [vmem:[%s187 + $0x88] sm:$0x3]
      %v217 = vld [vmem:[%s187 + $0x90] sm:$0xff]
      %v218 = vld [vmem:[%s187 + $0x98] sm:$0xff]
      %v219 = vld [vmem:[%s187 + $0xa0] sm:$0x3]
      %v220 = vld [vmem:[%s187 + $0xa8] sm:$0xff]
      %v221 = vld [vmem:[%s187 + $0xb0] sm:$0xff]
      %v222 = vld [vmem:[%s187 + $0xb8] sm:$0x3]
      %v223 = vld [vmem:[%s187 + $0xc0] sm:$0xff]
      %v224 = vld [vmem:[%s187 + $0xc8] sm:$0xff]
      %v225 = vld [vmem:[%s187 + $0xd0] sm:$0x3]
      %v226 = vld [vmem:[%s187 + $0xd8] sm:$0xff]
      %v227 = vld [vmem:[%s187 + $0xe0] sm:$0xff]
      %v228 = vld [vmem:[%s187 + $0xe8] sm:$0x3]
      %v229 = vld [vmem:[%s187 + $0xf0] sm:$0xff]
      %v230 = vld [vmem:[%s187 + $0xf8] sm:$0xff]
      %v231 = vld [vmem:[%s187 + $0x100] sm:$0x3]
      %v232 = vld [vmem:[%s187 + $0x108] sm:$0xff]
      %v233 = vld [vmem:[%s187 + $0x110] sm:$0xff]
      %v234 = vld [vmem:[%s187 + $0x118] sm:$0x3]
      %v235 = vld [vmem:[%s187 + $0x120] sm:$0xff]
      %v236 = vld [vmem:[%s187 + $0x128] sm:$0xff]
      %v237 = vld [vmem:[%s187 + $0x130] sm:$0x3]
      %v238 = vld [vmem:[%s187 + $0x138] sm:$0xff]
      %v239 = vld [vmem:[%s187 + $0x140] sm:$0xff]
      %v240 = vld [vmem:[%s187 + $0x148] sm:$0x3]
      %v241 = vld [vmem:[%s187 + $0x150] sm:$0xff]
      %v242 = vld [vmem:[%s187 + $0x158] sm:$0xff]
      %v243 = vld [vmem:[%s187 + $0x160] sm:$0x3]
      %v244 = vld [vmem:[%s187 + $0x168] sm:$0xff]
      %v245 = vld [vmem:[%s187 + $0x170] sm:$0xff]
      %v246 = vld [vmem:[%s187 + $0x178] sm:$0x3]
      %v247 = vld [vmem:[%s187 + $0x180] sm:$0xff]
      %v248 = vld [vmem:[%s187 + $0x188] sm:$0xff]
      %v249 = vld [vmem:[%s187 + $0x190] sm:$0x3]
      %v250 = vld [vmem:[%s187 + $0x198] sm:$0xff]
      %v251 = vld [vmem:[%s187 + $0x1a0] sm:$0xff]
      %v252 = vld [vmem:[%s187 + $0x1a8] sm:$0x3]
      %v253 = vld [vmem:[%s1] sm:$0xf]
      %vm302 = vcmask 1046528
      %v303 = vrot.slane %v199, 1
      %v304 = vrot.slane %v200, 1
      %v305 = vsel %vm302, %v303, %v304
      %v306 = vrot.slane %v201, 1
      %v307 = vsel %vm302, %v304, %v306
      %v308 = vrot.slane %v202, 1
      %v309 = vrot.slane %v203, 1
      %v310 = vsel %vm302, %v308, %v309
      %v311 = vrot.slane %v204, 1
      %v312 = vsel %vm302, %v309, %v311
      %v313 = vrot.slane %v205, 1
      %v314 = vrot.slane %v206, 1
      %v315 = vsel %vm302, %v313, %v314
      %v316 = vrot.slane %v207, 1
      %v317 = vsel %vm302, %v314, %v316
      %v318 = vrot.slane %v208, 1
      %v319 = vrot.slane %v209, 1
      %v320 = vsel %vm302, %v318, %v319
      %v321 = vrot.slane %v210, 1
      %v322 = vsel %vm302, %v319, %v321
      %v323 = vrot.slane %v211, 1
      %v324 = vrot.slane %v212, 1
      %v325 = vsel %vm302, %v323, %v324
      %v326 = vrot.slane %v213, 1
      %v327 = vsel %vm302, %v324, %v326
      %v328 = vrot.slane %v214, 1
      %v329 = vrot.slane %v215, 1
      %v330 = vsel %vm302, %v328, %v329
      %v331 = vrot.slane %v216, 1
      %v332 = vsel %vm302, %v329, %v331
      %v333 = vrot.slane %v217, 1
      %v334 = vrot.slane %v218, 1
      %v335 = vsel %vm302, %v333, %v334
      %v336 = vrot.slane %v219, 1
      %v337 = vsel %vm302, %v334, %v336
      %v338 = vrot.slane %v220, 1
      %v339 = vrot.slane %v221, 1
      %v340 = vsel %vm302, %v338, %v339
      %v341 = vrot.slane %v222, 1
      %v342 = vsel %vm302, %v339, %v341
      %v343 = vrot.slane %v223, 1
      %v344 = vrot.slane %v224, 1
      %v345 = vsel %vm302, %v343, %v344
      %v346 = vrot.slane %v225, 1
      %v347 = vsel %vm302, %v344, %v346
      %v348 = vrot.slane %v226, 1
      %v349 = vrot.slane %v227, 1
      %v350 = vsel %vm302, %v348, %v349
      %v351 = vrot.slane %v228, 1
      %v352 = vsel %vm302, %v349, %v351
      %v353 = vrot.slane %v229, 1
      %v354 = vrot.slane %v230, 1
      %v355 = vsel %vm302, %v353, %v354
      %v356 = vrot.slane %v231, 1
      %v357 = vsel %vm302, %v354, %v356
      %v358 = vrot.slane %v232, 1
      %v359 = vrot.slane %v233, 1
      %v360 = vsel %vm302, %v358, %v359
      %v361 = vrot.slane %v234, 1
      %v362 = vsel %vm302, %v359, %v361
      %v363 = vrot.slane %v235, 1
      %v364 = vrot.slane %v236, 1
      %v365 = vsel %vm302, %v363, %v364
      %v366 = vrot.slane %v237, 1
      %v367 = vsel %vm302, %v364, %v366
      %v368 = vrot.slane %v238, 1
      %v369 = vrot.slane %v239, 1
      %v370 = vsel %vm302, %v368, %v369
      %v371 = vrot.slane %v240, 1
      %v372 = vsel %vm302, %v369, %v371
      %v373 = vrot.slane %v241, 1
      %v374 = vrot.slane %v242, 1
      %v375 = vsel %vm302, %v373, %v374
      %v376 = vrot.slane %v243, 1
      %v377 = vsel %vm302, %v374, %v376
      %v378 = vrot.slane %v244, 1
      %v379 = vrot.slane %v245, 1
      %v380 = vsel %vm302, %v378, %v379
      %v381 = vrot.slane %v246, 1
      %v382 = vsel %vm302, %v379, %v381
      %s383 = scalar_lea.vmem %s1, 4
      %v384 = vld [vmem:[%s383] sm:$0xf]
      %vm385 = vcmask 31744
      %v386 = vsel %vm385, %v305, 0
      %v388 = vsel %vm385, %v307, 0
      %v390 = vsel %vm385, %v310, 0
      %v392 = vsel %vm385, %v312, 0
      %v394 = vsel %vm385, %v315, 0
      %v396 = vsel %vm385, %v317, 0
      %v398 = vsel %vm385, %v320, 0
      %v400 = vsel %vm385, %v322, 0
      %v402 = vsel %vm385, %v325, 0
      %v404 = vsel %vm385, %v327, 0
      %v406 = vsel %vm385, %v330, 0
      %v408 = vsel %vm385, %v332, 0
      %v410 = vsel %vm385, %v335, 0
      %v412 = vsel %vm385, %v337, 0
      %v414 = vsel %vm385, %v340, 0
      %v416 = vsel %vm385, %v342, 0
      %v418 = vsel %vm385, %v345, 0
      %v420 = vsel %vm385, %v347, 0
      %v422 = vsel %vm385, %v350, 0
      %v424 = vsel %vm385, %v352, 0
      %v426 = vsel %vm385, %v355, 0
      %v428 = vsel %vm385, %v357, 0
      %v430 = vsel %vm385, %v360, 0
      %v432 = vsel %vm385, %v362, 0
      %v434 = vsel %vm385, %v365, 0
      %v436 = vsel %vm385, %v367, 0
      %v438 = vsel %vm385, %v370, 0
      %v440 = vsel %vm385, %v372, 0
      %v442 = vsel %vm385, %v375, 0
      %v444 = vsel %vm385, %v377, 0
      %v446 = vsel %vm385, %v380, 0
      %v448 = vsel %vm385, %v382, 0
      %vm450 = vcmask 1043456
      %v452 = vsel %vm450, %v384, 0
      %454 = vmatprep.subr.mxu0 0.0
      %455 = vmatpush1.msra.mxu0 %v452
      %456 = vmatprep.subr.mxu0 0.0
      %457 = vmatpush1.msra.mxu0 0.0
      %458 = vmatprep.subr.mxu0 0.0
      %459 = vmatpush1.msra.mxu0 0.0
      %460 = vmatprep.subr.mxu0 0.0
      %461 = vmatpush1.msra.mxu0 0.0
      %462 = vmatprep.subr.mxu0 0.0
      %463 = vmatpush1.msra.mxu0 0.0
      %464 = vmatprep.subr.mxu0 0.0
      %465 = vmatpush1.msra.mxu0 0.0
      %466 = vmatprep.subr.mxu0 0.0
      %467 = vmatpush1.msra.mxu0 0.0
      %468 = vmatprep.subr.mxu0 0.0
      %469 = vmatpush1.msra.mxu0 0.0
      %470 = vmatprep.subr.mxu0 0.0
      %471 = vmatpush1.msra.mxu0 0.0
      %472 = vmatprep.subr.mxu0 0.0
      %473 = vmatpush1.msra.mxu0 0.0
      %474 = vmatprep.subr.mxu0 0.0
      %475 = vmatpush1.msra.mxu0 0.0
      %476 = vmatprep.subr.mxu0 0.0
      %477 = vmatpush1.msra.mxu0 0.0
      %478 = vmatprep.subr.mxu0 0.0
      %479 = vmatpush1.msra.mxu0 0.0
      %480 = vmatprep.subr.mxu0 0.0
      %481 = vmatpush1.msra.mxu0 0.0
      %482 = vmatprep.subr.mxu0 0.0
      %483 = vmatpush1.msra.mxu0 0.0
      %484 = vmatprep.subr.mxu0 0.0
      %485 = vmatpush1.msra.mxu0 0.0
      %486 = vmatprep.subr.mxu0 0.0
      %487 = vmatpush1.msra.mxu0 0.0
      %488 = vmatprep.subr.mxu0 0.0
      %489 = vmatpush1.msra.mxu0 0.0
      %490 = vmatprep.subr.mxu0 0.0
      %491 = vmatpush1.msra.mxu0 0.0
      %492 = vmatprep.subr.mxu0 0.0
      %493 = vmatpush1.msra.mxu0 0.0
      %494 = vmatprep.subr.mxu0 0.0
      %495 = vmatpush1.msra.mxu0 0.0
      %496 = vmatprep.subr.mxu0 0.0
      %497 = vmatpush1.msra.mxu0 0.0
      %498 = vmatprep.subr.mxu0 0.0
      %499 = vmatpush1.msra.mxu0 0.0
      %500 = vmatprep.subr.mxu0 0.0
      %501 = vmatpush1.msra.mxu0 0.0
      %502 = vmatprep.subr.mxu0 0.0
      %503 = vmatpush1.msra.mxu0 0.0
      %504 = vmatprep.subr.mxu0 0.0
      %505 = vmatpush1.msra.mxu0 0.0
      %506 = vmatprep.subr.mxu0 0.0
      %507 = vmatpush1.msra.mxu0 0.0
      %508 = vmatprep.subr.mxu0 0.0
      %509 = vmatpush1.msra.mxu0 0.0
      %510 = vmatprep.subr.mxu0 0.0
      %511 = vmatpush1.msra.mxu0 0.0
      %512 = vmatprep.subr.mxu0 0.0
      %513 = vmatpush1.msra.mxu0 0.0
      %514 = vmatprep.subr.mxu0 0.0
      %515 = vmatpush1.msra.mxu0 0.0
      %516 = vmatprep.subr.mxu0 0.0
      %517 = vmatpush1.msra.mxu0 0.0
      %518 = vmatprep.mubr.f32.mxu0 0.0
      %519 = vmatmul.mubr.f32.gmra.mrb[0].mxu0 %v386
      %v520 = vpop.f32.mrb[0].mxu0
      %v521 = vadd.f32 0.0, %v520
      %v522 = vpop.f32.mrb[0].mxu0
      %523 = vmatprep.mubr.f32.mxu0 0.0
      %524 = vmatmul.mubr.f32.gmra.mrb[0].mxu0 %v388
      %v525 = vpop.f32.mrb[0].mxu0
      %v526 = vadd.f32 0.0, %v525
      %v527 = vpop.f32.mrb[0].mxu0
      %528 = vmatprep.mubr.f32.mxu0 0.0
      %529 = vmatmul.mubr.f32.gmra.mrb[0].mxu0 %v390
      %v530 = vpop.f32.mrb[0].mxu0
      %v531 = vadd.f32 0.0, %v530
      %v532 = vpop.f32.mrb[0].mxu0
      %533 = vmatprep.mubr.f32.mxu0 0.0
      %534 = vmatmul.mubr.f32.gmra.mrb[0].mxu0 %v392
      %v535 = vpop.f32.mrb[0].mxu0
      %v536 = vadd.f32 0.0, %v535
      %v537 = vpop.f32.mrb[0].mxu0
      %538 = vmatprep.mubr.f32.mxu0 0.0
      %539 = vmatmul.mubr.f32.gmra.mrb[0].mxu0 %v394
      %v540 = vpop.f32.mrb[0].mxu0
      %v541 = vadd.f32 0.0, %v540
      %v542 = vpop.f32.mrb[0].mxu0
      %543 = vmatprep.mubr.f32.mxu0 0.0
      %544 = vmatmul.mubr.f32.gmra.mrb[0].mxu0 %v396
      %v545 = vpop.f32.mrb[0].mxu0
      %v546 = vadd.f32 0.0, %v545
      %v547 = vpop.f32.mrb[0].mxu0
      %548 = vmatprep.mubr.f32.mxu0 0.0
      %549 = vmatmul.mubr.f32.gmra.mrb[0].mxu0 %v398
      %v550 = vpop.f32.mrb[0].mxu0
      %v551 = vadd.f32 0.0, %v550
      %v552 = vpop.f32.mrb[0].mxu0
      %553 = vmatprep.mubr.f32.mxu0 0.0
      %554 = vmatmul.mubr.f32.gmra.mrb[0].mxu0 %v400
      %v555 = vpop.f32.mrb[0].mxu0
      %v556 = vadd.f32 0.0, %v555
      %v557 = vpop.f32.mrb[0].mxu0
      %558 = vmatprep.mubr.f32.mxu0 0.0
      %559 = vmatmul.mubr.f32.gmra.mrb[0].mxu0 %v402
      %v560 = vpop.f32.mrb[0].mxu0
      %v561 = vadd.f32 0.0, %v560
      %v562 = vpop.f32.mrb[0].mxu0
      %563 = vmatprep.mubr.f32.mxu0 0.0
      %564 = vmatmul.mubr.f32.gmra.mrb[0].mxu0 %v404
      %v565 = vpop.f32.mrb[0].mxu0
      %v566 = vadd.f32 0.0, %v565
      %v567 = vpop.f32.mrb[0].mxu0
      %568 = vmatprep.mubr.f32.mxu0 0.0
      %569 = vmatmul.mubr.f32.gmra.mrb[0].mxu0 %v406
      %v570 = vpop.f32.mrb[0].mxu0
      %v571 = vadd.f32 0.0, %v570
      %v572 = vpop.f32.mrb[0].mxu0
      %573 = vmatprep.mubr.f32.mxu0 0.0
      %574 = vmatmul.mubr.f32.gmra.mrb[0].mxu0 %v408
      %v575 = vpop.f32.mrb[0].mxu0
      %v576 = vadd.f32 0.0, %v575
      %v577 = vpop.f32.mrb[0].mxu0
      %578 = vmatprep.mubr.f32.mxu0 0.0
      %579 = vmatmul.mubr.f32.gmra.mrb[0].mxu0 %v410
      %v580 = vpop.f32.mrb[0].mxu0
      %v581 = vadd.f32 0.0, %v580
      %v582 = vpop.f32.mrb[0].mxu0
      %583 = vmatprep.mubr.f32.mxu0 0.0
      %584 = vmatmul.mubr.f32.gmra.mrb[0].mxu0 %v412
      %v585 = vpop.f32.mrb[0].mxu0
      %v586 = vadd.f32 0.0, %v585
      %v587 = vpop.f32.mrb[0].mxu0
      %588 = vmatprep.mubr.f32.mxu0 0.0
      %589 = vmatmul.mubr.f32.gmra.mrb[0].mxu0 %v414
      %v590 = vpop.f32.mrb[0].mxu0
      %v591 = vadd.f32 0.0, %v590
      %v592 = vpop.f32.mrb[0].mxu0
      %593 = vmatprep.mubr.f32.mxu0 0.0
      %594 = vmatmul.mubr.f32.gmra.mrb[0].mxu0 %v416
      %v595 = vpop.f32.mrb[0].mxu0
      %v596 = vadd.f32 0.0, %v595
      %v597 = vpop.f32.mrb[0].mxu0
      %598 = vmatprep.mubr.f32.mxu0 0.0
      %599 = vmatmul.mubr.f32.gmra.mrb[0].mxu0 %v418
      %v600 = vpop.f32.mrb[0].mxu0
      %v601 = vadd.f32 0.0, %v600
      %v602 = vpop.f32.mrb[0].mxu0
      %603 = vmatprep.mubr.f32.mxu0 0.0
      %604 = vmatmul.mubr.f32.gmra.mrb[0].mxu0 %v420
      %v605 = vpop.f32.mrb[0].mxu0
      %v606 = vadd.f32 0.0, %v605
      %v607 = vpop.f32.mrb[0].mxu0
      %608 = vmatprep.mubr.f32.mxu0 0.0
      %609 = vmatmul.mubr.f32.gmra.mrb[0].mxu0 %v422
      %v610 = vpop.f32.mrb[0].mxu0
      %v611 = vadd.f32 0.0, %v610
      %v612 = vpop.f32.mrb[0].mxu0
      %613 = vmatprep.mubr.f32.mxu0 0.0
      %614 = vmatmul.mubr.f32.gmra.mrb[0].mxu0 %v424
      %v615 = vpop.f32.mrb[0].mxu0
      %v616 = vadd.f32 0.0, %v615
      %v617 = vpop.f32.mrb[0].mxu0
      %618 = vmatprep.mubr.f32.mxu0 0.0
      %619 = vmatmul.mubr.f32.gmra.mrb[0].mxu0 %v426
      %v620 = vpop.f32.mrb[0].mxu0
      %v621 = vadd.f32 0.0, %v620
      %v622 = vpop.f32.mrb[0].mxu0
      %623 = vmatprep.mubr.f32.mxu0 0.0
      %624 = vmatmul.mubr.f32.gmra.mrb[0].mxu0 %v428
      %v625 = vpop.f32.mrb[0].mxu0
      %v626 = vadd.f32 0.0, %v625
      %v627 = vpop.f32.mrb[0].mxu0
      %628 = vmatprep.mubr.f32.mxu0 0.0
      %629 = vmatmul.mubr.f32.gmra.mrb[0].mxu0 %v430
      %v630 = vpop.f32.mrb[0].mxu0
      %v631 = vadd.f32 0.0, %v630
      %v632 = vpop.f32.mrb[0].mxu0
      %633 = vmatprep.mubr.f32.mxu0 0.0
      %634 = vmatmul.mubr.f32.gmra.mrb[0].mxu0 %v432
      %v635 = vpop.f32.mrb[0].mxu0
      %v636 = vadd.f32 0.0, %v635
      %v637 = vpop.f32.mrb[0].mxu0
      %638 = vmatprep.mubr.f32.mxu0 0.0
      %639 = vmatmul.mubr.f32.gmra.mrb[0].mxu0 %v434
      %v640 = vpop.f32.mrb[0].mxu0
      %v641 = vadd.f32 0.0, %v640
      %v642 = vpop.f32.mrb[0].mxu0
      %643 = vmatprep.mubr.f32.mxu0 0.0
      %644 = vmatmul.mubr.f32.gmra.mrb[0].mxu0 %v436
      %v645 = vpop.f32.mrb[0].mxu0
      %v646 = vadd.f32 0.0, %v645
      %v647 = vpop.f32.mrb[0].mxu0
      %648 = vmatprep.mubr.f32.mxu0 0.0
      %649 = vmatmul.mubr.f32.gmra.mrb[0].mxu0 %v438
      %v650 = vpop.f32.mrb[0].mxu0
      %v651 = vadd.f32 0.0, %v650
      %v652 = vpop.f32.mrb[0].mxu0
      %653 = vmatprep.mubr.f32.mxu0 0.0
      %654 = vmatmul.mubr.f32.gmra.mrb[0].mxu0 %v440
      %v655 = vpop.f32.mrb[0].mxu0
      %v656 = vadd.f32 0.0, %v655
      %v657 = vpop.f32.mrb[0].mxu0
      %658 = vmatprep.mubr.f32.mxu0 0.0
      %659 = vmatmul.mubr.f32.gmra.mrb[0].mxu0 %v442
      %v660 = vpop.f32.mrb[0].mxu0
      %v661 = vadd.f32 0.0, %v660
      %v662 = vpop.f32.mrb[0].mxu0
      %663 = vmatprep.mubr.f32.mxu0 0.0
      %664 = vmatmul.mubr.f32.gmra.mrb[0].mxu0 %v444
      %v665 = vpop.f32.mrb[0].mxu0
      %v666 = vadd.f32 0.0, %v665
      %v667 = vpop.f32.mrb[0].mxu0
      %668 = vmatprep.mubr.f32.mxu0 0.0
      %669 = vmatmul.mubr.f32.gmra.mrb[0].mxu0 %v446
      %v670 = vpop.f32.mrb[0].mxu0
      %v671 = vadd.f32 0.0, %v670
      %v672 = vpop.f32.mrb[0].mxu0
      %673 = vmatprep.mubr.f32.mxu0 0.0
      %674 = vmatmul.mubr.f32.gmra.mrb[0].mxu0 %v448
      %v675 = vpop.f32.mrb[0].mxu0
      %v676 = vadd.f32 0.0, %v675
      %v677 = vpop.f32.mrb[0].mxu0
      %678 = vdwg.mxu0
      %v679 = vsel %vm385, %v199, 0
      %v681 = vsel %vm385, %v200, 0
      %v683 = vsel %vm385, %v202, 0
      %v685 = vsel %vm385, %v203, 0
      %v687 = vsel %vm385, %v205, 0
      %v689 = vsel %vm385, %v206, 0
      %v691 = vsel %vm385, %v208, 0
      %v693 = vsel %vm385, %v209, 0
      %v695 = vsel %vm385, %v211, 0
      %v697 = vsel %vm385, %v212, 0
      %v699 = vsel %vm385, %v214, 0
      %v701 = vsel %vm385, %v215, 0
      %v703 = vsel %vm385, %v217, 0
      %v705 = vsel %vm385, %v218, 0
      %v707 = vsel %vm385, %v220, 0
      %v709 = vsel %vm385, %v221, 0
      %v711 = vsel %vm385, %v223, 0
      %v713 = vsel %vm385, %v224, 0
      %v715 = vsel %vm385, %v226, 0
      %v717 = vsel %vm385, %v227, 0
      %v719 = vsel %vm385, %v229, 0
      %v721 = vsel %vm385, %v230, 0
      %v723 = vsel %vm385, %v232, 0
      %v725 = vsel %vm385, %v233, 0
      %v727 = vsel %vm385, %v235, 0
      %v729 = vsel %vm385, %v236, 0
      %v731 = vsel %vm385, %v238, 0
      %v733 = vsel %vm385, %v239, 0
      %v735 = vsel %vm385, %v241, 0
      %v737 = vsel %vm385, %v242, 0
      %v739 = vsel %vm385, %v244, 0
      %v741 = vsel %vm385, %v245, 0
      %v744 = vsel %vm450, %v253, 0
      %746 = vmatprep.subr.mxu0 0.0
      %747 = vmatpush1.msra.mxu0 %v744
      %748 = vmatprep.subr.mxu0 0.0
      %749 = vmatpush1.msra.mxu0 0.0
      %750 = vmatprep.subr.mxu0 0.0
      %751 = vmatpush1.msra.mxu0 0.0
      %752 = vmatprep.subr.mxu0 0.0
      %753 = vmatpush1.msra.mxu0 0.0
      %754 = vmatprep.subr.mxu0 0.0
      %755 = vmatpush1.msra.mxu0 0.0
      %756 = vmatprep.subr.mxu0 0.0
      %757 = vmatpush1.msra.mxu0 0.0
      %758 = vmatprep.subr.mxu0 0.0
      %759 = vmatpush1.msra.mxu0 0.0
      %760 = vmatprep.subr.mxu0 0.0
      %761 = vmatpush1.msra.mxu0 0.0
      %762 = vmatprep.subr.mxu0 0.0
      %763 = vmatpush1.msra.mxu0 0.0
      %764 = vmatprep.subr.mxu0 0.0
      %765 = vmatpush1.msra.mxu0 0.0
      %766 = vmatprep.subr.mxu0 0.0
      %767 = vmatpush1.msra.mxu0 0.0
      %768 = vmatprep.subr.mxu0 0.0
      %769 = vmatpush1.msra.mxu0 0.0
      %770 = vmatprep.subr.mxu0 0.0
      %771 = vmatpush1.msra.mxu0 0.0
      %772 = vmatprep.subr.mxu0 0.0
      %773 = vmatpush1.msra.mxu0 0.0
      %774 = vmatprep.subr.mxu0 0.0
      %775 = vmatpush1.msra.mxu0 0.0
      %776 = vmatprep.subr.mxu0 0.0
      %777 = vmatpush1.msra.mxu0 0.0
      %778 = vmatprep.subr.mxu0 0.0
      %779 = vmatpush1.msra.mxu0 0.0
      %780 = vmatprep.subr.mxu0 0.0
      %781 = vmatpush1.msra.mxu0 0.0
      %782 = vmatprep.subr.mxu0 0.0
      %783 = vmatpush1.msra.mxu0 0.0
      %784 = vmatprep.subr.mxu0 0.0
      %785 = vmatpush1.msra.mxu0 0.0
      %786 = vmatprep.subr.mxu0 0.0
      %787 = vmatpush1.msra.mxu0 0.0
      %788 = vmatprep.subr.mxu0 0.0
      %789 = vmatpush1.msra.mxu0 0.0
      %790 = vmatprep.subr.mxu0 0.0
      %791 = vmatpush1.msra.mxu0 0.0
      %792 = vmatprep.subr.mxu0 0.0
      %793 = vmatpush1.msra.mxu0 0.0
      %794 = vmatprep.subr.mxu0 0.0
      %795 = vmatpush1.msra.mxu0 0.0
      %796 = vmatprep.subr.mxu0 0.0
      %797 = vmatpush1.msra.mxu0 0.0
      %798 = vmatprep.subr.mxu0 0.0
      %799 = vmatpush1.msra.mxu0 0.0
      %800 = vmatprep.subr.mxu0 0.0
      %801 = vmatpush1.msra.mxu0 0.0
      %802 = vmatprep.subr.mxu0 0.0
      %803 = vmatpush1.msra.mxu0 0.0
      %804 = vmatprep.subr.mxu0 0.0
      %805 = vmatpush1.msra.mxu0 0.0
      %806 = vmatprep.subr.mxu0 0.0
      %807 = vmatpush1.msra.mxu0 0.0
      %808 = vmatprep.subr.mxu0 0.0
      %809 = vmatpush1.msra.mxu0 0.0
      %810 = vmatprep.mubr.f32.mxu0 0.0
      %811 = vmatmul.mubr.f32.gmra.mrb[0].mxu0 %v679
      %v812 = vpop.f32.mrb[0].mxu0
      %v813 = vadd.f32 %v521, %v812
      %v814 = vpop.f32.mrb[0].mxu0
      %815 = vmatprep.mubr.f32.mxu0 0.0
      %816 = vmatmul.mubr.f32.gmra.mrb[0].mxu0 %v681
      %v817 = vpop.f32.mrb[0].mxu0
      %v818 = vadd.f32 %v526, %v817
      %v819 = vpop.f32.mrb[0].mxu0
      %820 = vmatprep.mubr.f32.mxu0 0.0
      %821 = vmatmul.mubr.f32.gmra.mrb[0].mxu0 %v683
      %v822 = vpop.f32.mrb[0].mxu0
      %v823 = vadd.f32 %v531, %v822
      %v824 = vpop.f32.mrb[0].mxu0
      %825 = vmatprep.mubr.f32.mxu0 0.0
      %826 = vmatmul.mubr.f32.gmra.mrb[0].mxu0 %v685
      %v827 = vpop.f32.mrb[0].mxu0
      %v828 = vadd.f32 %v536, %v827
      %v829 = vpop.f32.mrb[0].mxu0
      %830 = vmatprep.mubr.f32.mxu0 0.0
      %831 = vmatmul.mubr.f32.gmra.mrb[0].mxu0 %v687
      %v832 = vpop.f32.mrb[0].mxu0
      %v833 = vadd.f32 %v541, %v832
      %v834 = vpop.f32.mrb[0].mxu0
      %835 = vmatprep.mubr.f32.mxu0 0.0
      %836 = vmatmul.mubr.f32.gmra.mrb[0].mxu0 %v689
      %v837 = vpop.f32.mrb[0].mxu0
      %v838 = vadd.f32 %v546, %v837
      %v839 = vpop.f32.mrb[0].mxu0
      %840 = vmatprep.mubr.f32.mxu0 0.0
      %841 = vmatmul.mubr.f32.gmra.mrb[0].mxu0 %v691
      %v842 = vpop.f32.mrb[0].mxu0
      %v843 = vadd.f32 %v551, %v842
      %v844 = vpop.f32.mrb[0].mxu0
      %845 = vmatprep.mubr.f32.mxu0 0.0
      %846 = vmatmul.mubr.f32.gmra.mrb[0].mxu0 %v693
      %v847 = vpop.f32.mrb[0].mxu0
      %v848 = vadd.f32 %v556, %v847
      %v849 = vpop.f32.mrb[0].mxu0
      %850 = vmatprep.mubr.f32.mxu0 0.0
      %851 = vmatmul.mubr.f32.gmra.mrb[0].mxu0 %v695
      %v852 = vpop.f32.mrb[0].mxu0
      %v853 = vadd.f32 %v561, %v852
      %v854 = vpop.f32.mrb[0].mxu0
      %855 = vmatprep.mubr.f32.mxu0 0.0
      %856 = vmatmul.mubr.f32.gmra.mrb[0].mxu0 %v697
      %v857 = vpop.f32.mrb[0].mxu0
      %v858 = vadd.f32 %v566, %v857
      %v859 = vpop.f32.mrb[0].mxu0
      %860 = vmatprep.mubr.f32.mxu0 0.0
      %861 = vmatmul.mubr.f32.gmra.mrb[0].mxu0 %v699
      %v862 = vpop.f32.mrb[0].mxu0
      %v863 = vadd.f32 %v571, %v862
      %v864 = vpop.f32.mrb[0].mxu0
      %865 = vmatprep.mubr.f32.mxu0 0.0
      %866 = vmatmul.mubr.f32.gmra.mrb[0].mxu0 %v701
      %v867 = vpop.f32.mrb[0].mxu0
      %v868 = vadd.f32 %v576, %v867
      %v869 = vpop.f32.mrb[0].mxu0
      %870 = vmatprep.mubr.f32.mxu0 0.0
      %871 = vmatmul.mubr.f32.gmra.mrb[0].mxu0 %v703
      %v872 = vpop.f32.mrb[0].mxu0
      %v873 = vadd.f32 %v581, %v872
      %v874 = vpop.f32.mrb[0].mxu0
      %875 = vmatprep.mubr.f32.mxu0 0.0
      %876 = vmatmul.mubr.f32.gmra.mrb[0].mxu0 %v705
      %v877 = vpop.f32.mrb[0].mxu0
      %v878 = vadd.f32 %v586, %v877
      %v879 = vpop.f32.mrb[0].mxu0
      %880 = vmatprep.mubr.f32.mxu0 0.0
      %881 = vmatmul.mubr.f32.gmra.mrb[0].mxu0 %v707
      %v882 = vpop.f32.mrb[0].mxu0
      %v883 = vadd.f32 %v591, %v882
      %v884 = vpop.f32.mrb[0].mxu0
      %885 = vmatprep.mubr.f32.mxu0 0.0
      %886 = vmatmul.mubr.f32.gmra.mrb[0].mxu0 %v709
      %v887 = vpop.f32.mrb[0].mxu0
      %v888 = vadd.f32 %v596, %v887
      %v889 = vpop.f32.mrb[0].mxu0
      %890 = vmatprep.mubr.f32.mxu0 0.0
      %891 = vmatmul.mubr.f32.gmra.mrb[0].mxu0 %v711
      %v892 = vpop.f32.mrb[0].mxu0
      %v893 = vadd.f32 %v601, %v892
      %v894 = vpop.f32.mrb[0].mxu0
      %895 = vmatprep.mubr.f32.mxu0 0.0
      %896 = vmatmul.mubr.f32.gmra.mrb[0].mxu0 %v713
      %v897 = vpop.f32.mrb[0].mxu0
      %v898 = vadd.f32 %v606, %v897
      %v899 = vpop.f32.mrb[0].mxu0
      %900 = vmatprep.mubr.f32.mxu0 0.0
      %901 = vmatmul.mubr.f32.gmra.mrb[0].mxu0 %v715
      %v902 = vpop.f32.mrb[0].mxu0
      %v903 = vadd.f32 %v611, %v902
      %v904 = vpop.f32.mrb[0].mxu0
      %905 = vmatprep.mubr.f32.mxu0 0.0
      %906 = vmatmul.mubr.f32.gmra.mrb[0].mxu0 %v717
      %v907 = vpop.f32.mrb[0].mxu0
      %v908 = vadd.f32 %v616, %v907
      %v909 = vpop.f32.mrb[0].mxu0
      %910 = vmatprep.mubr.f32.mxu0 0.0
      %911 = vmatmul.mubr.f32.gmra.mrb[0].mxu0 %v719
      %v912 = vpop.f32.mrb[0].mxu0
      %v913 = vadd.f32 %v621, %v912
      %v914 = vpop.f32.mrb[0].mxu0
      %915 = vmatprep.mubr.f32.mxu0 0.0
      %916 = vmatmul.mubr.f32.gmra.mrb[0].mxu0 %v721
      %v917 = vpop.f32.mrb[0].mxu0
      %v918 = vadd.f32 %v626, %v917
      %v919 = vpop.f32.mrb[0].mxu0
      %920 = vmatprep.mubr.f32.mxu0 0.0
      %921 = vmatmul.mubr.f32.gmra.mrb[0].mxu0 %v723
      %v922 = vpop.f32.mrb[0].mxu0
      %v923 = vadd.f32 %v631, %v922
      %v924 = vpop.f32.mrb[0].mxu0
      %925 = vmatprep.mubr.f32.mxu0 0.0
      %926 = vmatmul.mubr.f32.gmra.mrb[0].mxu0 %v725
      %v927 = vpop.f32.mrb[0].mxu0
      %v928 = vadd.f32 %v636, %v927
      %v929 = vpop.f32.mrb[0].mxu0
      %930 = vmatprep.mubr.f32.mxu0 0.0
      %931 = vmatmul.mubr.f32.gmra.mrb[0].mxu0 %v727
      %v932 = vpop.f32.mrb[0].mxu0
      %v933 = vadd.f32 %v641, %v932
      %v934 = vpop.f32.mrb[0].mxu0
      %935 = vmatprep.mubr.f32.mxu0 0.0
      %936 = vmatmul.mubr.f32.gmra.mrb[0].mxu0 %v729
      %v937 = vpop.f32.mrb[0].mxu0
      %v938 = vadd.f32 %v646, %v937
      %v939 = vpop.f32.mrb[0].mxu0
      %940 = vmatprep.mubr.f32.mxu0 0.0
      %941 = vmatmul.mubr.f32.gmra.mrb[0].mxu0 %v731
      %v942 = vpop.f32.mrb[0].mxu0
      %v943 = vadd.f32 %v651, %v942
      %v944 = vpop.f32.mrb[0].mxu0
      %945 = vmatprep.mubr.f32.mxu0 0.0
      %946 = vmatmul.mubr.f32.gmra.mrb[0].mxu0 %v733
      %v947 = vpop.f32.mrb[0].mxu0
      %v948 = vadd.f32 %v656, %v947
      %v949 = vpop.f32.mrb[0].mxu0
      %950 = vmatprep.mubr.f32.mxu0 0.0
      %951 = vmatmul.mubr.f32.gmra.mrb[0].mxu0 %v735
      %v952 = vpop.f32.mrb[0].mxu0
      %v953 = vadd.f32 %v661, %v952
      %v954 = vpop.f32.mrb[0].mxu0
      %955 = vmatprep.mubr.f32.mxu0 0.0
      %956 = vmatmul.mubr.f32.gmra.mrb[0].mxu0 %v737
      %v957 = vpop.f32.mrb[0].mxu0
      %v958 = vadd.f32 %v666, %v957
      %v959 = vpop.f32.mrb[0].mxu0
      %960 = vmatprep.mubr.f32.mxu0 0.0
      %961 = vmatmul.mubr.f32.gmra.mrb[0].mxu0 %v739
      %v962 = vpop.f32.mrb[0].mxu0
      %v963 = vadd.f32 %v671, %v962
      %v964 = vpop.f32.mrb[0].mxu0
      %965 = vmatprep.mubr.f32.mxu0 0.0
      %966 = vmatmul.mubr.f32.gmra.mrb[0].mxu0 %v741
      %v967 = vpop.f32.mrb[0].mxu0
      %v968 = vadd.f32 %v676, %v967
      %v969 = vpop.f32.mrb[0].mxu0
      %970 = vdwg.mxu0
      %vm971 = vcmask 1045504
      %v972 = vrot.slane %v199, 2
      %v973 = vrot.slane %v200, 2
      %v974 = vsel %vm971, %v972, %v973
      %v975 = vrot.slane %v201, 2
      %v976 = vsel %vm971, %v973, %v975
      %v977 = vrot.slane %v202, 2
      %v978 = vrot.slane %v203, 2
      %v979 = vsel %vm971, %v977, %v978
      %v980 = vrot.slane %v204, 2
      %v981 = vsel %vm971, %v978, %v980
      %v982 = vrot.slane %v205, 2
      %v983 = vrot.slane %v206, 2
      %v984 = vsel %vm971, %v982, %v983
      %v985 = vrot.slane %v207, 2
      %v986 = vsel %vm971, %v983, %v985
      %v987 = vrot.slane %v208, 2
      %v988 = vrot.slane %v209, 2
      %v989 = vsel %vm971, %v987, %v988
      %v990 = vrot.slane %v210, 2
      %v991 = vsel %vm971, %v988, %v990
      %v992 = vrot.slane %v211, 2
      %v993 = vrot.slane %v212, 2
      %v994 = vsel %vm971, %v992, %v993
      %v995 = vrot.slane %v213, 2
      %v996 = vsel %vm971, %v993, %v995
      %v997 = vrot.slane %v214, 2
      %v998 = vrot.slane %v215, 2
      %v999 = vsel %vm971, %v997, %v998
      %v1000 = vrot.slane %v216, 2
      %v1001 = vsel %vm971, %v998, %v1000
      %v1002 = vrot.slane %v217, 2
      %v1003 = vrot.slane %v218, 2
      %v1004 = vsel %vm971, %v1002, %v1003
      %v1005 = vrot.slane %v219, 2
      %v1006 = vsel %vm971, %v1003, %v1005
      %v1007 = vrot.slane %v220, 2
      %v1008 = vrot.slane %v221, 2
      %v1009 = vsel %vm971, %v1007, %v1008
      %v1010 = vrot.slane %v222, 2
      %v1011 = vsel %vm971, %v1008, %v1010
      %v1012 = vrot.slane %v223, 2
      %v1013 = vrot.slane %v224, 2
      %v1014 = vsel %vm971, %v1012, %v1013
      %v1015 = vrot.slane %v225, 2
      %v1016 = vsel %vm971, %v1013, %v1015
      %v1017 = vrot.slane %v226, 2
      %v1018 = vrot.slane %v227, 2
      %v1019 = vsel %vm971, %v1017, %v1018
      %v1020 = vrot.slane %v228, 2
      %v1021 = vsel %vm971, %v1018, %v1020
      %v1022 = vrot.slane %v229, 2
      %v1023 = vrot.slane %v230, 2
      %v1024 = vsel %vm971, %v1022, %v1023
      %v1025 = vrot.slane %v231, 2
      %v1026 = vsel %vm971, %v1023, %v1025
      %v1027 = vrot.slane %v232, 2
      %v1028 = vrot.slane %v233, 2
      %v1029 = vsel %vm971, %v1027, %v1028
      %v1030 = vrot.slane %v234, 2
      %v1031 = vsel %vm971, %v1028, %v1030
      %v1032 = vrot.slane %v235, 2
      %v1033 = vrot.slane %v236, 2
      %v1034 = vsel %vm971, %v1032, %v1033
      %v1035 = vrot.slane %v237, 2
      %v1036 = vsel %vm971, %v1033, %v1035
      %v1037 = vrot.slane %v238, 2
      %v1038 = vrot.slane %v239, 2
      %v1039 = vsel %vm971, %v1037, %v1038
      %v1040 = vrot.slane %v240, 2
      %v1041 = vsel %vm971, %v1038, %v1040
      %v1042 = vrot.slane %v241, 2
      %v1043 = vrot.slane %v242, 2
      %v1044 = vsel %vm971, %v1042, %v1043
      %v1045 = vrot.slane %v243, 2
      %v1046 = vsel %vm971, %v1043, %v1045
      %v1047 = vrot.slane %v244, 2
      %v1048 = vrot.slane %v245, 2
      %v1049 = vsel %vm971, %v1047, %v1048
      %v1050 = vrot.slane %v246, 2
      %v1051 = vsel %vm971, %v1048, %v1050
      %s1052 = scalar_lea.vmem %s1, 8
      %v1053 = vld [vmem:[%s1052] sm:$0xf]
      %v1054 = vsel %vm385, %v974, 0
      %v1056 = vsel %vm385, %v976, 0
      %v1058 = vsel %vm385, %v979, 0
      %v1060 = vsel %vm385, %v981, 0
      %v1062 = vsel %vm385, %v984, 0
      %v1064 = vsel %vm385, %v986, 0
      %v1066 = vsel %vm385, %v989, 0
      %v1068 = vsel %vm385, %v991, 0
      %v1070 = vsel %vm385, %v994, 0
      %v1072 = vsel %vm385, %v996, 0
      %v1074 = vsel %vm385, %v999, 0
      %v1076 = vsel %vm385, %v1001, 0
      %v1078 = vsel %vm385, %v1004, 0
      %v1080 = vsel %vm385, %v1006, 0
      %v1082 = vsel %vm385, %v1009, 0
      %v1084 = vsel %vm385, %v1011, 0
      %v1086 = vsel %vm385, %v1014, 0
      %v1088 = vsel %vm385, %v1016, 0
      %v1090 = vsel %vm385, %v1019, 0
      %v1092 = vsel %vm385, %v1021, 0
      %v1094 = vsel %vm385, %v1024, 0
      %v1096 = vsel %vm385, %v1026, 0
      %v1098 = vsel %vm385, %v1029, 0
      %v1100 = vsel %vm385, %v1031, 0
      %v1102 = vsel %vm385, %v1034, 0
      %v1104 = vsel %vm385, %v1036, 0
      %v1106 = vsel %vm385, %v1039, 0
      %v1108 = vsel %vm385, %v1041, 0
      %v1110 = vsel %vm385, %v1044, 0
      %v1112 = vsel %vm385, %v1046, 0
      %v1114 = vsel %vm385, %v1049, 0
      %v1116 = vsel %vm385, %v1051, 0
      %v1119 = vsel %vm450, %v1053, 0
      %1121 = vmatprep.subr.mxu0 0.0
      %1122 = vmatpush1.msra.mxu0 %v1119
      %1123 = vmatprep.subr.mxu0 0.0
      %1124 = vmatpush1.msra.mxu0 0.0
      %1125 = vmatprep.subr.mxu0 0.0
      %1126 = vmatpush1.msra.mxu0 0.0
      %1127 = vmatprep.subr.mxu0 0.0
      %1128 = vmatpush1.msra.mxu0 0.0
      %1129 = vmatprep.subr.mxu0 0.0
      %1130 = vmatpush1.msra.mxu0 0.0
      %1131 = vmatprep.subr.mxu0 0.0
      %1132 = vmatpush1.msra.mxu0 0.0
      %1133 = vmatprep.subr.mxu0 0.0
      %1134 = vmatpush1.msra.mxu0 0.0
      %1135 = vmatprep.subr.mxu0 0.0
      %1136 = vmatpush1.msra.mxu0 0.0
      %1137 = vmatprep.subr.mxu0 0.0
      %1138 = vmatpush1.msra.mxu0 0.0
      %1139 = vmatprep.subr.mxu0 0.0
      %1140 = vmatpush1.msra.mxu0 0.0
      %1141 = vmatprep.subr.mxu0 0.0
      %1142 = vmatpush1.msra.mxu0 0.0
      %1143 = vmatprep.subr.mxu0 0.0
      %1144 = vmatpush1.msra.mxu0 0.0
      %1145 = vmatprep.subr.mxu0 0.0
      %1146 = vmatpush1.msra.mxu0 0.0
      %1147 = vmatprep.subr.mxu0 0.0
      %1148 = vmatpush1.msra.mxu0 0.0
      %1149 = vmatprep.subr.mxu0 0.0
      %1150 = vmatpush1.msra.mxu0 0.0
      %1151 = vmatprep.subr.mxu0 0.0
      %1152 = vmatpush1.msra.mxu0 0.0
      %1153 = vmatprep.subr.mxu0 0.0
      %1154 = vmatpush1.msra.mxu0 0.0
      %1155 = vmatprep.subr.mxu0 0.0
      %1156 = vmatpush1.msra.mxu0 0.0
      %1157 = vmatprep.subr.mxu0 0.0
      %1158 = vmatpush1.msra.mxu0 0.0
      %1159 = vmatprep.subr.mxu0 0.0
      %1160 = vmatpush1.msra.mxu0 0.0
      %1161 = vmatprep.subr.mxu0 0.0
      %1162 = vmatpush1.msra.mxu0 0.0
      %1163 = vmatprep.subr.mxu0 0.0
      %1164 = vmatpush1.msra.mxu0 0.0
      %1165 = vmatprep.subr.mxu0 0.0
      %1166 = vmatpush1.msra.mxu0 0.0
      %1167 = vmatprep.subr.mxu0 0.0
      %1168 = vmatpush1.msra.mxu0 0.0
      %1169 = vmatprep.subr.mxu0 0.0
      %1170 = vmatpush1.msra.mxu0 0.0
      %1171 = vmatprep.subr.mxu0 0.0
      %1172 = vmatpush1.msra.mxu0 0.0
      %1173 = vmatprep.subr.mxu0 0.0
      %1174 = vmatpush1.msra.mxu0 0.0
      %1175 = vmatprep.subr.mxu0 0.0
      %1176 = vmatpush1.msra.mxu0 0.0
      %1177 = vmatprep.subr.mxu0 0.0
      %1178 = vmatpush1.msra.mxu0 0.0
      %1179 = vmatprep.subr.mxu0 0.0
      %1180 = vmatpush1.msra.mxu0 0.0
      %1181 = vmatprep.subr.mxu0 0.0
      %1182 = vmatpush1.msra.mxu0 0.0
      %1183 = vmatprep.subr.mxu0 0.0
      %1184 = vmatpush1.msra.mxu0 0.0
      %1185 = vmatprep.mubr.f32.mxu0 0.0
      %1186 = vmatmul.mubr.f32.gmra.mrb[0].mxu0 %v1054
      %v1187 = vpop.f32.mrb[0].mxu0
      %v1188 = vadd.f32 0.0, %v1187
      %v1189 = vpop.f32.mrb[0].mxu0
      %1190 = vmatprep.mubr.f32.mxu0 0.0
      %1191 = vmatmul.mubr.f32.gmra.mrb[0].mxu0 %v1056
      %v1192 = vpop.f32.mrb[0].mxu0
      %v1193 = vadd.f32 0.0, %v1192
      %v1194 = vpop.f32.mrb[0].mxu0
      %1195 = vmatprep.mubr.f32.mxu0 0.0
      %1196 = vmatmul.mubr.f32.gmra.mrb[0].mxu0 %v1058
      %v1197 = vpop.f32.mrb[0].mxu0
      %v1198 = vadd.f32 0.0, %v1197
      %v1199 = vpop.f32.mrb[0].mxu0
      %1200 = vmatprep.mubr.f32.mxu0 0.0
      %1201 = vmatmul.mubr.f32.gmra.mrb[0].mxu0 %v1060
      %v1202 = vpop.f32.mrb[0].mxu0
      %v1203 = vadd.f32 0.0, %v1202
      %v1204 = vpop.f32.mrb[0].mxu0
      %1205 = vmatprep.mubr.f32.mxu0 0.0
      %1206 = vmatmul.mubr.f32.gmra.mrb[0].mxu0 %v1062
      %v1207 = vpop.f32.mrb[0].mxu0
      %v1208 = vadd.f32 0.0, %v1207
      %v1209 = vpop.f32.mrb[0].mxu0
      %1210 = vmatprep.mubr.f32.mxu0 0.0
      %1211 = vmatmul.mubr.f32.gmra.mrb[0].mxu0 %v1064
      %v1212 = vpop.f32.mrb[0].mxu0
      %v1213 = vadd.f32 0.0, %v1212
      %v1214 = vpop.f32.mrb[0].mxu0
      %1215 = vmatprep.mubr.f32.mxu0 0.0
      %1216 = vmatmul.mubr.f32.gmra.mrb[0].mxu0 %v1066
      %v1217 = vpop.f32.mrb[0].mxu0
      %v1218 = vadd.f32 0.0, %v1217
      %v1219 = vpop.f32.mrb[0].mxu0
      %1220 = vmatprep.mubr.f32.mxu0 0.0
      %1221 = vmatmul.mubr.f32.gmra.mrb[0].mxu0 %v1068
      %v1222 = vpop.f32.mrb[0].mxu0
      %v1223 = vadd.f32 0.0, %v1222
      %v1224 = vpop.f32.mrb[0].mxu0
      %1225 = vmatprep.mubr.f32.mxu0 0.0
      %1226 = vmatmul.mubr.f32.gmra.mrb[0].mxu0 %v1070
      %v1227 = vpop.f32.mrb[0].mxu0
      %v1228 = vadd.f32 0.0, %v1227
      %v1229 = vpop.f32.mrb[0].mxu0
      %1230 = vmatprep.mubr.f32.mxu0 0.0
      %1231 = vmatmul.mubr.f32.gmra.mrb[0].mxu0 %v1072
      %v1232 = vpop.f32.mrb[0].mxu0
      %v1233 = vadd.f32 0.0, %v1232
      %v1234 = vpop.f32.mrb[0].mxu0
      %1235 = vmatprep.mubr.f32.mxu0 0.0
      %1236 = vmatmul.mubr.f32.gmra.mrb[0].mxu0 %v1074
      %v1237 = vpop.f32.mrb[0].mxu0
      %v1238 = vadd.f32 0.0, %v1237
      %v1239 = vpop.f32.mrb[0].mxu0
      %1240 = vmatprep.mubr.f32.mxu0 0.0
      %1241 = vmatmul.mubr.f32.gmra.mrb[0].mxu0 %v1076
      %v1242 = vpop.f32.mrb[0].mxu0
      %v1243 = vadd.f32 0.0, %v1242
      %v1244 = vpop.f32.mrb[0].mxu0
      %1245 = vmatprep.mubr.f32.mxu0 0.0
      %1246 = vmatmul.mubr.f32.gmra.mrb[0].mxu0 %v1078
      %v1247 = vpop.f32.mrb[0].mxu0
      %v1248 = vadd.f32 0.0, %v1247
      %v1249 = vpop.f32.mrb[0].mxu0
      %1250 = vmatprep.mubr.f32.mxu0 0.0
      %1251 = vmatmul.mubr.f32.gmra.mrb[0].mxu0 %v1080
      %v1252 = vpop.f32.mrb[0].mxu0
      %v1253 = vadd.f32 0.0, %v1252
      %v1254 = vpop.f32.mrb[0].mxu0
      %1255 = vmatprep.mubr.f32.mxu0 0.0
      %1256 = vmatmul.mubr.f32.gmra.mrb[0].mxu0 %v1082
      %v1257 = vpop.f32.mrb[0].mxu0
      %v1258 = vadd.f32 0.0, %v1257
      %v1259 = vpop.f32.mrb[0].mxu0
      %1260 = vmatprep.mubr.f32.mxu0 0.0
      %1261 = vmatmul.mubr.f32.gmra.mrb[0].mxu0 %v1084
      %v1262 = vpop.f32.mrb[0].mxu0
      %v1263 = vadd.f32 0.0, %v1262
      %v1264 = vpop.f32.mrb[0].mxu0
      %1265 = vmatprep.mubr.f32.mxu0 0.0
      %1266 = vmatmul.mubr.f32.gmra.mrb[0].mxu0 %v1086
      %v1267 = vpop.f32.mrb[0].mxu0
      %v1268 = vadd.f32 0.0, %v1267
      %v1269 = vpop.f32.mrb[0].mxu0
      %1270 = vmatprep.mubr.f32.mxu0 0.0
      %1271 = vmatmul.mubr.f32.gmra.mrb[0].mxu0 %v1088
      %v1272 = vpop.f32.mrb[0].mxu0
      %v1273 = vadd.f32 0.0, %v1272
      %v1274 = vpop.f32.mrb[0].mxu0
      %1275 = vmatprep.mubr.f32.mxu0 0.0
      %1276 = vmatmul.mubr.f32.gmra.mrb[0].mxu0 %v1090
      %v1277 = vpop.f32.mrb[0].mxu0
      %v1278 = vadd.f32 0.0, %v1277
      %v1279 = vpop.f32.mrb[0].mxu0
      %1280 = vmatprep.mubr.f32.mxu0 0.0
      %1281 = vmatmul.mubr.f32.gmra.mrb[0].mxu0 %v1092
      %v1282 = vpop.f32.mrb[0].mxu0
      %v1283 = vadd.f32 0.0, %v1282
      %v1284 = vpop.f32.mrb[0].mxu0
      %1285 = vmatprep.mubr.f32.mxu0 0.0
      %1286 = vmatmul.mubr.f32.gmra.mrb[0].mxu0 %v1094
      %v1287 = vpop.f32.mrb[0].mxu0
      %v1288 = vadd.f32 0.0, %v1287
      %v1289 = vpop.f32.mrb[0].mxu0
      %1290 = vmatprep.mubr.f32.mxu0 0.0
      %1291 = vmatmul.mubr.f32.gmra.mrb[0].mxu0 %v1096
      %v1292 = vpop.f32.mrb[0].mxu0
      %v1293 = vadd.f32 0.0, %v1292
      %v1294 = vpop.f32.mrb[0].mxu0
      %1295 = vmatprep.mubr.f32.mxu0 0.0
      %1296 = vmatmul.mubr.f32.gmra.mrb[0].mxu0 %v1098
      %v1297 = vpop.f32.mrb[0].mxu0
      %v1298 = vadd.f32 0.0, %v1297
      %v1299 = vpop.f32.mrb[0].mxu0
      %1300 = vmatprep.mubr.f32.mxu0 0.0
      %1301 = vmatmul.mubr.f32.gmra.mrb[0].mxu0 %v1100
      %v1302 = vpop.f32.mrb[0].mxu0
      %v1303 = vadd.f32 0.0, %v1302
      %v1304 = vpop.f32.mrb[0].mxu0
      %1305 = vmatprep.mubr.f32.mxu0 0.0
      %1306 = vmatmul.mubr.f32.gmra.mrb[0].mxu0 %v1102
      %v1307 = vpop.f32.mrb[0].mxu0
      %v1308 = vadd.f32 0.0, %v1307
      %v1309 = vpop.f32.mrb[0].mxu0
      %1310 = vmatprep.mubr.f32.mxu0 0.0
      %1311 = vmatmul.mubr.f32.gmra.mrb[0].mxu0 %v1104
      %v1312 = vpop.f32.mrb[0].mxu0
      %v1313 = vadd.f32 0.0, %v1312
      %v1314 = vpop.f32.mrb[0].mxu0
      %1315 = vmatprep.mubr.f32.mxu0 0.0
      %1316 = vmatmul.mubr.f32.gmra.mrb[0].mxu0 %v1106
      %v1317 = vpop.f32.mrb[0].mxu0
      %v1318 = vadd.f32 0.0, %v1317
      %v1319 = vpop.f32.mrb[0].mxu0
      %1320 = vmatprep.mubr.f32.mxu0 0.0
      %1321 = vmatmul.mubr.f32.gmra.mrb[0].mxu0 %v1108
      %v1322 = vpop.f32.mrb[0].mxu0
      %v1323 = vadd.f32 0.0, %v1322
      %v1324 = vpop.f32.mrb[0].mxu0
      %1325 = vmatprep.mubr.f32.mxu0 0.0
      %1326 = vmatmul.mubr.f32.gmra.mrb[0].mxu0 %v1110
      %v1327 = vpop.f32.mrb[0].mxu0
      %v1328 = vadd.f32 0.0, %v1327
      %v1329 = vpop.f32.mrb[0].mxu0
      %1330 = vmatprep.mubr.f32.mxu0 0.0
      %1331 = vmatmul.mubr.f32.gmra.mrb[0].mxu0 %v1112
      %v1332 = vpop.f32.mrb[0].mxu0
      %v1333 = vadd.f32 0.0, %v1332
      %v1334 = vpop.f32.mrb[0].mxu0
      %1335 = vmatprep.mubr.f32.mxu0 0.0
      %1336 = vmatmul.mubr.f32.gmra.mrb[0].mxu0 %v1114
      %v1337 = vpop.f32.mrb[0].mxu0
      %v1338 = vadd.f32 0.0, %v1337
      %v1339 = vpop.f32.mrb[0].mxu0
      %1340 = vmatprep.mubr.f32.mxu0 0.0
      %1341 = vmatmul.mubr.f32.gmra.mrb[0].mxu0 %v1116
      %v1342 = vpop.f32.mrb[0].mxu0
      %v1343 = vadd.f32 0.0, %v1342
      %v1344 = vpop.f32.mrb[0].mxu0
      %1345 = vdwg.mxu0
      %v1346 = vadd.f32 %v813, %v1188
      %v1347 = vadd.f32 %v818, %v1193
      %v1348 = vadd.f32 %v823, %v1198
      %v1349 = vadd.f32 %v828, %v1203
      %v1350 = vadd.f32 %v833, %v1208
      %v1351 = vadd.f32 %v838, %v1213
      %v1352 = vadd.f32 %v843, %v1218
      %v1353 = vadd.f32 %v848, %v1223
      %v1354 = vadd.f32 %v853, %v1228
      %v1355 = vadd.f32 %v858, %v1233
      %v1356 = vadd.f32 %v863, %v1238
      %v1357 = vadd.f32 %v868, %v1243
      %v1358 = vadd.f32 %v873, %v1248
      %v1359 = vadd.f32 %v878, %v1253
      %v1360 = vadd.f32 %v883, %v1258
      %v1361 = vadd.f32 %v888, %v1263
      %v1362 = vadd.f32 %v893, %v1268
      %v1363 = vadd.f32 %v898, %v1273
      %v1364 = vadd.f32 %v903, %v1278
      %v1365 = vadd.f32 %v908, %v1283
      %v1366 = vadd.f32 %v913, %v1288
      %v1367 = vadd.f32 %v918, %v1293
      %v1368 = vadd.f32 %v923, %v1298
      %v1369 = vadd.f32 %v928, %v1303
      %v1370 = vadd.f32 %v933, %v1308
      %v1371 = vadd.f32 %v938, %v1313
      %v1372 = vadd.f32 %v943, %v1318
      %v1373 = vadd.f32 %v948, %v1323
      %v1374 = vadd.f32 %v953, %v1328
      %v1375 = vadd.f32 %v958, %v1333
      %v1376 = vadd.f32 %v963, %v1338
      %v1377 = vadd.f32 %v968, %v1343
      %s1378 = scalar_lea.vmem %s1, 12
      %v1379 = vld [vmem:[%s1378] sm:$0xf]
      %v1381 = vsel %vm385, %v247, 0
      %v1384 = vsel %vm385, %v248, 0
      %v1387 = vsel %vm450, %v1379, 0
      %1389 = vmatprep.subr.mxu0 0.0
      %1390 = vmatpush1.msra.mxu0 %v1387
      %1391 = vmatprep.subr.mxu0 0.0
      %1392 = vmatpush1.msra.mxu0 0.0
      %1393 = vmatprep.subr.mxu0 0.0
      %1394 = vmatpush1.msra.mxu0 0.0
      %1395 = vmatprep.subr.mxu0 0.0
      %1396 = vmatpush1.msra.mxu0 0.0
      %1397 = vmatprep.subr.mxu0 0.0
      %1398 = vmatpush1.msra.mxu0 0.0
      %1399 = vmatprep.subr.mxu0 0.0
      %1400 = vmatpush1.msra.mxu0 0.0
      %1401 = vmatprep.subr.mxu0 0.0
      %1402 = vmatpush1.msra.mxu0 0.0
      %1403 = vmatprep.subr.mxu0 0.0
      %1404 = vmatpush1.msra.mxu0 0.0
      %1405 = vmatprep.subr.mxu0 0.0
      %1406 = vmatpush1.msra.mxu0 0.0
      %1407 = vmatprep.subr.mxu0 0.0
      %1408 = vmatpush1.msra.mxu0 0.0
      %1409 = vmatprep.subr.mxu0 0.0
      %1410 = vmatpush1.msra.mxu0 0.0
      %1411 = vmatprep.subr.mxu0 0.0
      %1412 = vmatpush1.msra.mxu0 0.0
      %1413 = vmatprep.subr.mxu0 0.0
      %1414 = vmatpush1.msra.mxu0 0.0
      %1415 = vmatprep.subr.mxu0 0.0
      %1416 = vmatpush1.msra.mxu0 0.0
      %1417 = vmatprep.subr.mxu0 0.0
      %1418 = vmatpush1.msra.mxu0 0.0
      %1419 = vmatprep.subr.mxu0 0.0
      %1420 = vmatpush1.msra.mxu0 0.0
      %1421 = vmatprep.subr.mxu0 0.0
      %1422 = vmatpush1.msra.mxu0 0.0
      %1423 = vmatprep.subr.mxu0 0.0
      %1424 = vmatpush1.msra.mxu0 0.0
      %1425 = vmatprep.subr.mxu0 0.0
      %1426 = vmatpush1.msra.mxu0 0.0
      %1427 = vmatprep.subr.mxu0 0.0
      %1428 = vmatpush1.msra.mxu0 0.0
      %1429 = vmatprep.subr.mxu0 0.0
      %1430 = vmatpush1.msra.mxu0 0.0
      %1431 = vmatprep.subr.mxu0 0.0
      %1432 = vmatpush1.msra.mxu0 0.0
      %1433 = vmatprep.subr.mxu0 0.0
      %1434 = vmatpush1.msra.mxu0 0.0
      %1435 = vmatprep.subr.mxu0 0.0
      %1436 = vmatpush1.msra.mxu0 0.0
      %1437 = vmatprep.subr.mxu0 0.0
      %1438 = vmatpush1.msra.mxu0 0.0
      %1439 = vmatprep.subr.mxu0 0.0
      %1440 = vmatpush1.msra.mxu0 0.0
      %1441 = vmatprep.subr.mxu0 0.0
      %1442 = vmatpush1.msra.mxu0 0.0
      %1443 = vmatprep.subr.mxu0 0.0
      %1444 = vmatpush1.msra.mxu0 0.0
      %1445 = vmatprep.subr.mxu0 0.0
      %1446 = vmatpush1.msra.mxu0 0.0
      %1447 = vmatprep.subr.mxu0 0.0
      %1448 = vmatpush1.msra.mxu0 0.0
      %1449 = vmatprep.subr.mxu0 0.0
      %1450 = vmatpush1.msra.mxu0 0.0
      %1451 = vmatprep.subr.mxu0 0.0
      %1452 = vmatpush1.msra.mxu0 0.0
      %1453 = vmatprep.mubr.f32.mxu0 0.0
      %1454 = vmatmul.mubr.f32.gmra.mrb[0].mxu0 %v683
      %v1455 = vpop.f32.mrb[0].mxu0
      %v1456 = vadd.f32 0.0, %v1455
      %v1457 = vpop.f32.mrb[0].mxu0
      %1458 = vmatprep.mubr.f32.mxu0 0.0
      %1459 = vmatmul.mubr.f32.gmra.mrb[0].mxu0 %v685
      %v1460 = vpop.f32.mrb[0].mxu0
      %v1461 = vadd.f32 0.0, %v1460
      %v1462 = vpop.f32.mrb[0].mxu0
      %1463 = vmatprep.mubr.f32.mxu0 0.0
      %1464 = vmatmul.mubr.f32.gmra.mrb[0].mxu0 %v687
      %v1465 = vpop.f32.mrb[0].mxu0
      %v1466 = vadd.f32 0.0, %v1465
      %v1467 = vpop.f32.mrb[0].mxu0
      %1468 = vmatprep.mubr.f32.mxu0 0.0
      %1469 = vmatmul.mubr.f32.gmra.mrb[0].mxu0 %v689
      %v1470 = vpop.f32.mrb[0].mxu0
      %v1471 = vadd.f32 0.0, %v1470
      %v1472 = vpop.f32.mrb[0].mxu0
      %1473 = vmatprep.mubr.f32.mxu0 0.0
      %1474 = vmatmul.mubr.f32.gmra.mrb[0].mxu0 %v691
      %v1475 = vpop.f32.mrb[0].mxu0
      %v1476 = vadd.f32 0.0, %v1475
      %v1477 = vpop.f32.mrb[0].mxu0
      %1478 = vmatprep.mubr.f32.mxu0 0.0
      %1479 = vmatmul.mubr.f32.gmra.mrb[0].mxu0 %v693
      %v1480 = vpop.f32.mrb[0].mxu0
      %v1481 = vadd.f32 0.0, %v1480
      %v1482 = vpop.f32.mrb[0].mxu0
      %1483 = vmatprep.mubr.f32.mxu0 0.0
      %1484 = vmatmul.mubr.f32.gmra.mrb[0].mxu0 %v695
      %v1485 = vpop.f32.mrb[0].mxu0
      %v1486 = vadd.f32 0.0, %v1485
      %v1487 = vpop.f32.mrb[0].mxu0
      %1488 = vmatprep.mubr.f32.mxu0 0.0
      %1489 = vmatmul.mubr.f32.gmra.mrb[0].mxu0 %v697
      %v1490 = vpop.f32.mrb[0].mxu0
      %v1491 = vadd.f32 0.0, %v1490
      %v1492 = vpop.f32.mrb[0].mxu0
      %1493 = vmatprep.mubr.f32.mxu0 0.0
      %1494 = vmatmul.mubr.f32.gmra.mrb[0].mxu0 %v699
      %v1495 = vpop.f32.mrb[0].mxu0
      %v1496 = vadd.f32 0.0, %v1495
      %v1497 = vpop.f32.mrb[0].mxu0
      %1498 = vmatprep.mubr.f32.mxu0 0.0
      %1499 = vmatmul.mubr.f32.gmra.mrb[0].mxu0 %v701
      %v1500 = vpop.f32.mrb[0].mxu0
      %v1501 = vadd.f32 0.0, %v1500
      %v1502 = vpop.f32.mrb[0].mxu0
      %1503 = vmatprep.mubr.f32.mxu0 0.0
      %1504 = vmatmul.mubr.f32.gmra.mrb[0].mxu0 %v703
      %v1505 = vpop.f32.mrb[0].mxu0
      %v1506 = vadd.f32 0.0, %v1505
      %v1507 = vpop.f32.mrb[0].mxu0
      %1508 = vmatprep.mubr.f32.mxu0 0.0
      %1509 = vmatmul.mubr.f32.gmra.mrb[0].mxu0 %v705
      %v1510 = vpop.f32.mrb[0].mxu0
      %v1511 = vadd.f32 0.0, %v1510
      %v1512 = vpop.f32.mrb[0].mxu0
      %1513 = vmatprep.mubr.f32.mxu0 0.0
      %1514 = vmatmul.mubr.f32.gmra.mrb[0].mxu0 %v707
      %v1515 = vpop.f32.mrb[0].mxu0
      %v1516 = vadd.f32 0.0, %v1515
      %v1517 = vpop.f32.mrb[0].mxu0
      %1518 = vmatprep.mubr.f32.mxu0 0.0
      %1519 = vmatmul.mubr.f32.gmra.mrb[0].mxu0 %v709
      %v1520 = vpop.f32.mrb[0].mxu0
      %v1521 = vadd.f32 0.0, %v1520
      %v1522 = vpop.f32.mrb[0].mxu0
      %1523 = vmatprep.mubr.f32.mxu0 0.0
      %1524 = vmatmul.mubr.f32.gmra.mrb[0].mxu0 %v711
      %v1525 = vpop.f32.mrb[0].mxu0
      %v1526 = vadd.f32 0.0, %v1525
      %v1527 = vpop.f32.mrb[0].mxu0
      %1528 = vmatprep.mubr.f32.mxu0 0.0
      %1529 = vmatmul.mubr.f32.gmra.mrb[0].mxu0 %v713
      %v1530 = vpop.f32.mrb[0].mxu0
      %v1531 = vadd.f32 0.0, %v1530
      %v1532 = vpop.f32.mrb[0].mxu0
      %1533 = vmatprep.mubr.f32.mxu0 0.0
      %1534 = vmatmul.mubr.f32.gmra.mrb[0].mxu0 %v715
      %v1535 = vpop.f32.mrb[0].mxu0
      %v1536 = vadd.f32 0.0, %v1535
      %v1537 = vpop.f32.mrb[0].mxu0
      %1538 = vmatprep.mubr.f32.mxu0 0.0
      %1539 = vmatmul.mubr.f32.gmra.mrb[0].mxu0 %v717
      %v1540 = vpop.f32.mrb[0].mxu0
      %v1541 = vadd.f32 0.0, %v1540
      %v1542 = vpop.f32.mrb[0].mxu0
      %1543 = vmatprep.mubr.f32.mxu0 0.0
      %1544 = vmatmul.mubr.f32.gmra.mrb[0].mxu0 %v719
      %v1545 = vpop.f32.mrb[0].mxu0
      %v1546 = vadd.f32 0.0, %v1545
      %v1547 = vpop.f32.mrb[0].mxu0
      %1548 = vmatprep.mubr.f32.mxu0 0.0
      %1549 = vmatmul.mubr.f32.gmra.mrb[0].mxu0 %v721
      %v1550 = vpop.f32.mrb[0].mxu0
      %v1551 = vadd.f32 0.0, %v1550
      %v1552 = vpop.f32.mrb[0].mxu0
      %1553 = vmatprep.mubr.f32.mxu0 0.0
      %1554 = vmatmul.mubr.f32.gmra.mrb[0].mxu0 %v723
      %v1555 = vpop.f32.mrb[0].mxu0
      %v1556 = vadd.f32 0.0, %v1555
      %v1557 = vpop.f32.mrb[0].mxu0
      %1558 = vmatprep.mubr.f32.mxu0 0.0
      %1559 = vmatmul.mubr.f32.gmra.mrb[0].mxu0 %v725
      %v1560 = vpop.f32.mrb[0].mxu0
      %v1561 = vadd.f32 0.0, %v1560
      %v1562 = vpop.f32.mrb[0].mxu0
      %1563 = vmatprep.mubr.f32.mxu0 0.0
      %1564 = vmatmul.mubr.f32.gmra.mrb[0].mxu0 %v727
      %v1565 = vpop.f32.mrb[0].mxu0
      %v1566 = vadd.f32 0.0, %v1565
      %v1567 = vpop.f32.mrb[0].mxu0
      %1568 = vmatprep.mubr.f32.mxu0 0.0
      %1569 = vmatmul.mubr.f32.gmra.mrb[0].mxu0 %v729
      %v1570 = vpop.f32.mrb[0].mxu0
      %v1571 = vadd.f32 0.0, %v1570
      %v1572 = vpop.f32.mrb[0].mxu0
      %1573 = vmatprep.mubr.f32.mxu0 0.0
      %1574 = vmatmul.mubr.f32.gmra.mrb[0].mxu0 %v731
      %v1575 = vpop.f32.mrb[0].mxu0
      %v1576 = vadd.f32 0.0, %v1575
      %v1577 = vpop.f32.mrb[0].mxu0
      %1578 = vmatprep.mubr.f32.mxu0 0.0
      %1579 = vmatmul.mubr.f32.gmra.mrb[0].mxu0 %v733
      %v1580 = vpop.f32.mrb[0].mxu0
      %v1581 = vadd.f32 0.0, %v1580
      %v1582 = vpop.f32.mrb[0].mxu0
      %1583 = vmatprep.mubr.f32.mxu0 0.0
      %1584 = vmatmul.mubr.f32.gmra.mrb[0].mxu0 %v735
      %v1585 = vpop.f32.mrb[0].mxu0
      %v1586 = vadd.f32 0.0, %v1585
      %v1587 = vpop.f32.mrb[0].mxu0
      %1588 = vmatprep.mubr.f32.mxu0 0.0
      %1589 = vmatmul.mubr.f32.gmra.mrb[0].mxu0 %v737
      %v1590 = vpop.f32.mrb[0].mxu0
      %v1591 = vadd.f32 0.0, %v1590
      %v1592 = vpop.f32.mrb[0].mxu0
      %1593 = vmatprep.mubr.f32.mxu0 0.0
      %1594 = vmatmul.mubr.f32.gmra.mrb[0].mxu0 %v739
      %v1595 = vpop.f32.mrb[0].mxu0
      %v1596 = vadd.f32 0.0, %v1595
      %v1597 = vpop.f32.mrb[0].mxu0
      %1598 = vmatprep.mubr.f32.mxu0 0.0
      %1599 = vmatmul.mubr.f32.gmra.mrb[0].mxu0 %v741
      %v1600 = vpop.f32.mrb[0].mxu0
      %v1601 = vadd.f32 0.0, %v1600
      %v1602 = vpop.f32.mrb[0].mxu0
      %1603 = vmatprep.mubr.f32.mxu0 0.0
      %1604 = vmatmul.mubr.f32.gmra.mrb[0].mxu0 %v1381
      %v1605 = vpop.f32.mrb[0].mxu0
      %v1606 = vadd.f32 0.0, %v1605
      %v1607 = vpop.f32.mrb[0].mxu0
      %1608 = vmatprep.mubr.f32.mxu0 0.0
      %1609 = vmatmul.mubr.f32.gmra.mrb[0].mxu0 %v1384
      %v1610 = vpop.f32.mrb[0].mxu0
      %v1611 = vadd.f32 0.0, %v1610
      %v1612 = vpop.f32.mrb[0].mxu0
      %1613 = vdwg.mxu0
      %v1614 = vadd.f32 %v1346, %v1456
      %v1615 = vadd.f32 %v1347, %v1461
      %v1616 = vadd.f32 %v1348, %v1466
      %v1617 = vadd.f32 %v1349, %v1471
      %v1618 = vadd.f32 %v1350, %v1476
      %v1619 = vadd.f32 %v1351, %v1481
      %v1620 = vadd.f32 %v1352, %v1486
      %v1621 = vadd.f32 %v1353, %v1491
      %v1622 = vadd.f32 %v1354, %v1496
      %v1623 = vadd.f32 %v1355, %v1501
      %v1624 = vadd.f32 %v1356, %v1506
      %v1625 = vadd.f32 %v1357, %v1511
      %v1626 = vadd.f32 %v1358, %v1516
      %v1627 = vadd.f32 %v1359, %v1521
      %v1628 = vadd.f32 %v1360, %v1526
      %v1629 = vadd.f32 %v1361, %v1531
      %v1630 = vadd.f32 %v1362, %v1536
      %v1631 = vadd.f32 %v1363, %v1541
      %v1632 = vadd.f32 %v1364, %v1546
      %v1633 = vadd.f32 %v1365, %v1551
      %v1634 = vadd.f32 %v1366, %v1556
      %v1635 = vadd.f32 %v1367, %v1561
      %v1636 = vadd.f32 %v1368, %v1566
      %v1637 = vadd.f32 %v1369, %v1571
      %v1638 = vadd.f32 %v1370, %v1576
      %v1639 = vadd.f32 %v1371, %v1581
      %v1640 = vadd.f32 %v1372, %v1586
      %v1641 = vadd.f32 %v1373, %v1591
      %v1642 = vadd.f32 %v1374, %v1596
      %v1643 = vadd.f32 %v1375, %v1601
      %v1644 = vadd.f32 %v1376, %v1606
      %v1645 = vadd.f32 %v1377, %v1611
      %v1647 = vrot.slane %v247, 1
      %v1648 = vrot.slane %v248, 1
      %v1649 = vsel %vm302, %v1647, %v1648
      %v1650 = vrot.slane %v249, 1
      %v1651 = vsel %vm302, %v1648, %v1650
      %s1652 = scalar_lea.vmem %s1, 16
      %v1653 = vld [vmem:[%s1652] sm:$0xf]
      %v1654 = vsel %vm385, %v1649, 0
      %v1656 = vsel %vm385, %v1651, 0
      %v1659 = vsel %vm450, %v1653, 0
      %1661 = vmatprep.subr.mxu0 0.0
      %1662 = vmatpush1.msra.mxu0 %v1659
      %1663 = vmatprep.subr.mxu0 0.0
      %1664 = vmatpush1.msra.mxu0 0.0
      %1665 = vmatprep.subr.mxu0 0.0
      %1666 = vmatpush1.msra.mxu0 0.0
      %1667 = vmatprep.subr.mxu0 0.0
      %1668 = vmatpush1.msra.mxu0 0.0
      %1669 = vmatprep.subr.mxu0 0.0
      %1670 = vmatpush1.msra.mxu0 0.0
      %1671 = vmatprep.subr.mxu0 0.0
      %1672 = vmatpush1.msra.mxu0 0.0
      %1673 = vmatprep.subr.mxu0 0.0
      %1674 = vmatpush1.msra.mxu0 0.0
      %1675 = vmatprep.subr.mxu0 0.0
      %1676 = vmatpush1.msra.mxu0 0.0
      %1677 = vmatprep.subr.mxu0 0.0
      %1678 = vmatpush1.msra.mxu0 0.0
      %1679 = vmatprep.subr.mxu0 0.0
      %1680 = vmatpush1.msra.mxu0 0.0
      %1681 = vmatprep.subr.mxu0 0.0
      %1682 = vmatpush1.msra.mxu0 0.0
      %1683 = vmatprep.subr.mxu0 0.0
      %1684 = vmatpush1.msra.mxu0 0.0
      %1685 = vmatprep.subr.mxu0 0.0
      %1686 = vmatpush1.msra.mxu0 0.0
      %1687 = vmatprep.subr.mxu0 0.0
      %1688 = vmatpush1.msra.mxu0 0.0
      %1689 = vmatprep.subr.mxu0 0.0
      %1690 = vmatpush1.msra.mxu0 0.0
      %1691 = vmatprep.subr.mxu0 0.0
      %1692 = vmatpush1.msra.mxu0 0.0
      %1693 = vmatprep.subr.mxu0 0.0
      %1694 = vmatpush1.msra.mxu0 0.0
      %1695 = vmatprep.subr.mxu0 0.0
      %1696 = vmatpush1.msra.mxu0 0.0
      %1697 = vmatprep.subr.mxu0 0.0
      %1698 = vmatpush1.msra.mxu0 0.0
      %1699 = vmatprep.subr.mxu0 0.0
      %1700 = vmatpush1.msra.mxu0 0.0
      %1701 = vmatprep.subr.mxu0 0.0
      %1702 = vmatpush1.msra.mxu0 0.0
      %1703 = vmatprep.subr.mxu0 0.0
      %1704 = vmatpush1.msra.mxu0 0.0
      %1705 = vmatprep.subr.mxu0 0.0
      %1706 = vmatpush1.msra.mxu0 0.0
      %1707 = vmatprep.subr.mxu0 0.0
      %1708 = vmatpush1.msra.mxu0 0.0
      %1709 = vmatprep.subr.mxu0 0.0
      %1710 = vmatpush1.msra.mxu0 0.0
      %1711 = vmatprep.subr.mxu0 0.0
      %1712 = vmatpush1.msra.mxu0 0.0
      %1713 = vmatprep.subr.mxu0 0.0
      %1714 = vmatpush1.msra.mxu0 0.0
      %1715 = vmatprep.subr.mxu0 0.0
      %1716 = vmatpush1.msra.mxu0 0.0
      %1717 = vmatprep.subr.mxu0 0.0
      %1718 = vmatpush1.msra.mxu0 0.0
      %1719 = vmatprep.subr.mxu0 0.0
      %1720 = vmatpush1.msra.mxu0 0.0
      %1721 = vmatprep.subr.mxu0 0.0
      %1722 = vmatpush1.msra.mxu0 0.0
      %1723 = vmatprep.subr.mxu0 0.0
      %1724 = vmatpush1.msra.mxu0 0.0
      %1725 = vmatprep.mubr.f32.mxu0 0.0
      %1726 = vmatmul.mubr.f32.gmra.mrb[0].mxu0 %v390
      %v1727 = vpop.f32.mrb[0].mxu0
      %v1728 = vadd.f32 0.0, %v1727
      %v1729 = vpop.f32.mrb[0].mxu0
      %1730 = vmatprep.mubr.f32.mxu0 0.0
      %1731 = vmatmul.mubr.f32.gmra.mrb[0].mxu0 %v392
      %v1732 = vpop.f32.mrb[0].mxu0
      %v1733 = vadd.f32 0.0, %v1732
      %v1734 = vpop.f32.mrb[0].mxu0
      %1735 = vmatprep.mubr.f32.mxu0 0.0
      %1736 = vmatmul.mubr.f32.gmra.mrb[0].mxu0 %v394
      %v1737 = vpop.f32.mrb[0].mxu0
      %v1738 = vadd.f32 0.0, %v1737
      %v1739 = vpop.f32.mrb[0].mxu0
      %1740 = vmatprep.mubr.f32.mxu0 0.0
      %1741 = vmatmul.mubr.f32.gmra.mrb[0].mxu0 %v396
      %v1742 = vpop.f32.mrb[0].mxu0
      %v1743 = vadd.f32 0.0, %v1742
      %v1744 = vpop.f32.mrb[0].mxu0
      %1745 = vmatprep.mubr.f32.mxu0 0.0
      %1746 = vmatmul.mubr.f32.gmra.mrb[0].mxu0 %v398
      %v1747 = vpop.f32.mrb[0].mxu0
      %v1748 = vadd.f32 0.0, %v1747
      %v1749 = vpop.f32.mrb[0].mxu0
      %1750 = vmatprep.mubr.f32.mxu0 0.0
      %1751 = vmatmul.mubr.f32.gmra.mrb[0].mxu0 %v400
      %v1752 = vpop.f32.mrb[0].mxu0
      %v1753 = vadd.f32 0.0, %v1752
      %v1754 = vpop.f32.mrb[0].mxu0
      %1755 = vmatprep.mubr.f32.mxu0 0.0
      %1756 = vmatmul.mubr.f32.gmra.mrb[0].mxu0 %v402
      %v1757 = vpop.f32.mrb[0].mxu0
      %v1758 = vadd.f32 0.0, %v1757
      %v1759 = vpop.f32.mrb[0].mxu0
      %1760 = vmatprep.mubr.f32.mxu0 0.0
      %1761 = vmatmul.mubr.f32.gmra.mrb[0].mxu0 %v404
      %v1762 = vpop.f32.mrb[0].mxu0
      %v1763 = vadd.f32 0.0, %v1762
      %v1764 = vpop.f32.mrb[0].mxu0
      %1765 = vmatprep.mubr.f32.mxu0 0.0
      %1766 = vmatmul.mubr.f32.gmra.mrb[0].mxu0 %v406
      %v1767 = vpop.f32.mrb[0].mxu0
      %v1768 = vadd.f32 0.0, %v1767
      %v1769 = vpop.f32.mrb[0].mxu0
      %1770 = vmatprep.mubr.f32.mxu0 0.0
      %1771 = vmatmul.mubr.f32.gmra.mrb[0].mxu0 %v408
      %v1772 = vpop.f32.mrb[0].mxu0
      %v1773 = vadd.f32 0.0, %v1772
      %v1774 = vpop.f32.mrb[0].mxu0
      %1775 = vmatprep.mubr.f32.mxu0 0.0
      %1776 = vmatmul.mubr.f32.gmra.mrb[0].mxu0 %v410
      %v1777 = vpop.f32.mrb[0].mxu0
      %v1778 = vadd.f32 0.0, %v1777
      %v1779 = vpop.f32.mrb[0].mxu0
      %1780 = vmatprep.mubr.f32.mxu0 0.0
      %1781 = vmatmul.mubr.f32.gmra.mrb[0].mxu0 %v412
      %v1782 = vpop.f32.mrb[0].mxu0
      %v1783 = vadd.f32 0.0, %v1782
      %v1784 = vpop.f32.mrb[0].mxu0
      %1785 = vmatprep.mubr.f32.mxu0 0.0
      %1786 = vmatmul.mubr.f32.gmra.mrb[0].mxu0 %v414
      %v1787 = vpop.f32.mrb[0].mxu0
      %v1788 = vadd.f32 0.0, %v1787
      %v1789 = vpop.f32.mrb[0].mxu0
      %1790 = vmatprep.mubr.f32.mxu0 0.0
      %1791 = vmatmul.mubr.f32.gmra.mrb[0].mxu0 %v416
      %v1792 = vpop.f32.mrb[0].mxu0
      %v1793 = vadd.f32 0.0, %v1792
      %v1794 = vpop.f32.mrb[0].mxu0
      %1795 = vmatprep.mubr.f32.mxu0 0.0
      %1796 = vmatmul.mubr.f32.gmra.mrb[0].mxu0 %v418
      %v1797 = vpop.f32.mrb[0].mxu0
      %v1798 = vadd.f32 0.0, %v1797
      %v1799 = vpop.f32.mrb[0].mxu0
      %1800 = vmatprep.mubr.f32.mxu0 0.0
      %1801 = vmatmul.mubr.f32.gmra.mrb[0].mxu0 %v420
      %v1802 = vpop.f32.mrb[0].mxu0
      %v1803 = vadd.f32 0.0, %v1802
      %v1804 = vpop.f32.mrb[0].mxu0
      %1805 = vmatprep.mubr.f32.mxu0 0.0
      %1806 = vmatmul.mubr.f32.gmra.mrb[0].mxu0 %v422
      %v1807 = vpop.f32.mrb[0].mxu0
      %v1808 = vadd.f32 0.0, %v1807
      %v1809 = vpop.f32.mrb[0].mxu0
      %1810 = vmatprep.mubr.f32.mxu0 0.0
      %1811 = vmatmul.mubr.f32.gmra.mrb[0].mxu0 %v424
      %v1812 = vpop.f32.mrb[0].mxu0
      %v1813 = vadd.f32 0.0, %v1812
      %v1814 = vpop.f32.mrb[0].mxu0
      %1815 = vmatprep.mubr.f32.mxu0 0.0
      %1816 = vmatmul.mubr.f32.gmra.mrb[0].mxu0 %v426
      %v1817 = vpop.f32.mrb[0].mxu0
      %v1818 = vadd.f32 0.0, %v1817
      %v1819 = vpop.f32.mrb[0].mxu0
      %1820 = vmatprep.mubr.f32.mxu0 0.0
      %1821 = vmatmul.mubr.f32.gmra.mrb[0].mxu0 %v428
      %v1822 = vpop.f32.mrb[0].mxu0
      %v1823 = vadd.f32 0.0, %v1822
      %v1824 = vpop.f32.mrb[0].mxu0
      %1825 = vmatprep.mubr.f32.mxu0 0.0
      %1826 = vmatmul.mubr.f32.gmra.mrb[0].mxu0 %v430
      %v1827 = vpop.f32.mrb[0].mxu0
      %v1828 = vadd.f32 0.0, %v1827
      %v1829 = vpop.f32.mrb[0].mxu0
      %1830 = vmatprep.mubr.f32.mxu0 0.0
      %1831 = vmatmul.mubr.f32.gmra.mrb[0].mxu0 %v432
      %v1832 = vpop.f32.mrb[0].mxu0
      %v1833 = vadd.f32 0.0, %v1832
      %v1834 = vpop.f32.mrb[0].mxu0
      %1835 = vmatprep.mubr.f32.mxu0 0.0
      %1836 = vmatmul.mubr.f32.gmra.mrb[0].mxu0 %v434
      %v1837 = vpop.f32.mrb[0].mxu0
      %v1838 = vadd.f32 0.0, %v1837
      %v1839 = vpop.f32.mrb[0].mxu0
      %1840 = vmatprep.mubr.f32.mxu0 0.0
      %1841 = vmatmul.mubr.f32.gmra.mrb[0].mxu0 %v436
      %v1842 = vpop.f32.mrb[0].mxu0
      %v1843 = vadd.f32 0.0, %v1842
      %v1844 = vpop.f32.mrb[0].mxu0
      %1845 = vmatprep.mubr.f32.mxu0 0.0
      %1846 = vmatmul.mubr.f32.gmra.mrb[0].mxu0 %v438
      %v1847 = vpop.f32.mrb[0].mxu0
      %v1848 = vadd.f32 0.0, %v1847
      %v1849 = vpop.f32.mrb[0].mxu0
      %1850 = vmatprep.mubr.f32.mxu0 0.0
      %1851 = vmatmul.mubr.f32.gmra.mrb[0].mxu0 %v440
      %v1852 = vpop.f32.mrb[0].mxu0
      %v1853 = vadd.f32 0.0, %v1852
      %v1854 = vpop.f32.mrb[0].mxu0
      %1855 = vmatprep.mubr.f32.mxu0 0.0
      %1856 = vmatmul.mubr.f32.gmra.mrb[0].mxu0 %v442
      %v1857 = vpop.f32.mrb[0].mxu0
      %v1858 = vadd.f32 0.0, %v1857
      %v1859 = vpop.f32.mrb[0].mxu0
      %1860 = vmatprep.mubr.f32.mxu0 0.0
      %1861 = vmatmul.mubr.f32.gmra.mrb[0].mxu0 %v444
      %v1862 = vpop.f32.mrb[0].mxu0
      %v1863 = vadd.f32 0.0, %v1862
      %v1864 = vpop.f32.mrb[0].mxu0
      %1865 = vmatprep.mubr.f32.mxu0 0.0
      %1866 = vmatmul.mubr.f32.gmra.mrb[0].mxu0 %v446
      %v1867 = vpop.f32.mrb[0].mxu0
      %v1868 = vadd.f32 0.0, %v1867
      %v1869 = vpop.f32.mrb[0].mxu0
      %1870 = vmatprep.mubr.f32.mxu0 0.0
      %1871 = vmatmul.mubr.f32.gmra.mrb[0].mxu0 %v448
      %v1872 = vpop.f32.mrb[0].mxu0
      %v1873 = vadd.f32 0.0, %v1872
      %v1874 = vpop.f32.mrb[0].mxu0
      %1875 = vmatprep.mubr.f32.mxu0 0.0
      %1876 = vmatmul.mubr.f32.gmra.mrb[0].mxu0 %v1654
      %v1877 = vpop.f32.mrb[0].mxu0
      %v1878 = vadd.f32 0.0, %v1877
      %v1879 = vpop.f32.mrb[0].mxu0
      %1880 = vmatprep.mubr.f32.mxu0 0.0
      %1881 = vmatmul.mubr.f32.gmra.mrb[0].mxu0 %v1656
      %v1882 = vpop.f32.mrb[0].mxu0
      %v1883 = vadd.f32 0.0, %v1882
      %v1884 = vpop.f32.mrb[0].mxu0
      %1885 = vdwg.mxu0
      %v1886 = vadd.f32 %v1614, %v1728
      %v1887 = vadd.f32 %v1615, %v1733
      %v1888 = vadd.f32 %v1616, %v1738
      %v1889 = vadd.f32 %v1617, %v1743
      %v1890 = vadd.f32 %v1618, %v1748
      %v1891 = vadd.f32 %v1619, %v1753
      %v1892 = vadd.f32 %v1620, %v1758
      %v1893 = vadd.f32 %v1621, %v1763
      %v1894 = vadd.f32 %v1622, %v1768
      %v1895 = vadd.f32 %v1623, %v1773
      %v1896 = vadd.f32 %v1624, %v1778
      %v1897 = vadd.f32 %v1625, %v1783
      %v1898 = vadd.f32 %v1626, %v1788
      %v1899 = vadd.f32 %v1627, %v1793
      %v1900 = vadd.f32 %v1628, %v1798
      %v1901 = vadd.f32 %v1629, %v1803
      %v1902 = vadd.f32 %v1630, %v1808
      %v1903 = vadd.f32 %v1631, %v1813
      %v1904 = vadd.f32 %v1632, %v1818
      %v1905 = vadd.f32 %v1633, %v1823
      %v1906 = vadd.f32 %v1634, %v1828
      %v1907 = vadd.f32 %v1635, %v1833
      %v1908 = vadd.f32 %v1636, %v1838
      %v1909 = vadd.f32 %v1637, %v1843
      %v1910 = vadd.f32 %v1638, %v1848
      %v1911 = vadd.f32 %v1639, %v1853
      %v1912 = vadd.f32 %v1640, %v1858
      %v1913 = vadd.f32 %v1641, %v1863
      %v1914 = vadd.f32 %v1642, %v1868
      %v1915 = vadd.f32 %v1643, %v1873
      %v1916 = vadd.f32 %v1644, %v1878
      %v1917 = vadd.f32 %v1645, %v1883
      %v1918 = vrot.slane %v247, 2
      %v1919 = vrot.slane %v248, 2
      %v1920 = vsel %vm971, %v1918, %v1919
      %v1921 = vrot.slane %v249, 2
      %v1922 = vsel %vm971, %v1919, %v1921
      %s1923 = scalar_lea.vmem %s1, 20
      %v1924 = vld [vmem:[%s1923] sm:$0xf]
      %v1925 = vsel %vm385, %v1920, 0
      %v1927 = vsel %vm385, %v1922, 0
      %v1930 = vsel %vm450, %v1924, 0
      %1932 = vmatprep.subr.mxu0 0.0
      %1933 = vmatpush1.msra.mxu0 %v1930
      %1934 = vmatprep.subr.mxu0 0.0
      %1935 = vmatpush1.msra.mxu0 0.0
      %1936 = vmatprep.subr.mxu0 0.0
      %1937 = vmatpush1.msra.mxu0 0.0
      %1938 = vmatprep.subr.mxu0 0.0
      %1939 = vmatpush1.msra.mxu0 0.0
      %1940 = vmatprep.subr.mxu0 0.0
      %1941 = vmatpush1.msra.mxu0 0.0
      %1942 = vmatprep.subr.mxu0 0.0
      %1943 = vmatpush1.msra.mxu0 0.0
      %1944 = vmatprep.subr.mxu0 0.0
      %1945 = vmatpush1.msra.mxu0 0.0
      %1946 = vmatprep.subr.mxu0 0.0
      %1947 = vmatpush1.msra.mxu0 0.0
      %1948 = vmatprep.subr.mxu0 0.0
      %1949 = vmatpush1.msra.mxu0 0.0
      %1950 = vmatprep.subr.mxu0 0.0
      %1951 = vmatpush1.msra.mxu0 0.0
      %1952 = vmatprep.subr.mxu0 0.0
      %1953 = vmatpush1.msra.mxu0 0.0
      %1954 = vmatprep.subr.mxu0 0.0
      %1955 = vmatpush1.msra.mxu0 0.0
      %1956 = vmatprep.subr.mxu0 0.0
      %1957 = vmatpush1.msra.mxu0 0.0
      %1958 = vmatprep.subr.mxu0 0.0
      %1959 = vmatpush1.msra.mxu0 0.0
      %1960 = vmatprep.subr.mxu0 0.0
      %1961 = vmatpush1.msra.mxu0 0.0
      %1962 = vmatprep.subr.mxu0 0.0
      %1963 = vmatpush1.msra.mxu0 0.0
      %1964 = vmatprep.subr.mxu0 0.0
      %1965 = vmatpush1.msra.mxu0 0.0
      %1966 = vmatprep.subr.mxu0 0.0
      %1967 = vmatpush1.msra.mxu0 0.0
      %1968 = vmatprep.subr.mxu0 0.0
      %1969 = vmatpush1.msra.mxu0 0.0
      %1970 = vmatprep.subr.mxu0 0.0
      %1971 = vmatpush1.msra.mxu0 0.0
      %1972 = vmatprep.subr.mxu0 0.0
      %1973 = vmatpush1.msra.mxu0 0.0
      %1974 = vmatprep.subr.mxu0 0.0
      %1975 = vmatpush1.msra.mxu0 0.0
      %1976 = vmatprep.subr.mxu0 0.0
      %1977 = vmatpush1.msra.mxu0 0.0
      %1978 = vmatprep.subr.mxu0 0.0
      %1979 = vmatpush1.msra.mxu0 0.0
      %1980 = vmatprep.subr.mxu0 0.0
      %1981 = vmatpush1.msra.mxu0 0.0
      %1982 = vmatprep.subr.mxu0 0.0
      %1983 = vmatpush1.msra.mxu0 0.0
      %1984 = vmatprep.subr.mxu0 0.0
      %1985 = vmatpush1.msra.mxu0 0.0
      %1986 = vmatprep.subr.mxu0 0.0
      %1987 = vmatpush1.msra.mxu0 0.0
      %1988 = vmatprep.subr.mxu0 0.0
      %1989 = vmatpush1.msra.mxu0 0.0
      %1990 = vmatprep.subr.mxu0 0.0
      %1991 = vmatpush1.msra.mxu0 0.0
      %1992 = vmatprep.subr.mxu0 0.0
      %1993 = vmatpush1.msra.mxu0 0.0
      %1994 = vmatprep.subr.mxu0 0.0
      %1995 = vmatpush1.msra.mxu0 0.0
      %1996 = vmatprep.mubr.f32.mxu0 0.0
      %1997 = vmatmul.mubr.f32.gmra.mrb[0].mxu0 %v1058
      %v1998 = vpop.f32.mrb[0].mxu0
      %v1999 = vadd.f32 0.0, %v1998
      %v2000 = vpop.f32.mrb[0].mxu0
      %2001 = vmatprep.mubr.f32.mxu0 0.0
      %2002 = vmatmul.mubr.f32.gmra.mrb[0].mxu0 %v1060
      %v2003 = vpop.f32.mrb[0].mxu0
      %v2004 = vadd.f32 0.0, %v2003
      %v2005 = vpop.f32.mrb[0].mxu0
      %2006 = vmatprep.mubr.f32.mxu0 0.0
      %2007 = vmatmul.mubr.f32.gmra.mrb[0].mxu0 %v1062
      %v2008 = vpop.f32.mrb[0].mxu0
      %v2009 = vadd.f32 0.0, %v2008
      %v2010 = vpop.f32.mrb[0].mxu0
      %2011 = vmatprep.mubr.f32.mxu0 0.0
      %2012 = vmatmul.mubr.f32.gmra.mrb[0].mxu0 %v1064
      %v2013 = vpop.f32.mrb[0].mxu0
      %v2014 = vadd.f32 0.0, %v2013
      %v2015 = vpop.f32.mrb[0].mxu0
      %2016 = vmatprep.mubr.f32.mxu0 0.0
      %2017 = vmatmul.mubr.f32.gmra.mrb[0].mxu0 %v1066
      %v2018 = vpop.f32.mrb[0].mxu0
      %v2019 = vadd.f32 0.0, %v2018
      %v2020 = vpop.f32.mrb[0].mxu0
      %2021 = vmatprep.mubr.f32.mxu0 0.0
      %2022 = vmatmul.mubr.f32.gmra.mrb[0].mxu0 %v1068
      %v2023 = vpop.f32.mrb[0].mxu0
      %v2024 = vadd.f32 0.0, %v2023
      %v2025 = vpop.f32.mrb[0].mxu0
      %2026 = vmatprep.mubr.f32.mxu0 0.0
      %2027 = vmatmul.mubr.f32.gmra.mrb[0].mxu0 %v1070
      %v2028 = vpop.f32.mrb[0].mxu0
      %v2029 = vadd.f32 0.0, %v2028
      %v2030 = vpop.f32.mrb[0].mxu0
      %2031 = vmatprep.mubr.f32.mxu0 0.0
      %2032 = vmatmul.mubr.f32.gmra.mrb[0].mxu0 %v1072
      %v2033 = vpop.f32.mrb[0].mxu0
      %v2034 = vadd.f32 0.0, %v2033
      %v2035 = vpop.f32.mrb[0].mxu0
      %2036 = vmatprep.mubr.f32.mxu0 0.0
      %2037 = vmatmul.mubr.f32.gmra.mrb[0].mxu0 %v1074
      %v2038 = vpop.f32.mrb[0].mxu0
      %v2039 = vadd.f32 0.0, %v2038
      %v2040 = vpop.f32.mrb[0].mxu0
      %2041 = vmatprep.mubr.f32.mxu0 0.0
      %2042 = vmatmul.mubr.f32.gmra.mrb[0].mxu0 %v1076
      %v2043 = vpop.f32.mrb[0].mxu0
      %v2044 = vadd.f32 0.0, %v2043
      %v2045 = vpop.f32.mrb[0].mxu0
      %2046 = vmatprep.mubr.f32.mxu0 0.0
      %2047 = vmatmul.mubr.f32.gmra.mrb[0].mxu0 %v1078
      %v2048 = vpop.f32.mrb[0].mxu0
      %v2049 = vadd.f32 0.0, %v2048
      %v2050 = vpop.f32.mrb[0].mxu0
      %2051 = vmatprep.mubr.f32.mxu0 0.0
      %2052 = vmatmul.mubr.f32.gmra.mrb[0].mxu0 %v1080
      %v2053 = vpop.f32.mrb[0].mxu0
      %v2054 = vadd.f32 0.0, %v2053
      %v2055 = vpop.f32.mrb[0].mxu0
      %2056 = vmatprep.mubr.f32.mxu0 0.0
      %2057 = vmatmul.mubr.f32.gmra.mrb[0].mxu0 %v1082
      %v2058 = vpop.f32.mrb[0].mxu0
      %v2059 = vadd.f32 0.0, %v2058
      %v2060 = vpop.f32.mrb[0].mxu0
      %2061 = vmatprep.mubr.f32.mxu0 0.0
      %2062 = vmatmul.mubr.f32.gmra.mrb[0].mxu0 %v1084
      %v2063 = vpop.f32.mrb[0].mxu0
      %v2064 = vadd.f32 0.0, %v2063
      %v2065 = vpop.f32.mrb[0].mxu0
      %2066 = vmatprep.mubr.f32.mxu0 0.0
      %2067 = vmatmul.mubr.f32.gmra.mrb[0].mxu0 %v1086
      %v2068 = vpop.f32.mrb[0].mxu0
      %v2069 = vadd.f32 0.0, %v2068
      %v2070 = vpop.f32.mrb[0].mxu0
      %2071 = vmatprep.mubr.f32.mxu0 0.0
      %2072 = vmatmul.mubr.f32.gmra.mrb[0].mxu0 %v1088
      %v2073 = vpop.f32.mrb[0].mxu0
      %v2074 = vadd.f32 0.0, %v2073
      %v2075 = vpop.f32.mrb[0].mxu0
      %2076 = vmatprep.mubr.f32.mxu0 0.0
      %2077 = vmatmul.mubr.f32.gmra.mrb[0].mxu0 %v1090
      %v2078 = vpop.f32.mrb[0].mxu0
      %v2079 = vadd.f32 0.0, %v2078
      %v2080 = vpop.f32.mrb[0].mxu0
      %2081 = vmatprep.mubr.f32.mxu0 0.0
      %2082 = vmatmul.mubr.f32.gmra.mrb[0].mxu0 %v1092
      %v2083 = vpop.f32.mrb[0].mxu0
      %v2084 = vadd.f32 0.0, %v2083
      %v2085 = vpop.f32.mrb[0].mxu0
      %2086 = vmatprep.mubr.f32.mxu0 0.0
      %2087 = vmatmul.mubr.f32.gmra.mrb[0].mxu0 %v1094
      %v2088 = vpop.f32.mrb[0].mxu0
      %v2089 = vadd.f32 0.0, %v2088
      %v2090 = vpop.f32.mrb[0].mxu0
      %2091 = vmatprep.mubr.f32.mxu0 0.0
      %2092 = vmatmul.mubr.f32.gmra.mrb[0].mxu0 %v1096
      %v2093 = vpop.f32.mrb[0].mxu0
      %v2094 = vadd.f32 0.0, %v2093
      %v2095 = vpop.f32.mrb[0].mxu0
      %2096 = vmatprep.mubr.f32.mxu0 0.0
      %2097 = vmatmul.mubr.f32.gmra.mrb[0].mxu0 %v1098
      %v2098 = vpop.f32.mrb[0].mxu0
      %v2099 = vadd.f32 0.0, %v2098
      %v2100 = vpop.f32.mrb[0].mxu0
      %2101 = vmatprep.mubr.f32.mxu0 0.0
      %2102 = vmatmul.mubr.f32.gmra.mrb[0].mxu0 %v1100
      %v2103 = vpop.f32.mrb[0].mxu0
      %v2104 = vadd.f32 0.0, %v2103
      %v2105 = vpop.f32.mrb[0].mxu0
      %2106 = vmatprep.mubr.f32.mxu0 0.0
      %2107 = vmatmul.mubr.f32.gmra.mrb[0].mxu0 %v1102
      %v2108 = vpop.f32.mrb[0].mxu0
      %v2109 = vadd.f32 0.0, %v2108
      %v2110 = vpop.f32.mrb[0].mxu0
      %2111 = vmatprep.mubr.f32.mxu0 0.0
      %2112 = vmatmul.mubr.f32.gmra.mrb[0].mxu0 %v1104
      %v2113 = vpop.f32.mrb[0].mxu0
      %v2114 = vadd.f32 0.0, %v2113
      %v2115 = vpop.f32.mrb[0].mxu0
      %2116 = vmatprep.mubr.f32.mxu0 0.0
      %2117 = vmatmul.mubr.f32.gmra.mrb[0].mxu0 %v1106
      %v2118 = vpop.f32.mrb[0].mxu0
      %v2119 = vadd.f32 0.0, %v2118
      %v2120 = vpop.f32.mrb[0].mxu0
      %2121 = vmatprep.mubr.f32.mxu0 0.0
      %2122 = vmatmul.mubr.f32.gmra.mrb[0].mxu0 %v1108
      %v2123 = vpop.f32.mrb[0].mxu0
      %v2124 = vadd.f32 0.0, %v2123
      %v2125 = vpop.f32.mrb[0].mxu0
      %2126 = vmatprep.mubr.f32.mxu0 0.0
      %2127 = vmatmul.mubr.f32.gmra.mrb[0].mxu0 %v1110
      %v2128 = vpop.f32.mrb[0].mxu0
      %v2129 = vadd.f32 0.0, %v2128
      %v2130 = vpop.f32.mrb[0].mxu0
      %2131 = vmatprep.mubr.f32.mxu0 0.0
      %2132 = vmatmul.mubr.f32.gmra.mrb[0].mxu0 %v1112
      %v2133 = vpop.f32.mrb[0].mxu0
      %v2134 = vadd.f32 0.0, %v2133
      %v2135 = vpop.f32.mrb[0].mxu0
      %2136 = vmatprep.mubr.f32.mxu0 0.0
      %2137 = vmatmul.mubr.f32.gmra.mrb[0].mxu0 %v1114
      %v2138 = vpop.f32.mrb[0].mxu0
      %v2139 = vadd.f32 0.0, %v2138
      %v2140 = vpop.f32.mrb[0].mxu0
      %2141 = vmatprep.mubr.f32.mxu0 0.0
      %2142 = vmatmul.mubr.f32.gmra.mrb[0].mxu0 %v1116
      %v2143 = vpop.f32.mrb[0].mxu0
      %v2144 = vadd.f32 0.0, %v2143
      %v2145 = vpop.f32.mrb[0].mxu0
      %2146 = vmatprep.mubr.f32.mxu0 0.0
      %2147 = vmatmul.mubr.f32.gmra.mrb[0].mxu0 %v1925
      %v2148 = vpop.f32.mrb[0].mxu0
      %v2149 = vadd.f32 0.0, %v2148
      %v2150 = vpop.f32.mrb[0].mxu0
      %2151 = vmatprep.mubr.f32.mxu0 0.0
      %2152 = vmatmul.mubr.f32.gmra.mrb[0].mxu0 %v1927
      %v2153 = vpop.f32.mrb[0].mxu0
      %v2154 = vadd.f32 0.0, %v2153
      %v2155 = vpop.f32.mrb[0].mxu0
      %2156 = vdwg.mxu0
      %v2157 = vadd.f32 %v1886, %v1999
      %v2158 = vadd.f32 %v1887, %v2004
      %v2159 = vadd.f32 %v1888, %v2009
      %v2160 = vadd.f32 %v1889, %v2014
      %v2161 = vadd.f32 %v1890, %v2019
      %v2162 = vadd.f32 %v1891, %v2024
      %v2163 = vadd.f32 %v1892, %v2029
      %v2164 = vadd.f32 %v1893, %v2034
      %v2165 = vadd.f32 %v1894, %v2039
      %v2166 = vadd.f32 %v1895, %v2044
      %v2167 = vadd.f32 %v1896, %v2049
      %v2168 = vadd.f32 %v1897, %v2054
      %v2169 = vadd.f32 %v1898, %v2059
      %v2170 = vadd.f32 %v1899, %v2064
      %v2171 = vadd.f32 %v1900, %v2069
      %v2172 = vadd.f32 %v1901, %v2074
      %v2173 = vadd.f32 %v1902, %v2079
      %v2174 = vadd.f32 %v1903, %v2084
      %v2175 = vadd.f32 %v1904, %v2089
      %v2176 = vadd.f32 %v1905, %v2094
      %v2177 = vadd.f32 %v1906, %v2099
      %v2178 = vadd.f32 %v1907, %v2104
      %v2179 = vadd.f32 %v1908, %v2109
      %v2180 = vadd.f32 %v1909, %v2114
      %v2181 = vadd.f32 %v1910, %v2119
      %v2182 = vadd.f32 %v1911, %v2124
      %v2183 = vadd.f32 %v1912, %v2129
      %v2184 = vadd.f32 %v1913, %v2134
      %v2185 = vadd.f32 %v1914, %v2139
      %v2186 = vadd.f32 %v1915, %v2144
      %v2187 = vadd.f32 %v1916, %v2149
      %v2188 = vadd.f32 %v1917, %v2154
      %s2189 = scalar_lea.vmem %s1, 24
      %v2190 = vld [vmem:[%s2189] sm:$0xf]
      %v2192 = vsel %vm385, %v250, 0
      %v2195 = vsel %vm385, %v251, 0
      %v2198 = vsel %vm450, %v2190, 0
      %2200 = vmatprep.subr.mxu0 0.0
      %2201 = vmatpush1.msra.mxu0 %v2198
      %2202 = vmatprep.subr.mxu0 0.0
      %2203 = vmatpush1.msra.mxu0 0.0
      %2204 = vmatprep.subr.mxu0 0.0
      %2205 = vmatpush1.msra.mxu0 0.0
      %2206 = vmatprep.subr.mxu0 0.0
      %2207 = vmatpush1.msra.mxu0 0.0
      %2208 = vmatprep.subr.mxu0 0.0
      %2209 = vmatpush1.msra.mxu0 0.0
      %2210 = vmatprep.subr.mxu0 0.0
      %2211 = vmatpush1.msra.mxu0 0.0
      %2212 = vmatprep.subr.mxu0 0.0
      %2213 = vmatpush1.msra.mxu0 0.0
      %2214 = vmatprep.subr.mxu0 0.0
      %2215 = vmatpush1.msra.mxu0 0.0
      %2216 = vmatprep.subr.mxu0 0.0
      %2217 = vmatpush1.msra.mxu0 0.0
      %2218 = vmatprep.subr.mxu0 0.0
      %2219 = vmatpush1.msra.mxu0 0.0
      %2220 = vmatprep.subr.mxu0 0.0
      %2221 = vmatpush1.msra.mxu0 0.0
      %2222 = vmatprep.subr.mxu0 0.0
      %2223 = vmatpush1.msra.mxu0 0.0
      %2224 = vmatprep.subr.mxu0 0.0
      %2225 = vmatpush1.msra.mxu0 0.0
      %2226 = vmatprep.subr.mxu0 0.0
      %2227 = vmatpush1.msra.mxu0 0.0
      %2228 = vmatprep.subr.mxu0 0.0
      %2229 = vmatpush1.msra.mxu0 0.0
      %2230 = vmatprep.subr.mxu0 0.0
      %2231 = vmatpush1.msra.mxu0 0.0
      %2232 = vmatprep.subr.mxu0 0.0
      %2233 = vmatpush1.msra.mxu0 0.0
      %2234 = vmatprep.subr.mxu0 0.0
      %2235 = vmatpush1.msra.mxu0 0.0
      %2236 = vmatprep.subr.mxu0 0.0
      %2237 = vmatpush1.msra.mxu0 0.0
      %2238 = vmatprep.subr.mxu0 0.0
      %2239 = vmatpush1.msra.mxu0 0.0
      %2240 = vmatprep.subr.mxu0 0.0
      %2241 = vmatpush1.msra.mxu0 0.0
      %2242 = vmatprep.subr.mxu0 0.0
      %2243 = vmatpush1.msra.mxu0 0.0
      %2244 = vmatprep.subr.mxu0 0.0
      %2245 = vmatpush1.msra.mxu0 0.0
      %2246 = vmatprep.subr.mxu0 0.0
      %2247 = vmatpush1.msra.mxu0 0.0
      %2248 = vmatprep.subr.mxu0 0.0
      %2249 = vmatpush1.msra.mxu0 0.0
      %2250 = vmatprep.subr.mxu0 0.0
      %2251 = vmatpush1.msra.mxu0 0.0
      %2252 = vmatprep.subr.mxu0 0.0
      %2253 = vmatpush1.msra.mxu0 0.0
      %2254 = vmatprep.subr.mxu0 0.0
      %2255 = vmatpush1.msra.mxu0 0.0
      %2256 = vmatprep.subr.mxu0 0.0
      %2257 = vmatpush1.msra.mxu0 0.0
      %2258 = vmatprep.subr.mxu0 0.0
      %2259 = vmatpush1.msra.mxu0 0.0
      %2260 = vmatprep.subr.mxu0 0.0
      %2261 = vmatpush1.msra.mxu0 0.0
      %2262 = vmatprep.subr.mxu0 0.0
      %2263 = vmatpush1.msra.mxu0 0.0
      %2264 = vmatprep.mubr.f32.mxu0 0.0
      %2265 = vmatmul.mubr.f32.gmra.mrb[0].mxu0 %v687
      %v2266 = vpop.f32.mrb[0].mxu0
      %v2267 = vadd.f32 0.0, %v2266
      %v2268 = vpop.f32.mrb[0].mxu0
      %2269 = vmatprep.mubr.f32.mxu0 0.0
      %2270 = vmatmul.mubr.f32.gmra.mrb[0].mxu0 %v689
      %v2271 = vpop.f32.mrb[0].mxu0
      %v2272 = vadd.f32 0.0, %v2271
      %v2273 = vpop.f32.mrb[0].mxu0
      %2274 = vmatprep.mubr.f32.mxu0 0.0
      %2275 = vmatmul.mubr.f32.gmra.mrb[0].mxu0 %v691
      %v2276 = vpop.f32.mrb[0].mxu0
      %v2277 = vadd.f32 0.0, %v2276
      %v2278 = vpop.f32.mrb[0].mxu0
      %2279 = vmatprep.mubr.f32.mxu0 0.0
      %2280 = vmatmul.mubr.f32.gmra.mrb[0].mxu0 %v693
      %v2281 = vpop.f32.mrb[0].mxu0
      %v2282 = vadd.f32 0.0, %v2281
      %v2283 = vpop.f32.mrb[0].mxu0
      %2284 = vmatprep.mubr.f32.mxu0 0.0
      %2285 = vmatmul.mubr.f32.gmra.mrb[0].mxu0 %v695
      %v2286 = vpop.f32.mrb[0].mxu0
      %v2287 = vadd.f32 0.0, %v2286
      %v2288 = vpop.f32.mrb[0].mxu0
      %2289 = vmatprep.mubr.f32.mxu0 0.0
      %2290 = vmatmul.mubr.f32.gmra.mrb[0].mxu0 %v697
      %v2291 = vpop.f32.mrb[0].mxu0
      %v2292 = vadd.f32 0.0, %v2291
      %v2293 = vpop.f32.mrb[0].mxu0
      %2294 = vmatprep.mubr.f32.mxu0 0.0
      %2295 = vmatmul.mubr.f32.gmra.mrb[0].mxu0 %v699
      %v2296 = vpop.f32.mrb[0].mxu0
      %v2297 = vadd.f32 0.0, %v2296
      %v2298 = vpop.f32.mrb[0].mxu0
      %2299 = vmatprep.mubr.f32.mxu0 0.0
      %2300 = vmatmul.mubr.f32.gmra.mrb[0].mxu0 %v701
      %v2301 = vpop.f32.mrb[0].mxu0
      %v2302 = vadd.f32 0.0, %v2301
      %v2303 = vpop.f32.mrb[0].mxu0
      %2304 = vmatprep.mubr.f32.mxu0 0.0
      %2305 = vmatmul.mubr.f32.gmra.mrb[0].mxu0 %v703
      %v2306 = vpop.f32.mrb[0].mxu0
      %v2307 = vadd.f32 0.0, %v2306
      %v2308 = vpop.f32.mrb[0].mxu0
      %2309 = vmatprep.mubr.f32.mxu0 0.0
      %2310 = vmatmul.mubr.f32.gmra.mrb[0].mxu0 %v705
      %v2311 = vpop.f32.mrb[0].mxu0
      %v2312 = vadd.f32 0.0, %v2311
      %v2313 = vpop.f32.mrb[0].mxu0
      %2314 = vmatprep.mubr.f32.mxu0 0.0
      %2315 = vmatmul.mubr.f32.gmra.mrb[0].mxu0 %v707
      %v2316 = vpop.f32.mrb[0].mxu0
      %v2317 = vadd.f32 0.0, %v2316
      %v2318 = vpop.f32.mrb[0].mxu0
      %2319 = vmatprep.mubr.f32.mxu0 0.0
      %2320 = vmatmul.mubr.f32.gmra.mrb[0].mxu0 %v709
      %v2321 = vpop.f32.mrb[0].mxu0
      %v2322 = vadd.f32 0.0, %v2321
      %v2323 = vpop.f32.mrb[0].mxu0
      %2324 = vmatprep.mubr.f32.mxu0 0.0
      %2325 = vmatmul.mubr.f32.gmra.mrb[0].mxu0 %v711
      %v2326 = vpop.f32.mrb[0].mxu0
      %v2327 = vadd.f32 0.0, %v2326
      %v2328 = vpop.f32.mrb[0].mxu0
      %2329 = vmatprep.mubr.f32.mxu0 0.0
      %2330 = vmatmul.mubr.f32.gmra.mrb[0].mxu0 %v713
      %v2331 = vpop.f32.mrb[0].mxu0
      %v2332 = vadd.f32 0.0, %v2331
      %v2333 = vpop.f32.mrb[0].mxu0
      %2334 = vmatprep.mubr.f32.mxu0 0.0
      %2335 = vmatmul.mubr.f32.gmra.mrb[0].mxu0 %v715
      %v2336 = vpop.f32.mrb[0].mxu0
      %v2337 = vadd.f32 0.0, %v2336
      %v2338 = vpop.f32.mrb[0].mxu0
      %2339 = vmatprep.mubr.f32.mxu0 0.0
      %2340 = vmatmul.mubr.f32.gmra.mrb[0].mxu0 %v717
      %v2341 = vpop.f32.mrb[0].mxu0
      %v2342 = vadd.f32 0.0, %v2341
      %v2343 = vpop.f32.mrb[0].mxu0
      %2344 = vmatprep.mubr.f32.mxu0 0.0
      %2345 = vmatmul.mubr.f32.gmra.mrb[0].mxu0 %v719
      %v2346 = vpop.f32.mrb[0].mxu0
      %v2347 = vadd.f32 0.0, %v2346
      %v2348 = vpop.f32.mrb[0].mxu0
      %2349 = vmatprep.mubr.f32.mxu0 0.0
      %2350 = vmatmul.mubr.f32.gmra.mrb[0].mxu0 %v721
      %v2351 = vpop.f32.mrb[0].mxu0
      %v2352 = vadd.f32 0.0, %v2351
      %v2353 = vpop.f32.mrb[0].mxu0
      %2354 = vmatprep.mubr.f32.mxu0 0.0
      %2355 = vmatmul.mubr.f32.gmra.mrb[0].mxu0 %v723
      %v2356 = vpop.f32.mrb[0].mxu0
      %v2357 = vadd.f32 0.0, %v2356
      %v2358 = vpop.f32.mrb[0].mxu0
      %2359 = vmatprep.mubr.f32.mxu0 0.0
      %2360 = vmatmul.mubr.f32.gmra.mrb[0].mxu0 %v725
      %v2361 = vpop.f32.mrb[0].mxu0
      %v2362 = vadd.f32 0.0, %v2361
      %v2363 = vpop.f32.mrb[0].mxu0
      %2364 = vmatprep.mubr.f32.mxu0 0.0
      %2365 = vmatmul.mubr.f32.gmra.mrb[0].mxu0 %v727
      %v2366 = vpop.f32.mrb[0].mxu0
      %v2367 = vadd.f32 0.0, %v2366
      %v2368 = vpop.f32.mrb[0].mxu0
      %2369 = vmatprep.mubr.f32.mxu0 0.0
      %2370 = vmatmul.mubr.f32.gmra.mrb[0].mxu0 %v729
      %v2371 = vpop.f32.mrb[0].mxu0
      %v2372 = vadd.f32 0.0, %v2371
      %v2373 = vpop.f32.mrb[0].mxu0
      %2374 = vmatprep.mubr.f32.mxu0 0.0
      %2375 = vmatmul.mubr.f32.gmra.mrb[0].mxu0 %v731
      %v2376 = vpop.f32.mrb[0].mxu0
      %v2377 = vadd.f32 0.0, %v2376
      %v2378 = vpop.f32.mrb[0].mxu0
      %2379 = vmatprep.mubr.f32.mxu0 0.0
      %2380 = vmatmul.mubr.f32.gmra.mrb[0].mxu0 %v733
      %v2381 = vpop.f32.mrb[0].mxu0
      %v2382 = vadd.f32 0.0, %v2381
      %v2383 = vpop.f32.mrb[0].mxu0
      %2384 = vmatprep.mubr.f32.mxu0 0.0
      %2385 = vmatmul.mubr.f32.gmra.mrb[0].mxu0 %v735
      %v2386 = vpop.f32.mrb[0].mxu0
      %v2387 = vadd.f32 0.0, %v2386
      %v2388 = vpop.f32.mrb[0].mxu0
      %2389 = vmatprep.mubr.f32.mxu0 0.0
      %2390 = vmatmul.mubr.f32.gmra.mrb[0].mxu0 %v737
      %v2391 = vpop.f32.mrb[0].mxu0
      %v2392 = vadd.f32 0.0, %v2391
      %v2393 = vpop.f32.mrb[0].mxu0
      %2394 = vmatprep.mubr.f32.mxu0 0.0
      %2395 = vmatmul.mubr.f32.gmra.mrb[0].mxu0 %v739
      %v2396 = vpop.f32.mrb[0].mxu0
      %v2397 = vadd.f32 0.0, %v2396
      %v2398 = vpop.f32.mrb[0].mxu0
      %2399 = vmatprep.mubr.f32.mxu0 0.0
      %2400 = vmatmul.mubr.f32.gmra.mrb[0].mxu0 %v741
      %v2401 = vpop.f32.mrb[0].mxu0
      %v2402 = vadd.f32 0.0, %v2401
      %v2403 = vpop.f32.mrb[0].mxu0
      %2404 = vmatprep.mubr.f32.mxu0 0.0
      %2405 = vmatmul.mubr.f32.gmra.mrb[0].mxu0 %v1381
      %v2406 = vpop.f32.mrb[0].mxu0
      %v2407 = vadd.f32 0.0, %v2406
      %v2408 = vpop.f32.mrb[0].mxu0
      %2409 = vmatprep.mubr.f32.mxu0 0.0
      %2410 = vmatmul.mubr.f32.gmra.mrb[0].mxu0 %v1384
      %v2411 = vpop.f32.mrb[0].mxu0
      %v2412 = vadd.f32 0.0, %v2411
      %v2413 = vpop.f32.mrb[0].mxu0
      %2414 = vmatprep.mubr.f32.mxu0 0.0
      %2415 = vmatmul.mubr.f32.gmra.mrb[0].mxu0 %v2192
      %v2416 = vpop.f32.mrb[0].mxu0
      %v2417 = vadd.f32 0.0, %v2416
      %v2418 = vpop.f32.mrb[0].mxu0
      %2419 = vmatprep.mubr.f32.mxu0 0.0
      %2420 = vmatmul.mubr.f32.gmra.mrb[0].mxu0 %v2195
      %v2421 = vpop.f32.mrb[0].mxu0
      %v2422 = vadd.f32 0.0, %v2421
      %v2423 = vpop.f32.mrb[0].mxu0
      %2424 = vdwg.mxu0
      %v2425 = vadd.f32 %v2157, %v2267
      %v2426 = vadd.f32 %v2158, %v2272
      %v2427 = vadd.f32 %v2159, %v2277
      %v2428 = vadd.f32 %v2160, %v2282
      %v2429 = vadd.f32 %v2161, %v2287
      %v2430 = vadd.f32 %v2162, %v2292
      %v2431 = vadd.f32 %v2163, %v2297
      %v2432 = vadd.f32 %v2164, %v2302
      %v2433 = vadd.f32 %v2165, %v2307
      %v2434 = vadd.f32 %v2166, %v2312
      %v2435 = vadd.f32 %v2167, %v2317
      %v2436 = vadd.f32 %v2168, %v2322
      %v2437 = vadd.f32 %v2169, %v2327
      %v2438 = vadd.f32 %v2170, %v2332
      %v2439 = vadd.f32 %v2171, %v2337
      %v2440 = vadd.f32 %v2172, %v2342
      %v2441 = vadd.f32 %v2173, %v2347
      %v2442 = vadd.f32 %v2174, %v2352
      %v2443 = vadd.f32 %v2175, %v2357
      %v2444 = vadd.f32 %v2176, %v2362
      %v2445 = vadd.f32 %v2177, %v2367
      %v2446 = vadd.f32 %v2178, %v2372
      %v2447 = vadd.f32 %v2179, %v2377
      %v2448 = vadd.f32 %v2180, %v2382
      %v2449 = vadd.f32 %v2181, %v2387
      %v2450 = vadd.f32 %v2182, %v2392
      %v2451 = vadd.f32 %v2183, %v2397
      %v2452 = vadd.f32 %v2184, %v2402
      %v2453 = vadd.f32 %v2185, %v2407
      %v2454 = vadd.f32 %v2186, %v2412
      %v2455 = vadd.f32 %v2187, %v2417
      %v2456 = vadd.f32 %v2188, %v2422
      %v2458 = vrot.slane %v250, 1
      %v2459 = vrot.slane %v251, 1
      %v2460 = vsel %vm302, %v2458, %v2459
      %v2461 = vrot.slane %v252, 1
      %v2462 = vsel %vm302, %v2459, %v2461
      %s2463 = scalar_lea.vmem %s1, 28
      %v2464 = vld [vmem:[%s2463] sm:$0xf]
      %v2465 = vsel %vm385, %v2460, 0
      %v2467 = vsel %vm385, %v2462, 0
      %v2470 = vsel %vm450, %v2464, 0
      %2472 = vmatprep.subr.mxu0 0.0
      %2473 = vmatpush1.msra.mxu0 %v2470
      %2474 = vmatprep.subr.mxu0 0.0
      %2475 = vmatpush1.msra.mxu0 0.0
      %2476 = vmatprep.subr.mxu0 0.0
      %2477 = vmatpush1.msra.mxu0 0.0
      %2478 = vmatprep.subr.mxu0 0.0
      %2479 = vmatpush1.msra.mxu0 0.0
      %2480 = vmatprep.subr.mxu0 0.0
      %2481 = vmatpush1.msra.mxu0 0.0
      %2482 = vmatprep.subr.mxu0 0.0
      %2483 = vmatpush1.msra.mxu0 0.0
      %2484 = vmatprep.subr.mxu0 0.0
      %2485 = vmatpush1.msra.mxu0 0.0
      %2486 = vmatprep.subr.mxu0 0.0
      %2487 = vmatpush1.msra.mxu0 0.0
      %2488 = vmatprep.subr.mxu0 0.0
      %2489 = vmatpush1.msra.mxu0 0.0
      %2490 = vmatprep.subr.mxu0 0.0
      %2491 = vmatpush1.msra.mxu0 0.0
      %2492 = vmatprep.subr.mxu0 0.0
      %2493 = vmatpush1.msra.mxu0 0.0
      %2494 = vmatprep.subr.mxu0 0.0
      %2495 = vmatpush1.msra.mxu0 0.0
      %2496 = vmatprep.subr.mxu0 0.0
      %2497 = vmatpush1.msra.mxu0 0.0
      %2498 = vmatprep.subr.mxu0 0.0
      %2499 = vmatpush1.msra.mxu0 0.0
      %2500 = vmatprep.subr.mxu0 0.0
      %2501 = vmatpush1.msra.mxu0 0.0
      %2502 = vmatprep.subr.mxu0 0.0
      %2503 = vmatpush1.msra.mxu0 0.0
      %2504 = vmatprep.subr.mxu0 0.0
      %2505 = vmatpush1.msra.mxu0 0.0
      %2506 = vmatprep.subr.mxu0 0.0
      %2507 = vmatpush1.msra.mxu0 0.0
      %2508 = vmatprep.subr.mxu0 0.0
      %2509 = vmatpush1.msra.mxu0 0.0
      %2510 = vmatprep.subr.mxu0 0.0
      %2511 = vmatpush1.msra.mxu0 0.0
      %2512 = vmatprep.subr.mxu0 0.0
      %2513 = vmatpush1.msra.mxu0 0.0
      %2514 = vmatprep.subr.mxu0 0.0
      %2515 = vmatpush1.msra.mxu0 0.0
      %2516 = vmatprep.subr.mxu0 0.0
      %2517 = vmatpush1.msra.mxu0 0.0
      %2518 = vmatprep.subr.mxu0 0.0
      %2519 = vmatpush1.msra.mxu0 0.0
      %2520 = vmatprep.subr.mxu0 0.0
      %2521 = vmatpush1.msra.mxu0 0.0
      %2522 = vmatprep.subr.mxu0 0.0
      %2523 = vmatpush1.msra.mxu0 0.0
      %2524 = vmatprep.subr.mxu0 0.0
      %2525 = vmatpush1.msra.mxu0 0.0
      %2526 = vmatprep.subr.mxu0 0.0
      %2527 = vmatpush1.msra.mxu0 0.0
      %2528 = vmatprep.subr.mxu0 0.0
      %2529 = vmatpush1.msra.mxu0 0.0
      %2530 = vmatprep.subr.mxu0 0.0
      %2531 = vmatpush1.msra.mxu0 0.0
      %2532 = vmatprep.subr.mxu0 0.0
      %2533 = vmatpush1.msra.mxu0 0.0
      %2534 = vmatprep.subr.mxu0 0.0
      %2535 = vmatpush1.msra.mxu0 0.0
      %2536 = vmatprep.mubr.f32.mxu0 0.0
      %2537 = vmatmul.mubr.f32.gmra.mrb[0].mxu0 %v394
      %v2538 = vpop.f32.mrb[0].mxu0
      %v2539 = vadd.f32 0.0, %v2538
      %v2540 = vpop.f32.mrb[0].mxu0
      %2541 = vmatprep.mubr.f32.mxu0 0.0
      %2542 = vmatmul.mubr.f32.gmra.mrb[0].mxu0 %v396
      %v2543 = vpop.f32.mrb[0].mxu0
      %v2544 = vadd.f32 0.0, %v2543
      %v2545 = vpop.f32.mrb[0].mxu0
      %2546 = vmatprep.mubr.f32.mxu0 0.0
      %2547 = vmatmul.mubr.f32.gmra.mrb[0].mxu0 %v398
      %v2548 = vpop.f32.mrb[0].mxu0
      %v2549 = vadd.f32 0.0, %v2548
      %v2550 = vpop.f32.mrb[0].mxu0
      %2551 = vmatprep.mubr.f32.mxu0 0.0
      %2552 = vmatmul.mubr.f32.gmra.mrb[0].mxu0 %v400
      %v2553 = vpop.f32.mrb[0].mxu0
      %v2554 = vadd.f32 0.0, %v2553
      %v2555 = vpop.f32.mrb[0].mxu0
      %2556 = vmatprep.mubr.f32.mxu0 0.0
      %2557 = vmatmul.mubr.f32.gmra.mrb[0].mxu0 %v402
      %v2558 = vpop.f32.mrb[0].mxu0
      %v2559 = vadd.f32 0.0, %v2558
      %v2560 = vpop.f32.mrb[0].mxu0
      %2561 = vmatprep.mubr.f32.mxu0 0.0
      %2562 = vmatmul.mubr.f32.gmra.mrb[0].mxu0 %v404
      %v2563 = vpop.f32.mrb[0].mxu0
      %v2564 = vadd.f32 0.0, %v2563
      %v2565 = vpop.f32.mrb[0].mxu0
      %2566 = vmatprep.mubr.f32.mxu0 0.0
      %2567 = vmatmul.mubr.f32.gmra.mrb[0].mxu0 %v406
      %v2568 = vpop.f32.mrb[0].mxu0
      %v2569 = vadd.f32 0.0, %v2568
      %v2570 = vpop.f32.mrb[0].mxu0
      %2571 = vmatprep.mubr.f32.mxu0 0.0
      %2572 = vmatmul.mubr.f32.gmra.mrb[0].mxu0 %v408
      %v2573 = vpop.f32.mrb[0].mxu0
      %v2574 = vadd.f32 0.0, %v2573
      %v2575 = vpop.f32.mrb[0].mxu0
      %2576 = vmatprep.mubr.f32.mxu0 0.0
      %2577 = vmatmul.mubr.f32.gmra.mrb[0].mxu0 %v410
      %v2578 = vpop.f32.mrb[0].mxu0
      %v2579 = vadd.f32 0.0, %v2578
      %v2580 = vpop.f32.mrb[0].mxu0
      %2581 = vmatprep.mubr.f32.mxu0 0.0
      %2582 = vmatmul.mubr.f32.gmra.mrb[0].mxu0 %v412
      %v2583 = vpop.f32.mrb[0].mxu0
      %v2584 = vadd.f32 0.0, %v2583
      %v2585 = vpop.f32.mrb[0].mxu0
      %2586 = vmatprep.mubr.f32.mxu0 0.0
      %2587 = vmatmul.mubr.f32.gmra.mrb[0].mxu0 %v414
      %v2588 = vpop.f32.mrb[0].mxu0
      %v2589 = vadd.f32 0.0, %v2588
      %v2590 = vpop.f32.mrb[0].mxu0
      %2591 = vmatprep.mubr.f32.mxu0 0.0
      %2592 = vmatmul.mubr.f32.gmra.mrb[0].mxu0 %v416
      %v2593 = vpop.f32.mrb[0].mxu0
      %v2594 = vadd.f32 0.0, %v2593
      %v2595 = vpop.f32.mrb[0].mxu0
      %2596 = vmatprep.mubr.f32.mxu0 0.0
      %2597 = vmatmul.mubr.f32.gmra.mrb[0].mxu0 %v418
      %v2598 = vpop.f32.mrb[0].mxu0
      %v2599 = vadd.f32 0.0, %v2598
      %v2600 = vpop.f32.mrb[0].mxu0
      %2601 = vmatprep.mubr.f32.mxu0 0.0
      %2602 = vmatmul.mubr.f32.gmra.mrb[0].mxu0 %v420
      %v2603 = vpop.f32.mrb[0].mxu0
      %v2604 = vadd.f32 0.0, %v2603
      %v2605 = vpop.f32.mrb[0].mxu0
      %2606 = vmatprep.mubr.f32.mxu0 0.0
      %2607 = vmatmul.mubr.f32.gmra.mrb[0].mxu0 %v422
      %v2608 = vpop.f32.mrb[0].mxu0
      %v2609 = vadd.f32 0.0, %v2608
      %v2610 = vpop.f32.mrb[0].mxu0
      %2611 = vmatprep.mubr.f32.mxu0 0.0
      %2612 = vmatmul.mubr.f32.gmra.mrb[0].mxu0 %v424
      %v2613 = vpop.f32.mrb[0].mxu0
      %v2614 = vadd.f32 0.0, %v2613
      %v2615 = vpop.f32.mrb[0].mxu0
      %2616 = vmatprep.mubr.f32.mxu0 0.0
      %2617 = vmatmul.mubr.f32.gmra.mrb[0].mxu0 %v426
      %v2618 = vpop.f32.mrb[0].mxu0
      %v2619 = vadd.f32 0.0, %v2618
      %v2620 = vpop.f32.mrb[0].mxu0
      %2621 = vmatprep.mubr.f32.mxu0 0.0
      %2622 = vmatmul.mubr.f32.gmra.mrb[0].mxu0 %v428
      %v2623 = vpop.f32.mrb[0].mxu0
      %v2624 = vadd.f32 0.0, %v2623
      %v2625 = vpop.f32.mrb[0].mxu0
      %2626 = vmatprep.mubr.f32.mxu0 0.0
      %2627 = vmatmul.mubr.f32.gmra.mrb[0].mxu0 %v430
      %v2628 = vpop.f32.mrb[0].mxu0
      %v2629 = vadd.f32 0.0, %v2628
      %v2630 = vpop.f32.mrb[0].mxu0
      %2631 = vmatprep.mubr.f32.mxu0 0.0
      %2632 = vmatmul.mubr.f32.gmra.mrb[0].mxu0 %v432
      %v2633 = vpop.f32.mrb[0].mxu0
      %v2634 = vadd.f32 0.0, %v2633
      %v2635 = vpop.f32.mrb[0].mxu0
      %2636 = vmatprep.mubr.f32.mxu0 0.0
      %2637 = vmatmul.mubr.f32.gmra.mrb[0].mxu0 %v434
      %v2638 = vpop.f32.mrb[0].mxu0
      %v2639 = vadd.f32 0.0, %v2638
      %v2640 = vpop.f32.mrb[0].mxu0
      %2641 = vmatprep.mubr.f32.mxu0 0.0
      %2642 = vmatmul.mubr.f32.gmra.mrb[0].mxu0 %v436
      %v2643 = vpop.f32.mrb[0].mxu0
      %v2644 = vadd.f32 0.0, %v2643
      %v2645 = vpop.f32.mrb[0].mxu0
      %2646 = vmatprep.mubr.f32.mxu0 0.0
      %2647 = vmatmul.mubr.f32.gmra.mrb[0].mxu0 %v438
      %v2648 = vpop.f32.mrb[0].mxu0
      %v2649 = vadd.f32 0.0, %v2648
      %v2650 = vpop.f32.mrb[0].mxu0
      %2651 = vmatprep.mubr.f32.mxu0 0.0
      %2652 = vmatmul.mubr.f32.gmra.mrb[0].mxu0 %v440
      %v2653 = vpop.f32.mrb[0].mxu0
      %v2654 = vadd.f32 0.0, %v2653
      %v2655 = vpop.f32.mrb[0].mxu0
      %2656 = vmatprep.mubr.f32.mxu0 0.0
      %2657 = vmatmul.mubr.f32.gmra.mrb[0].mxu0 %v442
      %v2658 = vpop.f32.mrb[0].mxu0
      %v2659 = vadd.f32 0.0, %v2658
      %v2660 = vpop.f32.mrb[0].mxu0
      %2661 = vmatprep.mubr.f32.mxu0 0.0
      %2662 = vmatmul.mubr.f32.gmra.mrb[0].mxu0 %v444
      %v2663 = vpop.f32.mrb[0].mxu0
      %v2664 = vadd.f32 0.0, %v2663
      %v2665 = vpop.f32.mrb[0].mxu0
      %2666 = vmatprep.mubr.f32.mxu0 0.0
      %2667 = vmatmul.mubr.f32.gmra.mrb[0].mxu0 %v446
      %v2668 = vpop.f32.mrb[0].mxu0
      %v2669 = vadd.f32 0.0, %v2668
      %v2670 = vpop.f32.mrb[0].mxu0
      %2671 = vmatprep.mubr.f32.mxu0 0.0
      %2672 = vmatmul.mubr.f32.gmra.mrb[0].mxu0 %v448
      %v2673 = vpop.f32.mrb[0].mxu0
      %v2674 = vadd.f32 0.0, %v2673
      %v2675 = vpop.f32.mrb[0].mxu0
      %2676 = vmatprep.mubr.f32.mxu0 0.0
      %2677 = vmatmul.mubr.f32.gmra.mrb[0].mxu0 %v1654
      %v2678 = vpop.f32.mrb[0].mxu0
      %v2679 = vadd.f32 0.0, %v2678
      %v2680 = vpop.f32.mrb[0].mxu0
      %2681 = vmatprep.mubr.f32.mxu0 0.0
      %2682 = vmatmul.mubr.f32.gmra.mrb[0].mxu0 %v1656
      %v2683 = vpop.f32.mrb[0].mxu0
      %v2684 = vadd.f32 0.0, %v2683
      %v2685 = vpop.f32.mrb[0].mxu0
      %2686 = vmatprep.mubr.f32.mxu0 0.0
      %2687 = vmatmul.mubr.f32.gmra.mrb[0].mxu0 %v2465
      %v2688 = vpop.f32.mrb[0].mxu0
      %v2689 = vadd.f32 0.0, %v2688
      %v2690 = vpop.f32.mrb[0].mxu0
      %2691 = vmatprep.mubr.f32.mxu0 0.0
      %2692 = vmatmul.mubr.f32.gmra.mrb[0].mxu0 %v2467
      %v2693 = vpop.f32.mrb[0].mxu0
      %v2694 = vadd.f32 0.0, %v2693
      %v2695 = vpop.f32.mrb[0].mxu0
      %2696 = vdwg.mxu0
      %v2697 = vadd.f32 %v2425, %v2539
      %v2698 = vadd.f32 %v2426, %v2544
      %v2699 = vadd.f32 %v2427, %v2549
      %v2700 = vadd.f32 %v2428, %v2554
      %v2701 = vadd.f32 %v2429, %v2559
      %v2702 = vadd.f32 %v2430, %v2564
      %v2703 = vadd.f32 %v2431, %v2569
      %v2704 = vadd.f32 %v2432, %v2574
      %v2705 = vadd.f32 %v2433, %v2579
      %v2706 = vadd.f32 %v2434, %v2584
      %v2707 = vadd.f32 %v2435, %v2589
      %v2708 = vadd.f32 %v2436, %v2594
      %v2709 = vadd.f32 %v2437, %v2599
      %v2710 = vadd.f32 %v2438, %v2604
      %v2711 = vadd.f32 %v2439, %v2609
      %v2712 = vadd.f32 %v2440, %v2614
      %v2713 = vadd.f32 %v2441, %v2619
      %v2714 = vadd.f32 %v2442, %v2624
      %v2715 = vadd.f32 %v2443, %v2629
      %v2716 = vadd.f32 %v2444, %v2634
      %v2717 = vadd.f32 %v2445, %v2639
      %v2718 = vadd.f32 %v2446, %v2644
      %v2719 = vadd.f32 %v2447, %v2649
      %v2720 = vadd.f32 %v2448, %v2654
      %v2721 = vadd.f32 %v2449, %v2659
      %v2722 = vadd.f32 %v2450, %v2664
      %v2723 = vadd.f32 %v2451, %v2669
      %v2724 = vadd.f32 %v2452, %v2674
      %v2725 = vadd.f32 %v2453, %v2679
      %v2726 = vadd.f32 %v2454, %v2684
      %v2727 = vadd.f32 %v2455, %v2689
      %v2728 = vadd.f32 %v2456, %v2694
      %v2729 = vrot.slane %v250, 2
      %v2730 = vrot.slane %v251, 2
      %v2731 = vsel %vm971, %v2729, %v2730
      %v2732 = vrot.slane %v252, 2
      %v2733 = vsel %vm971, %v2730, %v2732
      %s2734 = scalar_lea.vmem %s1, 32
      %v2735 = vld [vmem:[%s2734] sm:$0xf]
      %v2736 = vsel %vm385, %v2731, 0
      %v2738 = vsel %vm385, %v2733, 0
      %v2741 = vsel %vm450, %v2735, 0
      %2743 = vmatprep.subr.mxu0 0.0
      %2744 = vmatpush1.msra.mxu0 %v2741
      %2745 = vmatprep.subr.mxu0 0.0
      %2746 = vmatpush1.msra.mxu0 0.0
      %2747 = vmatprep.subr.mxu0 0.0
      %2748 = vmatpush1.msra.mxu0 0.0
      %2749 = vmatprep.subr.mxu0 0.0
      %2750 = vmatpush1.msra.mxu0 0.0
      %2751 = vmatprep.subr.mxu0 0.0
      %2752 = vmatpush1.msra.mxu0 0.0
      %2753 = vmatprep.subr.mxu0 0.0
      %2754 = vmatpush1.msra.mxu0 0.0
      %2755 = vmatprep.subr.mxu0 0.0
      %2756 = vmatpush1.msra.mxu0 0.0
      %2757 = vmatprep.subr.mxu0 0.0
      %2758 = vmatpush1.msra.mxu0 0.0
      %2759 = vmatprep.subr.mxu0 0.0
      %2760 = vmatpush1.msra.mxu0 0.0
      %2761 = vmatprep.subr.mxu0 0.0
      %2762 = vmatpush1.msra.mxu0 0.0
      %2763 = vmatprep.subr.mxu0 0.0
      %2764 = vmatpush1.msra.mxu0 0.0
      %2765 = vmatprep.subr.mxu0 0.0
      %2766 = vmatpush1.msra.mxu0 0.0
      %2767 = vmatprep.subr.mxu0 0.0
      %2768 = vmatpush1.msra.mxu0 0.0
      %2769 = vmatprep.subr.mxu0 0.0
      %2770 = vmatpush1.msra.mxu0 0.0
      %2771 = vmatprep.subr.mxu0 0.0
      %2772 = vmatpush1.msra.mxu0 0.0
      %2773 = vmatprep.subr.mxu0 0.0
      %2774 = vmatpush1.msra.mxu0 0.0
      %2775 = vmatprep.subr.mxu0 0.0
      %2776 = vmatpush1.msra.mxu0 0.0
      %2777 = vmatprep.subr.mxu0 0.0
      %2778 = vmatpush1.msra.mxu0 0.0
      %2779 = vmatprep.subr.mxu0 0.0
      %2780 = vmatpush1.msra.mxu0 0.0
      %2781 = vmatprep.subr.mxu0 0.0
      %2782 = vmatpush1.msra.mxu0 0.0
      %2783 = vmatprep.subr.mxu0 0.0
      %2784 = vmatpush1.msra.mxu0 0.0
      %2785 = vmatprep.subr.mxu0 0.0
      %2786 = vmatpush1.msra.mxu0 0.0
      %2787 = vmatprep.subr.mxu0 0.0
      %2788 = vmatpush1.msra.mxu0 0.0
      %2789 = vmatprep.subr.mxu0 0.0
      %2790 = vmatpush1.msra.mxu0 0.0
      %2791 = vmatprep.subr.mxu0 0.0
      %2792 = vmatpush1.msra.mxu0 0.0
      %2793 = vmatprep.subr.mxu0 0.0
      %2794 = vmatpush1.msra.mxu0 0.0
      %2795 = vmatprep.subr.mxu0 0.0
      %2796 = vmatpush1.msra.mxu0 0.0
      %2797 = vmatprep.subr.mxu0 0.0
      %2798 = vmatpush1.msra.mxu0 0.0
      %2799 = vmatprep.subr.mxu0 0.0
      %2800 = vmatpush1.msra.mxu0 0.0
      %2801 = vmatprep.subr.mxu0 0.0
      %2802 = vmatpush1.msra.mxu0 0.0
      %2803 = vmatprep.subr.mxu0 0.0
      %2804 = vmatpush1.msra.mxu0 0.0
      %2805 = vmatprep.subr.mxu0 0.0
      %2806 = vmatpush1.msra.mxu0 0.0
      %2807 = vmatprep.mubr.f32.mxu0 0.0
      %2808 = vmatmul.mubr.f32.gmra.mrb[0].mxu0 %v1062
      %v2809 = vpop.f32.mrb[0].mxu0
      %v2810 = vadd.f32 0.0, %v2809
      %v2811 = vpop.f32.mrb[0].mxu0
      %2812 = vmatprep.mubr.f32.mxu0 0.0
      %2813 = vmatmul.mubr.f32.gmra.mrb[0].mxu0 %v1064
      %v2814 = vpop.f32.mrb[0].mxu0
      %v2815 = vadd.f32 0.0, %v2814
      %v2816 = vpop.f32.mrb[0].mxu0
      %2817 = vmatprep.mubr.f32.mxu0 0.0
      %2818 = vmatmul.mubr.f32.gmra.mrb[0].mxu0 %v1066
      %v2819 = vpop.f32.mrb[0].mxu0
      %v2820 = vadd.f32 0.0, %v2819
      %v2821 = vpop.f32.mrb[0].mxu0
      %2822 = vmatprep.mubr.f32.mxu0 0.0
      %2823 = vmatmul.mubr.f32.gmra.mrb[0].mxu0 %v1068
      %v2824 = vpop.f32.mrb[0].mxu0
      %v2825 = vadd.f32 0.0, %v2824
      %v2826 = vpop.f32.mrb[0].mxu0
      %2827 = vmatprep.mubr.f32.mxu0 0.0
      %2828 = vmatmul.mubr.f32.gmra.mrb[0].mxu0 %v1070
      %v2829 = vpop.f32.mrb[0].mxu0
      %v2830 = vadd.f32 0.0, %v2829
      %v2831 = vpop.f32.mrb[0].mxu0
      %2832 = vmatprep.mubr.f32.mxu0 0.0
      %2833 = vmatmul.mubr.f32.gmra.mrb[0].mxu0 %v1072
      %v2834 = vpop.f32.mrb[0].mxu0
      %v2835 = vadd.f32 0.0, %v2834
      %v2836 = vpop.f32.mrb[0].mxu0
      %2837 = vmatprep.mubr.f32.mxu0 0.0
      %2838 = vmatmul.mubr.f32.gmra.mrb[0].mxu0 %v1074
      %v2839 = vpop.f32.mrb[0].mxu0
      %v2840 = vadd.f32 0.0, %v2839
      %v2841 = vpop.f32.mrb[0].mxu0
      %2842 = vmatprep.mubr.f32.mxu0 0.0
      %2843 = vmatmul.mubr.f32.gmra.mrb[0].mxu0 %v1076
      %v2844 = vpop.f32.mrb[0].mxu0
      %v2845 = vadd.f32 0.0, %v2844
      %v2846 = vpop.f32.mrb[0].mxu0
      %2847 = vmatprep.mubr.f32.mxu0 0.0
      %2848 = vmatmul.mubr.f32.gmra.mrb[0].mxu0 %v1078
      %v2849 = vpop.f32.mrb[0].mxu0
      %v2850 = vadd.f32 0.0, %v2849
      %v2851 = vpop.f32.mrb[0].mxu0
      %2852 = vmatprep.mubr.f32.mxu0 0.0
      %2853 = vmatmul.mubr.f32.gmra.mrb[0].mxu0 %v1080
      %v2854 = vpop.f32.mrb[0].mxu0
      %v2855 = vadd.f32 0.0, %v2854
      %v2856 = vpop.f32.mrb[0].mxu0
      %2857 = vmatprep.mubr.f32.mxu0 0.0
      %2858 = vmatmul.mubr.f32.gmra.mrb[0].mxu0 %v1082
      %v2859 = vpop.f32.mrb[0].mxu0
      %v2860 = vadd.f32 0.0, %v2859
      %v2861 = vpop.f32.mrb[0].mxu0
      %2862 = vmatprep.mubr.f32.mxu0 0.0
      %2863 = vmatmul.mubr.f32.gmra.mrb[0].mxu0 %v1084
      %v2864 = vpop.f32.mrb[0].mxu0
      %v2865 = vadd.f32 0.0, %v2864
      %v2866 = vpop.f32.mrb[0].mxu0
      %2867 = vmatprep.mubr.f32.mxu0 0.0
      %2868 = vmatmul.mubr.f32.gmra.mrb[0].mxu0 %v1086
      %v2869 = vpop.f32.mrb[0].mxu0
      %v2870 = vadd.f32 0.0, %v2869
      %v2871 = vpop.f32.mrb[0].mxu0
      %2872 = vmatprep.mubr.f32.mxu0 0.0
      %2873 = vmatmul.mubr.f32.gmra.mrb[0].mxu0 %v1088
      %v2874 = vpop.f32.mrb[0].mxu0
      %v2875 = vadd.f32 0.0, %v2874
      %v2876 = vpop.f32.mrb[0].mxu0
      %2877 = vmatprep.mubr.f32.mxu0 0.0
      %2878 = vmatmul.mubr.f32.gmra.mrb[0].mxu0 %v1090
      %v2879 = vpop.f32.mrb[0].mxu0
      %v2880 = vadd.f32 0.0, %v2879
      %v2881 = vpop.f32.mrb[0].mxu0
      %2882 = vmatprep.mubr.f32.mxu0 0.0
      %2883 = vmatmul.mubr.f32.gmra.mrb[0].mxu0 %v1092
      %v2884 = vpop.f32.mrb[0].mxu0
      %v2885 = vadd.f32 0.0, %v2884
      %v2886 = vpop.f32.mrb[0].mxu0
      %2887 = vmatprep.mubr.f32.mxu0 0.0
      %2888 = vmatmul.mubr.f32.gmra.mrb[0].mxu0 %v1094
      %v2889 = vpop.f32.mrb[0].mxu0
      %v2890 = vadd.f32 0.0, %v2889
      %v2891 = vpop.f32.mrb[0].mxu0
      %2892 = vmatprep.mubr.f32.mxu0 0.0
      %2893 = vmatmul.mubr.f32.gmra.mrb[0].mxu0 %v1096
      %v2894 = vpop.f32.mrb[0].mxu0
      %v2895 = vadd.f32 0.0, %v2894
      %v2896 = vpop.f32.mrb[0].mxu0
      %2897 = vmatprep.mubr.f32.mxu0 0.0
      %2898 = vmatmul.mubr.f32.gmra.mrb[0].mxu0 %v1098
      %v2899 = vpop.f32.mrb[0].mxu0
      %v2900 = vadd.f32 0.0, %v2899
      %v2901 = vpop.f32.mrb[0].mxu0
      %2902 = vmatprep.mubr.f32.mxu0 0.0
      %2903 = vmatmul.mubr.f32.gmra.mrb[0].mxu0 %v1100
      %v2904 = vpop.f32.mrb[0].mxu0
      %v2905 = vadd.f32 0.0, %v2904
      %v2906 = vpop.f32.mrb[0].mxu0
      %2907 = vmatprep.mubr.f32.mxu0 0.0
      %2908 = vmatmul.mubr.f32.gmra.mrb[0].mxu0 %v1102
      %v2909 = vpop.f32.mrb[0].mxu0
      %v2910 = vadd.f32 0.0, %v2909
      %v2911 = vpop.f32.mrb[0].mxu0
      %2912 = vmatprep.mubr.f32.mxu0 0.0
      %2913 = vmatmul.mubr.f32.gmra.mrb[0].mxu0 %v1104
      %v2914 = vpop.f32.mrb[0].mxu0
      %v2915 = vadd.f32 0.0, %v2914
      %v2916 = vpop.f32.mrb[0].mxu0
      %2917 = vmatprep.mubr.f32.mxu0 0.0
      %2918 = vmatmul.mubr.f32.gmra.mrb[0].mxu0 %v1106
      %v2919 = vpop.f32.mrb[0].mxu0
      %v2920 = vadd.f32 0.0, %v2919
      %v2921 = vpop.f32.mrb[0].mxu0
      %2922 = vmatprep.mubr.f32.mxu0 0.0
      %2923 = vmatmul.mubr.f32.gmra.mrb[0].mxu0 %v1108
      %v2924 = vpop.f32.mrb[0].mxu0
      %v2925 = vadd.f32 0.0, %v2924
      %v2926 = vpop.f32.mrb[0].mxu0
      %2927 = vmatprep.mubr.f32.mxu0 0.0
      %2928 = vmatmul.mubr.f32.gmra.mrb[0].mxu0 %v1110
      %v2929 = vpop.f32.mrb[0].mxu0
      %v2930 = vadd.f32 0.0, %v2929
      %v2931 = vpop.f32.mrb[0].mxu0
      %2932 = vmatprep.mubr.f32.mxu0 0.0
      %2933 = vmatmul.mubr.f32.gmra.mrb[0].mxu0 %v1112
      %v2934 = vpop.f32.mrb[0].mxu0
      %v2935 = vadd.f32 0.0, %v2934
      %v2936 = vpop.f32.mrb[0].mxu0
      %2937 = vmatprep.mubr.f32.mxu0 0.0
      %2938 = vmatmul.mubr.f32.gmra.mrb[0].mxu0 %v1114
      %v2939 = vpop.f32.mrb[0].mxu0
      %v2940 = vadd.f32 0.0, %v2939
      %v2941 = vpop.f32.mrb[0].mxu0
      %2942 = vmatprep.mubr.f32.mxu0 0.0
      %2943 = vmatmul.mubr.f32.gmra.mrb[0].mxu0 %v1116
      %v2944 = vpop.f32.mrb[0].mxu0
      %v2945 = vadd.f32 0.0, %v2944
      %v2946 = vpop.f32.mrb[0].mxu0
      %2947 = vmatprep.mubr.f32.mxu0 0.0
      %2948 = vmatmul.mubr.f32.gmra.mrb[0].mxu0 %v1925
      %v2949 = vpop.f32.mrb[0].mxu0
      %v2950 = vadd.f32 0.0, %v2949
      %v2951 = vpop.f32.mrb[0].mxu0
      %2952 = vmatprep.mubr.f32.mxu0 0.0
      %2953 = vmatmul.mubr.f32.gmra.mrb[0].mxu0 %v1927
      %v2954 = vpop.f32.mrb[0].mxu0
      %v2955 = vadd.f32 0.0, %v2954
      %v2956 = vpop.f32.mrb[0].mxu0
      %2957 = vmatprep.mubr.f32.mxu0 0.0
      %2958 = vmatmul.mubr.f32.gmra.mrb[0].mxu0 %v2736
      %v2959 = vpop.f32.mrb[0].mxu0
      %v2960 = vadd.f32 0.0, %v2959
      %v2961 = vpop.f32.mrb[0].mxu0
      %2962 = vmatprep.mubr.f32.mxu0 0.0
      %2963 = vmatmul.mubr.f32.gmra.mrb[0].mxu0 %v2738
      %v2964 = vpop.f32.mrb[0].mxu0
      %v2965 = vadd.f32 0.0, %v2964
      %v2966 = vpop.f32.mrb[0].mxu0
      %2967 = vdwg.mxu0
      %v2968 = vadd.f32 %v2697, %v2810
      %v2969 = vadd.f32 %v2698, %v2815
      %v2970 = vadd.f32 %v2699, %v2820
      %v2971 = vadd.f32 %v2700, %v2825
      %v2972 = vadd.f32 %v2701, %v2830
      %v2973 = vadd.f32 %v2702, %v2835
      %v2974 = vadd.f32 %v2703, %v2840
      %v2975 = vadd.f32 %v2704, %v2845
      %v2976 = vadd.f32 %v2705, %v2850
      %v2977 = vadd.f32 %v2706, %v2855
      %v2978 = vadd.f32 %v2707, %v2860
      %v2979 = vadd.f32 %v2708, %v2865
      %v2980 = vadd.f32 %v2709, %v2870
      %v2981 = vadd.f32 %v2710, %v2875
      %v2982 = vadd.f32 %v2711, %v2880
      %v2983 = vadd.f32 %v2712, %v2885
      %v2984 = vadd.f32 %v2713, %v2890
      %v2985 = vadd.f32 %v2714, %v2895
      %v2986 = vadd.f32 %v2715, %v2900
      %v2987 = vadd.f32 %v2716, %v2905
      %v2988 = vadd.f32 %v2717, %v2910
      %v2989 = vadd.f32 %v2718, %v2915
      %v2990 = vadd.f32 %v2719, %v2920
      %v2991 = vadd.f32 %v2720, %v2925
      %v2992 = vadd.f32 %v2721, %v2930
      %v2993 = vadd.f32 %v2722, %v2935
      %v2994 = vadd.f32 %v2723, %v2940
      %v2995 = vadd.f32 %v2724, %v2945
      %v2996 = vadd.f32 %v2725, %v2950
      %v2997 = vadd.f32 %v2726, %v2955
      %v2998 = vadd.f32 %v2727, %v2960
      %v2999 = vadd.f32 %v2728, %v2965
      %3000 = vst [vmem:[%s192] sm:$0xff] %v2968
      %3001 = vst [vmem:[%s192 + $0x8] sm:$0xff] %v2969
      %3002 = vst [vmem:[%s192 + $0x10] sm:$0xff] %v2970
      %3003 = vst [vmem:[%s192 + $0x18] sm:$0xff] %v2971
      %3004 = vst [vmem:[%s192 + $0x20] sm:$0xff] %v2972
      %3005 = vst [vmem:[%s192 + $0x28] sm:$0xff] %v2973
      %3006 = vst [vmem:[%s192 + $0x30] sm:$0xff] %v2974
      %3007 = vst [vmem:[%s192 + $0x38] sm:$0xff] %v2975
      %3008 = vst [vmem:[%s192 + $0x40] sm:$0xff] %v2976
      %3009 = vst [vmem:[%s192 + $0x48] sm:$0xff] %v2977
      %3010 = vst [vmem:[%s192 + $0x50] sm:$0xff] %v2978
      %3011 = vst [vmem:[%s192 + $0x58] sm:$0xff] %v2979
      %3012 = vst [vmem:[%s192 + $0x60] sm:$0xff] %v2980
      %3013 = vst [vmem:[%s192 + $0x68] sm:$0xff] %v2981
      %3014 = vst [vmem:[%s192 + $0x70] sm:$0xff] %v2982
      %3015 = vst [vmem:[%s192 + $0x78] sm:$0xff] %v2983
      %3016 = vst [vmem:[%s192 + $0x80] sm:$0xff] %v2984
      %3017 = vst [vmem:[%s192 + $0x88] sm:$0xff] %v2985
      %3018 = vst [vmem:[%s192 + $0x90] sm:$0xff] %v2986
      %3019 = vst [vmem:[%s192 + $0x98] sm:$0xff] %v2987
      %3020 = vst [vmem:[%s192 + $0xa0] sm:$0xff] %v2988
      %3021 = vst [vmem:[%s192 + $0xa8] sm:$0xff] %v2989
      %3022 = vst [vmem:[%s192 + $0xb0] sm:$0xff] %v2990
      %3023 = vst [vmem:[%s192 + $0xb8] sm:$0xff] %v2991
      %3024 = vst [vmem:[%s192 + $0xc0] sm:$0xff] %v2992
      %3025 = vst [vmem:[%s192 + $0xc8] sm:$0xff] %v2993
      %3026 = vst [vmem:[%s192 + $0xd0] sm:$0xff] %v2994
      %3027 = vst [vmem:[%s192 + $0xd8] sm:$0xff] %v2995
      %3028 = vst [vmem:[%s192 + $0xe0] sm:$0xff] %v2996
      %3029 = vst [vmem:[%s192 + $0xe8] sm:$0xff] %v2997
      %3030 = vst [vmem:[%s192 + $0xf0] sm:$0xff] %v2998
      %3031 = vst [vmem:[%s192 + $0xf8] sm:$0xff] %v2999
      %v3032 = vld [vmem:[%s3] sm:$0x1]
      %v3033 = vadd.f32 %v2968, %v2969
      %v3034 = vadd.f32 %v3033, %v2970
      %v3035 = vadd.f32 %v3034, %v2971
      %v3036 = vadd.f32 %v3035, %v2972
      %v3037 = vadd.f32 %v3036, %v2973
      %v3038 = vadd.f32 %v3037, %v2974
      %v3039 = vadd.f32 %v3038, %v2975
      %v3040 = vadd.f32 %v3039, %v2976
      %v3041 = vadd.f32 %v3040, %v2977
      %v3042 = vadd.f32 %v3041, %v2978
      %v3043 = vadd.f32 %v3042, %v2979
      %v3044 = vadd.f32 %v3043, %v2980
      %v3045 = vadd.f32 %v3044, %v2981
      %v3046 = vadd.f32 %v3045, %v2982
      %v3047 = vadd.f32 %v3046, %v2983
      %v3048 = vadd.f32 %v3047, %v2984
      %v3049 = vadd.f32 %v3048, %v2985
      %v3050 = vadd.f32 %v3049, %v2986
      %v3051 = vadd.f32 %v3050, %v2987
      %v3052 = vadd.f32 %v3051, %v2988
      %v3053 = vadd.f32 %v3052, %v2989
      %v3054 = vadd.f32 %v3053, %v2990
      %v3055 = vadd.f32 %v3054, %v2991
      %v3056 = vadd.f32 %v3055, %v2992
      %v3057 = vadd.f32 %v3056, %v2993
      %v3058 = vadd.f32 %v3057, %v2994
      %v3059 = vadd.f32 %v3058, %v2995
      %v3060 = vadd.f32 %v3059, %v2996
      %v3061 = vadd.f32 %v3060, %v2997
      %v3062 = vadd.f32 %v3061, %v2998
      %v3063 = vadd.f32 %v3062, %v2999
      %v3064 = vrot.slane %v3063, 4
      %v3065 = vadd.f32 %v3063, %v3064
      %v3066 = vrot.slane %v3065, 2
      %v3067 = vadd.f32 %v3065, %v3066
      %v3068 = vrot.slane %v3067, 1
      %v3069 = vadd.f32 %v3067, %v3068
      %v3070 = vadd.f32 %v3032, %v3069
      %3071 = vst [vmem:[%s3] sm:$0x1] %v3070
      %v3072 = vld [vmem:[%s4] sm:$0x1]
      %v3073 = vmul.f32 %v2968, %v2968
      %v3074 = vmul.f32 %v2969, %v2969
      %v3075 = vmul.f32 %v2970, %v2970
      %v3076 = vmul.f32 %v2971, %v2971
      %v3077 = vmul.f32 %v2972, %v2972
      %v3078 = vmul.f32 %v2973, %v2973
      %v3079 = vmul.f32 %v2974, %v2974
      %v3080 = vmul.f32 %v2975, %v2975
      %v3081 = vmul.f32 %v2976, %v2976
      %v3082 = vmul.f32 %v2977, %v2977
      %v3083 = vmul.f32 %v2978, %v2978
      %v3084 = vmul.f32 %v2979, %v2979
      %v3085 = vmul.f32 %v2980, %v2980
      %v3086 = vmul.f32 %v2981, %v2981
      %v3087 = vmul.f32 %v2982, %v2982
      %v3088 = vmul.f32 %v2983, %v2983
      %v3089 = vmul.f32 %v2984, %v2984
      %v3090 = vmul.f32 %v2985, %v2985
      %v3091 = vmul.f32 %v2986, %v2986
      %v3092 = vmul.f32 %v2987, %v2987
      %v3093 = vmul.f32 %v2988, %v2988
      %v3094 = vmul.f32 %v2989, %v2989
      %v3095 = vmul.f32 %v2990, %v2990
      %v3096 = vmul.f32 %v2991, %v2991
      %v3097 = vmul.f32 %v2992, %v2992
      %v3098 = vmul.f32 %v2993, %v2993
      %v3099 = vmul.f32 %v2994, %v2994
      %v3100 = vmul.f32 %v2995, %v2995
      %v3101 = vmul.f32 %v2996, %v2996
      %v3102 = vmul.f32 %v2997, %v2997
      %v3103 = vmul.f32 %v2998, %v2998
      %v3104 = vmul.f32 %v2999, %v2999
      %v3105 = vadd.f32 %v3073, %v3074
      %v3106 = vadd.f32 %v3105, %v3075
      %v3107 = vadd.f32 %v3106, %v3076
      %v3108 = vadd.f32 %v3107, %v3077
      %v3109 = vadd.f32 %v3108, %v3078
      %v3110 = vadd.f32 %v3109, %v3079
      %v3111 = vadd.f32 %v3110, %v3080
      %v3112 = vadd.f32 %v3111, %v3081
      %v3113 = vadd.f32 %v3112, %v3082
      %v3114 = vadd.f32 %v3113, %v3083
      %v3115 = vadd.f32 %v3114, %v3084
      %v3116 = vadd.f32 %v3115, %v3085
      %v3117 = vadd.f32 %v3116, %v3086
      %v3118 = vadd.f32 %v3117, %v3087
      %v3119 = vadd.f32 %v3118, %v3088
      %v3120 = vadd.f32 %v3119, %v3089
      %v3121 = vadd.f32 %v3120, %v3090
      %v3122 = vadd.f32 %v3121, %v3091
      %v3123 = vadd.f32 %v3122, %v3092
      %v3124 = vadd.f32 %v3123, %v3093
      %v3125 = vadd.f32 %v3124, %v3094
      %v3126 = vadd.f32 %v3125, %v3095
      %v3127 = vadd.f32 %v3126, %v3096
      %v3128 = vadd.f32 %v3127, %v3097
      %v3129 = vadd.f32 %v3128, %v3098
      %v3130 = vadd.f32 %v3129, %v3099
      %v3131 = vadd.f32 %v3130, %v3100
      %v3132 = vadd.f32 %v3131, %v3101
      %v3133 = vadd.f32 %v3132, %v3102
      %v3134 = vadd.f32 %v3133, %v3103
      %v3135 = vadd.f32 %v3134, %v3104
      %v3136 = vrot.slane %v3135, 4
      %v3137 = vadd.f32 %v3135, %v3136
      %v3138 = vrot.slane %v3137, 2
      %v3139 = vadd.f32 %v3137, %v3138
      %v3140 = vrot.slane %v3139, 1
      %v3141 = vadd.f32 %v3139, %v3140
      %v3142 = vadd.f32 %v3072, %v3141
      %3143 = vst [vmem:[%s4] sm:$0x1] %v3142
      %p3144 = scmp.lt.s32.totalorder %s16, 1
      %s3145 = scalar_select %p3144, %s16, 1
      %s3146 = smul.addr %s3145, 32
      %s3147 = smul.addr %s3146, 8
      %s3148 = scalar_lea.vmem %s2, %s3147
      // Predicated region
      $region33: #{down_conv_forward.6} parent=27 // pred_check
        %p3149 = pneg %p81
      $region34: #{down_conv_forward.6} parent=27 // pred_check_branch
        %3151 = sbr.rel (%p3149) target = $region36
      $region35: #{down_conv_forward.6} parent=27 // pred_region
        _
      $region36: #{down_conv_forward.6} parent=27 // pred_fallthru
        _
      // Predicated region
      $region37: #{down_conv_forward.6} parent=27 // pred_check
        %p3152 = pneg %p102
      $region38: #{down_conv_forward.6} parent=27 // pred_check_branch
        %3154 = sbr.rel (%p3152) target = $region40
      $region39: #{down_conv_forward.6} parent=27 // pred_region
        _
      $region40: #{down_conv_forward.6} parent=27 // pred_fallthru
        _
      // Predicated region
      $region41: #{down_conv_forward.6} parent=27 // pred_check
        %p3155 = pneg %p123
      $region42: #{down_conv_forward.6} parent=27 // pred_check_branch
        %3157 = sbr.rel (%p3155) target = $region44
      $region43: #{down_conv_forward.6} parent=27 // pred_region
        _
      $region44: #{down_conv_forward.6} parent=27 // pred_fallthru
        _
      // Predicated region
      $region45: #{down_conv_forward.6} parent=27 // pred_check
        %p3158 = pneg %p102
      $region46: #{down_conv_forward.6} parent=27 // pred_check_branch
        %3160 = sbr.rel (%p3158) target = $region48
      $region47: #{down_conv_forward.6} parent=27 // pred_region
        _
      $region48: #{down_conv_forward.6} parent=27 // pred_fallthru
        _
      // Predicated region
      $region49: #{down_conv_forward.6} parent=27 // pred_check
        %p3161 = pneg %p123
      $region50: #{down_conv_forward.6} parent=27 // pred_check_branch
        %3163 = sbr.rel (%p3161) target = $region52
      $region51: #{down_conv_forward.6} parent=27 // pred_region
        _
      $region52: #{down_conv_forward.6} parent=27 // pred_fallthru
        _
    $region28: #{down_conv_forward.6} parent=5 // pred_fallthru
      _
    %p3164 = scmp.le.s32.totalorder 2, %s11
    // Predicated region
    $region53: #{down_conv_forward.6} parent=5 // pred_check
      %p3165 = pneg %p3164
    $region54: #{down_conv_forward.6} parent=5 // pred_check_branch
      %3167 = sbr.rel (%p3165) target = $region56
    $region55: #{down_conv_forward.6} parent=5 // pred_region
      %s3168 = ssub.s32 %s11, 2
      // Predicated region
      $region57: #{down_conv_forward.6} parent=55 // pred_check
        %p3169 = pneg %p87
      $region58: #{down_conv_forward.6} parent=55 // pred_check_branch
        %3171 = sbr.rel (%p3169) target = $region60
      $region59: #{down_conv_forward.6} parent=55 // pred_region
        %p3172 = scmp.lt.s32.totalorder %s17, 1
        %s3173 = scalar_select %p3172, %s17, 1
        %s3174 = smul.addr %s3173, 32
        %s3175 = smul.addr %s3174, 8
        %s3176 = scalar_lea.vmem %s2, %s3175
      $region60: #{down_conv_forward.6} parent=55 // pred_fallthru
        _
    $region56: #{down_conv_forward.6} parent=5 // pred_fallthru
      _
  $region6: #{down_conv_forward.6} parent=0 // loop_footer
    %s15 = sadd.s32 1, %s11
  $region7: #{down_conv_forward.6} parent=0 // loop_footer_branch
    %10 = sbr.rel target = $region3
  $region8: #{down_conv_forward.6} parent=0 // loop_exit
    _

// kernel: down_conv_forward.10
$region0: #{down_conv_forward.10}
  #allocation0 [shape = 'u32[]', space=smem, size = 0x4, offset = 0x4, fixed_abs, tag = 'smem constant byte address 0x4 - core index']
  #allocation1 [shape = 'u32[144,128]{1,0:T(1,128)}', space=vmem, size = 0x12000, scoped, tag = 'internal scratch']
  %s0 = inlined_call_operand.vmem [shape: f32[2,9,9,16], index: 0, kind: input, shape index: {}]
  %s1 = inlined_call_operand.vmem [shape: f32[4,16,128], index: 1, kind: input, shape index: {}]
  %s2 = inlined_call_operand.vmem [shape: f32[2,64,128], index: 2, kind: output, shape index: {0}]
  %s3 = inlined_call_operand.vmem [shape: f32[1,128], index: 3, kind: output, shape index: {1}]
  %s4 = inlined_call_operand.vmem [shape: f32[1,128], index: 4, kind: output, shape index: {2}]
  %5 = xla_tuple %s2, %s3, %s4
  %s6 = sld [smem:[#allocation0]]
  $region61: #{down_conv_forward.10} parent=0
    _
  %s8 = ssub.s32 1, %s6
  %s9 = scalar_select 0, %s8, %s6
  loop: start=0, step=1, limit=4
  $region2: #{down_conv_forward.10} parent=0 // loop_pre_header
    _
  $region3: #{down_conv_forward.10} parent=0 // loop_header
    %s11 = sphi 0, %s15
    %p12 = scmp.ge.s32.totalorder %s11, 4
    %s21 = sphi 0, %s23
    %s24 = sphi 0, %s21
    %s25 = sphi 0, %s24
    %s41 = sphi 0, %s25
    %s45 = sphi 0, %s45
    %s47 = sphi 0, %s45
    %s48 = sphi 0, %s47
    %s62 = sphi 0, %s48
    %s68 = sphi 0, %s70
    %s71 = sphi 0, %s68
    %s72 = sphi 0, %s71
    %s88 = sphi 0, %s72
    %s92 = sphi 0, %s92
    %s94 = sphi 0, %s92
    %s95 = sphi 0, %s94
    %s109 = sphi 0, %s95
    %s113 = sphi 0, %s113
    %s115 = sphi 0, %s113
    %s116 = sphi 0, %s115
    %s130 = sphi 0, %s116
  $region4: #{down_conv_forward.10} parent=0 // loop_header_branch
    %14 = sbr.rel (%p12) target = $region8
  $region5: #{down_conv_forward.10} parent=0 // loop_body
    %s16 = ssub.s32 %s11, 1
    %s17 = ssub.s32 %s11, 2
    %s18 = sadd.s32 %s11, 1
    %s19 = ssub.s32 %s11, %s18
    %p20 = scmp.eq.s32.totalorder %s19, 0
    %s22 = sadd.s32 %s21, 1
    %s23 = scalar_select %p20, %s21, %s22
    %p26 = pneg %p20
    %p27 = scmp.eq.s32.totalorder %s11, 1
    %p28 = por %p26, %p27
    %p29 = scmp.ne.s32.totalorder %s21, %s24
    %p30 = scmp.eq.s32.totalorder %s11, 0
    %p31 = por %p29, %p30
    %p32 = scmp.ne.s32.totalorder %s21, %s24
    %p33 = scmp.eq.s32.totalorder %s16, 1
    %p34 = por %p32, %p33
    %p35 = scmp.ne.s32.totalorder %s24, %s25
    %p36 = scmp.eq.s32.totalorder %s16, 0
    %p37 = por %p35, %p36
    %p38 = scmp.ne.s32.totalorder %s24, %s25
    %p39 = scmp.eq.s32.totalorder %s17, 1
    %p40 = por %p38, %p39
    %p42 = scmp.ne.s32.totalorder %s25, %s41
    %p43 = scmp.eq.s32.totalorder %s17, 0
    %p44 = por %p42, %p43
    %s46 = sadd.s32 %s45, 1
    %p49 = scmp.eq.s32.totalorder %s11, 1
    %p50 = scmp.ne.s32.totalorder %s45, %s47
    %p51 = scmp.eq.s32.totalorder %s11, 0
    %p52 = por %p50, %p51
    %p53 = scmp.ne.s32.totalorder %s45, %s47
    %p54 = scmp.eq.s32.totalorder %s16, 1
    %p55 = por %p53, %p54
    %p56 = scmp.ne.s32.totalorder %s47, %s48
    %p57 = scmp.eq.s32.totalorder %s16, 0
    %p58 = por %p56, %p57
    %p59 = scmp.ne.s32.totalorder %s47, %s48
    %p60 = scmp.eq.s32.totalorder %s17, 1
    %p61 = por %p59, %p60
    %p63 = scmp.ne.s32.totalorder %s48, %s62
    %p64 = scmp.eq.s32.totalorder %s17, 0
    %p65 = por %p63, %p64
    %s66 = ssub.s32 %s11, %s18
    %p67 = scmp.eq.s32.totalorder %s66, 0
    %s69 = sadd.s32 %s68, 1
    %s70 = scalar_select %p67, %s68, %s69
    %p73 = pneg %p67
    %p74 = scmp.eq.s32.totalorder %s11, 1
    %p75 = por %p73, %p74
    %p76 = scmp.ne.s32.totalorder %s68, %s71
    %p77 = scmp.eq.s32.totalorder %s11, 0
    %p78 = por %p76, %p77
    %p79 = scmp.ne.s32.totalorder %s68, %s71
    %p80 = scmp.eq.s32.totalorder %s16, 1
    %p81 = por %p79, %p80
    %p82 = scmp.ne.s32.totalorder %s71, %s72
    %p83 = scmp.eq.s32.totalorder %s16, 0
    %p84 = por %p82, %p83
    %p85 = scmp.ne.s32.totalorder %s71, %s72
    %p86 = scmp.eq.s32.totalorder %s17, 1
    %p87 = por %p85, %p86
    %p89 = scmp.ne.s32.totalorder %s72, %s88
    %p90 = scmp.eq.s32.totalorder %s17, 0
    %p91 = por %p89, %p90
    %s93 = sadd.s32 %s92, 1
    %p96 = scmp.eq.s32.totalorder %s11, 1
    %p97 = scmp.ne.s32.totalorder %s92, %s94
    %p98 = scmp.eq.s32.totalorder %s11, 0
    %p99 = por %p97, %p98
    %p100 = scmp.ne.s32.totalorder %s92, %s94
    %p101 = scmp.eq.s32.totalorder %s16, 1
    %p102 = por %p100, %p101
    %p103 = scmp.ne.s32.totalorder %s94, %s95
    %p104 = scmp.eq.s32.totalorder %s16, 0
    %p105 = por %p103, %p104
    %p106 = scmp.ne.s32.totalorder %s94, %s95
    %p107 = scmp.eq.s32.totalorder %s17, 1
    %p108 = por %p106, %p107
    %p110 = scmp.ne.s32.totalorder %s95, %s109
    %p111 = scmp.eq.s32.totalorder %s17, 0
    %p112 = por %p110, %p111
    %s114 = sadd.s32 %s113, 1
    %p117 = scmp.eq.s32.totalorder %s11, 1
    %p118 = scmp.ne.s32.totalorder %s113, %s115
    %p119 = scmp.eq.s32.totalorder %s11, 0
    %p120 = por %p118, %p119
    %p121 = scmp.ne.s32.totalorder %s113, %s115
    %p122 = scmp.eq.s32.totalorder %s16, 1
    %p123 = por %p121, %p122
    %p124 = scmp.ne.s32.totalorder %s115, %s116
    %p125 = scmp.eq.s32.totalorder %s16, 0
    %p126 = por %p124, %p125
    %p127 = scmp.ne.s32.totalorder %s115, %s116
    %p128 = scmp.eq.s32.totalorder %s17, 1
    %p129 = por %p127, %p128
    %p131 = scmp.ne.s32.totalorder %s116, %s130
    %p132 = scmp.eq.s32.totalorder %s17, 0
    %p133 = por %p131, %p132
    %p134 = scmp.le.s32.totalorder 1, %s11
    %p135 = scmp.lt.s32.totalorder %s11, 3
    %p136 = pnand %p134, %p135
    %p137 = pneg %p136
    // Predicated region
    $region9: #{down_conv_forward.10} parent=5 // pred_check
      _
    $region10: #{down_conv_forward.10} parent=5 // pred_check_branch
      %139 = sbr.rel (%p136) target = $region12
    $region11: #{down_conv_forward.10} parent=5 // pred_region
      %s140 = ssub.s32 %s11, 1
      // Predicated region
      $region13: #{down_conv_forward.10} parent=11 // pred_check
        %p141 = pneg %p58
      $region14: #{down_conv_forward.10} parent=11 // pred_check_branch
        %143 = sbr.rel (%p141) target = $region16
      $region15: #{down_conv_forward.10} parent=11 // pred_region
        _
      $region16: #{down_conv_forward.10} parent=11 // pred_fallthru
        _
    $region12: #{down_conv_forward.10} parent=5 // pred_fallthru
      _
    %p144 = scmp.lt.s32.totalorder %s11, 2
    // Predicated region
    $region17: #{down_conv_forward.10} parent=5 // pred_check
      %p145 = pneg %p144
    $region18: #{down_conv_forward.10} parent=5 // pred_check_branch
      %147 = sbr.rel (%p145) target = $region20
    $region19: #{down_conv_forward.10} parent=5 // pred_region
      // Predicated region
      $region21: #{down_conv_forward.10} parent=19 // pred_check
        %p148 = pneg %p31
      $region22: #{down_conv_forward.10} parent=19 // pred_check_branch
        %150 = sbr.rel (%p148) target = $region24
      $region23: #{down_conv_forward.10} parent=19 // pred_region
        %p151 = scmp.lt.s32.totalorder %s11, 1
        %s152 = scalar_select %p151, %s11, 1
        %s153 = smul.addr %s152, 18
        %s154 = smul.addr %s153, 8
        %s155 = scalar_lea.vmem %s0, %s154
      $region24: #{down_conv_forward.10} parent=19 // pred_fallthru
        _
    $region20: #{down_conv_forward.10} parent=5 // pred_fallthru
      _
    %p156 = scmp.le.s32.totalorder 1, %s11
    %p157 = scmp.lt.s32.totalorder %s11, 3
    %p158 = pnand %p156, %p157
    %p159 = pneg %p158
    // Predicated region
    $region25: #{down_conv_forward.10} parent=5 // pred_check
      _
    $region26: #{down_conv_forward.10} parent=5 // pred_check_branch
      %161 = sbr.rel (%p158) target = $region28
    $region27: #{down_conv_forward.10} parent=5 // pred_region
      %s162 = ssub.s32 %s11, 1
      %p163 = scmp.lt.s32.totalorder %s16, 1
      %s164 = scalar_select %p163, %s16, 1
      %s165 = smul.addr %s164, 18
      %s166 = smul.addr %s165, 8
      %s167 = scalar_lea.vmem %s0, %s166
      %p168 = pneg %p37
      %p169 = pneg %p34
      %p170 = pneg %p58
      %p171 = pneg %p55
      %p172 = pneg %p84
      %p173 = pneg %p81
      %p174 = scmp.lt.s32.totalorder %s16, 1
      %s175 = scalar_select %p174, %s16, 1
      %s176 = smul.addr %s175, 8
      %s177 = smul.addr %s176, 8
      %s178 = scalar_lea.vmem %s2, %s177
      %p179 = pneg %p105
      %p180 = pneg %p102
      %p181 = pneg %p126
      %p182 = pneg %p123
      %p183 = scmp.lt.s32.totalorder %s16, 1
      %s184 = scalar_select %p183, %s16, 1
      %s185 = smul.addr %s184, 18
      %s186 = smul.addr %s185, 8
      %s187 = scalar_lea.vmem %s0, %s186
      %p188 = scmp.lt.s32.totalorder %s16, 1
      %s189 = scalar_select %p188, %s16, 1
      %s190 = smul.addr %s189, 8
      %s191 = smul.addr %s190, 8
      %s192 = scalar_lea.vmem %s2, %s191
      %p193 = scmp.eq.s32.totalorder %s16, 0
      // Predicated region
      $region29: #{down_conv_forward.10} parent=27 // pred_check
        %p194 = pneg %p193
      $region30: #{down_conv_forward.10} parent=27 // pred_check_branch
        %196 = sbr.rel (%p194) target = $region32
      $region31: #{down_conv_forward.10} parent=27 // pred_region
        %197 = vst [vmem:[%s3] sm:$0x1] 0.0
        %198 = vst [vmem:[%s4] sm:$0x1] 0.0
      $region32: #{down_conv_forward.10} parent=27 // pred_fallthru
        _
      %v199 = vld [vmem:[%s187] sm:$0xff]
      %v200 = vld [vmem:[%s187 + $0x8] sm:$0x1]
      %v201 = vld [vmem:[%s187 + $0x10] sm:$0xff]
      %v202 = vld [vmem:[%s187 + $0x18] sm:$0x1]
      %v203 = vld [vmem:[%s187 + $0x20] sm:$0xff]
      %v204 = vld [vmem:[%s187 + $0x28] sm:$0x1]
      %v205 = vld [vmem:[%s187 + $0x30] sm:$0xff]
      %v206 = vld [vmem:[%s187 + $0x38] sm:$0x1]
      %v207 = vld [vmem:[%s187 + $0x40] sm:$0xff]
      %v208 = vld [vmem:[%s187 + $0x48] sm:$0x1]
      %v209 = vld [vmem:[%s187 + $0x50] sm:$0xff]
      %v210 = vld [vmem:[%s187 + $0x58] sm:$0x1]
      %v211 = vld [vmem:[%s187 + $0x60] sm:$0xff]
      %v212 = vld [vmem:[%s187 + $0x68] sm:$0x1]
      %v213 = vld [vmem:[%s187 + $0x70] sm:$0xff]
      %v214 = vld [vmem:[%s187 + $0x78] sm:$0x1]
      %v215 = vld [vmem:[%s187 + $0x80] sm:$0xff]
      %v216 = vld [vmem:[%s187 + $0x88] sm:$0x1]
      %v217 = vld [vmem:[%s1] sm:$0xff]
      %v218 = vld [vmem:[%s1 + $0x8] sm:$0xff]
      %vm235 = vcmask 1046528
      %v236 = vrot.slane %v199, 1
      %v237 = vrot.slane %v200, 1
      %v238 = vsel %vm235, %v236, %v237
      %v239 = vrot.slane %v201, 1
      %v240 = vrot.slane %v202, 1
      %v241 = vsel %vm235, %v239, %v240
      %v242 = vrot.slane %v203, 1
      %v243 = vrot.slane %v204, 1
      %v244 = vsel %vm235, %v242, %v243
      %v245 = vrot.slane %v205, 1
      %v246 = vrot.slane %v206, 1
      %v247 = vsel %vm235, %v245, %v246
      %v248 = vrot.slane %v207, 1
      %v249 = vrot.slane %v208, 1
      %v250 = vsel %vm235, %v248, %v249
      %v251 = vrot.slane %v209, 1
      %v252 = vrot.slane %v210, 1
      %v253 = vsel %vm235, %v251, %v252
      %v254 = vrot.slane %v211, 1
      %v255 = vrot.slane %v212, 1
      %v256 = vsel %vm235, %v254, %v255
      %v257 = vrot.slane %v213, 1
      %v258 = vrot.slane %v214, 1
      %v259 = vsel %vm235, %v257, %v258
      %s260 = scalar_lea.vmem %s1, 16
      %v261 = vld [vmem:[%s260] sm:$0xff]
      %v262 = vld [vmem:[%s260 + $0x8] sm:$0xff]
      %vm263 = vcmask 130048
      %v264 = vsel %vm263, %v238, 0
      %v266 = vsel %vm263, %v241, 0
      %v268 = vsel %vm263, %v244, 0
      %v270 = vsel %vm263, %v247, 0
      %v272 = vsel %vm263, %v250, 0
      %v274 = vsel %vm263, %v253, 0
      %v276 = vsel %vm263, %v256, 0
      %v278 = vsel %vm263, %v259, 0
      %280 = vmatprep.subr.mxu0 0.0
      %281 = vmatpush1.msra.mxu0 %v261
      %282 = vmatprep.subr.mxu0 0.0
      %283 = vmatpush1.msra.mxu0 %v262
      %284 = vmatprep.subr.mxu0 0.0
      %285 = vmatpush1.msra.mxu0 0.0
      %286 = vmatprep.subr.mxu0 0.0
      %287 = vmatpush1.msra.mxu0 0.0
      %288 = vmatprep.subr.mxu0 0.0
      %289 = vmatpush1.msra.mxu0 0.0
      %290 = vmatprep.subr.mxu0 0.0
      %291 = vmatpush1.msra.mxu0 0.0
      %292 = vmatprep.subr.mxu0 0.0
      %293 = vmatpush1.msra.mxu0 0.0
      %294 = vmatprep.subr.mxu0 0.0
      %295 = vmatpush1.msra.mxu0 0.0
      %296 = vmatprep.subr.mxu0 0.0
      %297 = vmatpush1.msra.mxu0 0.0
      %298 = vmatprep.subr.mxu0 0.0
      %299 = vmatpush1.msra.mxu0 0.0
      %300 = vmatprep.subr.mxu0 0.0
      %301 = vmatpush1.msra.mxu0 0.0
      %302 = vmatprep.subr.mxu0 0.0
      %303 = vmatpush1.msra.mxu0 0.0
      %304 = vmatprep.subr.mxu0 0.0
      %305 = vmatpush1.msra.mxu0 0.0
      %306 = vmatprep.subr.mxu0 0.0
      %307 = vmatpush1.msra.mxu0 0.0
      %308 = vmatprep.subr.mxu0 0.0
      %309 = vmatpush1.msra.mxu0 0.0
      %310 = vmatprep.subr.mxu0 0.0
      %311 = vmatpush1.msra.mxu0 0.0
      %312 = vmatprep.subr.mxu0 0.0
      %313 = vmatpush1.msra.mxu0 0.0
      %314 = vmatprep.subr.mxu0 0.0
      %315 = vmatpush1.msra.mxu0 0.0
      %316 = vmatprep.subr.mxu0 0.0
      %317 = vmatpush1.msra.mxu0 0.0
      %318 = vmatprep.subr.mxu0 0.0
      %319 = vmatpush1.msra.mxu0 0.0
      %320 = vmatprep.subr.mxu0 0.0
      %321 = vmatpush1.msra.mxu0 0.0
      %322 = vmatprep.subr.mxu0 0.0
      %323 = vmatpush1.msra.mxu0 0.0
      %324 = vmatprep.subr.mxu0 0.0
      %325 = vmatpush1.msra.mxu0 0.0
      %326 = vmatprep.subr.mxu0 0.0
      %327 = vmatpush1.msra.mxu0 0.0
      %328 = vmatprep.subr.mxu0 0.0
      %329 = vmatpush1.msra.mxu0 0.0
      %330 = vmatprep.subr.mxu0 0.0
      %331 = vmatpush1.msra.mxu0 0.0
      %332 = vmatprep.subr.mxu0 0.0
      %333 = vmatpush1.msra.mxu0 0.0
      %334 = vmatprep.subr.mxu0 0.0
      %335 = vmatpush1.msra.mxu0 0.0
      %336 = vmatprep.subr.mxu0 0.0
      %337 = vmatpush1.msra.mxu0 0.0
      %338 = vmatprep.subr.mxu0 0.0
      %339 = vmatpush1.msra.mxu0 0.0
      %340 = vmatprep.subr.mxu0 0.0
      %341 = vmatpush1.msra.mxu0 0.0
      %342 = vmatprep.subr.mxu0 0.0
      %343 = vmatpush1.msra.mxu0 0.0
      %344 = vmatprep.mubr.f32.mxu0 0.0
      %345 = vmatmul.mubr.f32.gmra.mrb[0].mxu0 %v264
      %v346 = vpop.f32.mrb[0].mxu0
      %v347 = vadd.f32 0.0, %v346
      %v348 = vpop.f32.mrb[0].mxu0
      %349 = vmatprep.mubr.f32.mxu0 0.0
      %350 = vmatmul.mubr.f32.gmra.mrb[0].mxu0 %v266
      %v351 = vpop.f32.mrb[0].mxu0
      %v352 = vadd.f32 0.0, %v351
      %v353 = vpop.f32.mrb[0].mxu0
      %354 = vmatprep.mubr.f32.mxu0 0.0
      %355 = vmatmul.mubr.f32.gmra.mrb[0].mxu0 %v268
      %v356 = vpop.f32.mrb[0].mxu0
      %v357 = vadd.f32 0.0, %v356
      %v358 = vpop.f32.mrb[0].mxu0
      %359 = vmatprep.mubr.f32.mxu0 0.0
      %360 = vmatmul.mubr.f32.gmra.mrb[0].mxu0 %v270
      %v361 = vpop.f32.mrb[0].mxu0
      %v362 = vadd.f32 0.0, %v361
      %v363 = vpop.f32.mrb[0].mxu0
      %364 = vmatprep.mubr.f32.mxu0 0.0
      %365 = vmatmul.mubr.f32.gmra.mrb[0].mxu0 %v272
      %v366 = vpop.f32.mrb[0].mxu0
      %v367 = vadd.f32 0.0, %v366
      %v368 = vpop.f32.mrb[0].mxu0
      %369 = vmatprep.mubr.f32.mxu0 0.0
      %370 = vmatmul.mubr.f32.gmra.mrb[0].mxu0 %v274
      %v371 = vpop.f32.mrb[0].mxu0
      %v372 = vadd.f32 0.0, %v371
      %v373 = vpop.f32.mrb[0].mxu0
      %374 = vmatprep.mubr.f32.mxu0 0.0
      %375 = vmatmul.mubr.f32.gmra.mrb[0].mxu0 %v276
      %v376 = vpop.f32.mrb[0].mxu0
      %v377 = vadd.f32 0.0, %v376
      %v378 = vpop.f32.mrb[0].mxu0
      %379 = vmatprep.mubr.f32.mxu0 0.0
      %380 = vmatmul.mubr.f32.gmra.mrb[0].mxu0 %v278
      %v381 = vpop.f32.mrb[0].mxu0
      %v382 = vadd.f32 0.0, %v381
      %v383 = vpop.f32.mrb[0].mxu0
      %384 = vdwg.mxu0
      %v385 = vsel %vm263, %v199, 0
      %v387 = vsel %vm263, %v201, 0
      %v389 = vsel %vm263, %v203, 0
      %v391 = vsel %vm263, %v205, 0
      %v393 = vsel %vm263, %v207, 0
      %v395 = vsel %vm263, %v209, 0
      %v397 = vsel %vm263, %v211, 0
      %v399 = vsel %vm263, %v213, 0
      %401 = vmatprep.subr.mxu0 0.0
      %402 = vmatpush1.msra.mxu0 %v217
      %403 = vmatprep.subr.mxu0 0.0
      %404 = vmatpush1.msra.mxu0 %v218
      %405 = vmatprep.subr.mxu0 0.0
      %406 = vmatpush1.msra.mxu0 0.0
      %407 = vmatprep.subr.mxu0 0.0
      %408 = vmatpush1.msra.mxu0 0.0
      %409 = vmatprep.subr.mxu0 0.0
      %410 = vmatpush1.msra.mxu0 0.0
      %411 = vmatprep.subr.mxu0 0.0
      %412 = vmatpush1.msra.mxu0 0.0
      %413 = vmatprep.subr.mxu0 0.0
      %414 = vmatpush1.msra.mxu0 0.0
      %415 = vmatprep.subr.mxu0 0.0
      %416 = vmatpush1.msra.mxu0 0.0
      %417 = vmatprep.subr.mxu0 0.0
      %418 = vmatpush1.msra.mxu0 0.0
      %419 = vmatprep.subr.mxu0 0.0
      %420 = vmatpush1.msra.mxu0 0.0
      %421 = vmatprep.subr.mxu0 0.0
      %422 = vmatpush1.msra.mxu0 0.0
      %423 = vmatprep.subr.mxu0 0.0
      %424 = vmatpush1.msra.mxu0 0.0
      %425 = vmatprep.subr.mxu0 0.0
      %426 = vmatpush1.msra.mxu0 0.0
      %427 = vmatprep.subr.mxu0 0.0
      %428 = vmatpush1.msra.mxu0 0.0
      %429 = vmatprep.subr.mxu0 0.0
      %430 = vmatpush1.msra.mxu0 0.0
      %431 = vmatprep.subr.mxu0 0.0
      %432 = vmatpush1.msra.mxu0 0.0
      %433 = vmatprep.subr.mxu0 0.0
      %434 = vmatpush1.msra.mxu0 0.0
      %435 = vmatprep.subr.mxu0 0.0
      %436 = vmatpush1.msra.mxu0 0.0
      %437 = vmatprep.subr.mxu0 0.0
      %438 = vmatpush1.msra.mxu0 0.0
      %439 = vmatprep.subr.mxu0 0.0
      %440 = vmatpush1.msra.mxu0 0.0
      %441 = vmatprep.subr.mxu0 0.0
      %442 = vmatpush1.msra.mxu0 0.0
      %443 = vmatprep.subr.mxu0 0.0
      %444 = vmatpush1.msra.mxu0 0.0
      %445 = vmatprep.subr.mxu0 0.0
      %446 = vmatpush1.msra.mxu0 0.0
      %447 = vmatprep.subr.mxu0 0.0
      %448 = vmatpush1.msra.mxu0 0.0
      %449 = vmatprep.subr.mxu0 0.0
      %450 = vmatpush1.msra.mxu0 0.0
      %451 = vmatprep.subr.mxu0 0.0
      %452 = vmatpush1.msra.mxu0 0.0
      %453 = vmatprep.subr.mxu0 0.0
      %454 = vmatpush1.msra.mxu0 0.0
      %455 = vmatprep.subr.mxu0 0.0
      %456 = vmatpush1.msra.mxu0 0.0
      %457 = vmatprep.subr.mxu0 0.0
      %458 = vmatpush1.msra.mxu0 0.0
      %459 = vmatprep.subr.mxu0 0.0
      %460 = vmatpush1.msra.mxu0 0.0
      %461 = vmatprep.subr.mxu0 0.0
      %462 = vmatpush1.msra.mxu0 0.0
      %463 = vmatprep.subr.mxu0 0.0
      %464 = vmatpush1.msra.mxu0 0.0
      %465 = vmatprep.mubr.f32.mxu0 0.0
      %466 = vmatmul.mubr.f32.gmra.mrb[0].mxu0 %v385
      %v467 = vpop.f32.mrb[0].mxu0
      %v468 = vadd.f32 %v347, %v467
      %v469 = vpop.f32.mrb[0].mxu0
      %470 = vmatprep.mubr.f32.mxu0 0.0
      %471 = vmatmul.mubr.f32.gmra.mrb[0].mxu0 %v387
      %v472 = vpop.f32.mrb[0].mxu0
      %v473 = vadd.f32 %v352, %v472
      %v474 = vpop.f32.mrb[0].mxu0
      %475 = vmatprep.mubr.f32.mxu0 0.0
      %476 = vmatmul.mubr.f32.gmra.mrb[0].mxu0 %v389
      %v477 = vpop.f32.mrb[0].mxu0
      %v478 = vadd.f32 %v357, %v477
      %v479 = vpop.f32.mrb[0].mxu0
      %480 = vmatprep.mubr.f32.mxu0 0.0
      %481 = vmatmul.mubr.f32.gmra.mrb[0].mxu0 %v391
      %v482 = vpop.f32.mrb[0].mxu0
      %v483 = vadd.f32 %v362, %v482
      %v484 = vpop.f32.mrb[0].mxu0
      %485 = vmatprep.mubr.f32.mxu0 0.0
      %486 = vmatmul.mubr.f32.gmra.mrb[0].mxu0 %v393
      %v487 = vpop.f32.mrb[0].mxu0
      %v488 = vadd.f32 %v367, %v487
      %v489 = vpop.f32.mrb[0].mxu0
      %490 = vmatprep.mubr.f32.mxu0 0.0
      %491 = vmatmul.mubr.f32.gmra.mrb[0].mxu0 %v395
      %v492 = vpop.f32.mrb[0].mxu0
      %v493 = vadd.f32 %v372, %v492
      %v494 = vpop.f32.mrb[0].mxu0
      %495 = vmatprep.mubr.f32.mxu0 0.0
      %496 = vmatmul.mubr.f32.gmra.mrb[0].mxu0 %v397
      %v497 = vpop.f32.mrb[0].mxu0
      %v498 = vadd.f32 %v377, %v497
      %v499 = vpop.f32.mrb[0].mxu0
      %500 = vmatprep.mubr.f32.mxu0 0.0
      %501 = vmatmul.mubr.f32.gmra.mrb[0].mxu0 %v399
      %v502 = vpop.f32.mrb[0].mxu0
      %v503 = vadd.f32 %v382, %v502
      %v504 = vpop.f32.mrb[0].mxu0
      %505 = vdwg.mxu0
      %s506 = scalar_lea.vmem %s1, 32
      %v507 = vld [vmem:[%s506] sm:$0xff]
      %v508 = vld [vmem:[%s506 + $0x8] sm:$0xff]
      %v510 = vsel %vm263, %v215, 0
      %512 = vmatprep.subr.mxu0 0.0
      %513 = vmatpush1.msra.mxu0 %v507
      %514 = vmatprep.subr.mxu0 0.0
      %515 = vmatpush1.msra.mxu0 %v508
      %516 = vmatprep.subr.mxu0 0.0
      %517 = vmatpush1.msra.mxu0 0.0
      %518 = vmatprep.subr.mxu0 0.0
      %519 = vmatpush1.msra.mxu0 0.0
      %520 = vmatprep.subr.mxu0 0.0
      %521 = vmatpush1.msra.mxu0 0.0
      %522 = vmatprep.subr.mxu0 0.0
      %523 = vmatpush1.msra.mxu0 0.0
      %524 = vmatprep.subr.mxu0 0.0
      %525 = vmatpush1.msra.mxu0 0.0
      %526 = vmatprep.subr.mxu0 0.0
      %527 = vmatpush1.msra.mxu0 0.0
      %528 = vmatprep.subr.mxu0 0.0
      %529 = vmatpush1.msra.mxu0 0.0
      %530 = vmatprep.subr.mxu0 0.0
      %531 = vmatpush1.msra.mxu0 0.0
      %532 = vmatprep.subr.mxu0 0.0
      %533 = vmatpush1.msra.mxu0 0.0
      %534 = vmatprep.subr.mxu0 0.0
      %535 = vmatpush1.msra.mxu0 0.0
      %536 = vmatprep.subr.mxu0 0.0
      %537 = vmatpush1.msra.mxu0 0.0
      %538 = vmatprep.subr.mxu0 0.0
      %539 = vmatpush1.msra.mxu0 0.0
      %540 = vmatprep.subr.mxu0 0.0
      %541 = vmatpush1.msra.mxu0 0.0
      %542 = vmatprep.subr.mxu0 0.0
      %543 = vmatpush1.msra.mxu0 0.0
      %544 = vmatprep.subr.mxu0 0.0
      %545 = vmatpush1.msra.mxu0 0.0
      %546 = vmatprep.subr.mxu0 0.0
      %547 = vmatpush1.msra.mxu0 0.0
      %548 = vmatprep.subr.mxu0 0.0
      %549 = vmatpush1.msra.mxu0 0.0
      %550 = vmatprep.subr.mxu0 0.0
      %551 = vmatpush1.msra.mxu0 0.0
      %552 = vmatprep.subr.mxu0 0.0
      %553 = vmatpush1.msra.mxu0 0.0
      %554 = vmatprep.subr.mxu0 0.0
      %555 = vmatpush1.msra.mxu0 0.0
      %556 = vmatprep.subr.mxu0 0.0
      %557 = vmatpush1.msra.mxu0 0.0
      %558 = vmatprep.subr.mxu0 0.0
      %559 = vmatpush1.msra.mxu0 0.0
      %560 = vmatprep.subr.mxu0 0.0
      %561 = vmatpush1.msra.mxu0 0.0
      %562 = vmatprep.subr.mxu0 0.0
      %563 = vmatpush1.msra.mxu0 0.0
      %564 = vmatprep.subr.mxu0 0.0
      %565 = vmatpush1.msra.mxu0 0.0
      %566 = vmatprep.subr.mxu0 0.0
      %567 = vmatpush1.msra.mxu0 0.0
      %568 = vmatprep.subr.mxu0 0.0
      %569 = vmatpush1.msra.mxu0 0.0
      %570 = vmatprep.subr.mxu0 0.0
      %571 = vmatpush1.msra.mxu0 0.0
      %572 = vmatprep.subr.mxu0 0.0
      %573 = vmatpush1.msra.mxu0 0.0
      %574 = vmatprep.subr.mxu0 0.0
      %575 = vmatpush1.msra.mxu0 0.0
      %576 = vmatprep.mubr.f32.mxu0 0.0
      %577 = vmatmul.mubr.f32.gmra.mrb[0].mxu0 %v387
      %v578 = vpop.f32.mrb[0].mxu0
      %v579 = vadd.f32 0.0, %v578
      %v580 = vpop.f32.mrb[0].mxu0
      %581 = vmatprep.mubr.f32.mxu0 0.0
      %582 = vmatmul.mubr.f32.gmra.mrb[0].mxu0 %v389
      %v583 = vpop.f32.mrb[0].mxu0
      %v584 = vadd.f32 0.0, %v583
      %v585 = vpop.f32.mrb[0].mxu0
      %586 = vmatprep.mubr.f32.mxu0 0.0
      %587 = vmatmul.mubr.f32.gmra.mrb[0].mxu0 %v391
      %v588 = vpop.f32.mrb[0].mxu0
      %v589 = vadd.f32 0.0, %v588
      %v590 = vpop.f32.mrb[0].mxu0
      %591 = vmatprep.mubr.f32.mxu0 0.0
      %592 = vmatmul.mubr.f32.gmra.mrb[0].mxu0 %v393
      %v593 = vpop.f32.mrb[0].mxu0
      %v594 = vadd.f32 0.0, %v593
      %v595 = vpop.f32.mrb[0].mxu0
      %596 = vmatprep.mubr.f32.mxu0 0.0
      %597 = vmatmul.mubr.f32.gmra.mrb[0].mxu0 %v395
      %v598 = vpop.f32.mrb[0].mxu0
      %v599 = vadd.f32 0.0, %v598
      %v600 = vpop.f32.mrb[0].mxu0
      %601 = vmatprep.mubr.f32.mxu0 0.0
      %602 = vmatmul.mubr.f32.gmra.mrb[0].mxu0 %v397
      %v603 = vpop.f32.mrb[0].mxu0
      %v604 = vadd.f32 0.0, %v603
      %v605 = vpop.f32.mrb[0].mxu0
      %606 = vmatprep.mubr.f32.mxu0 0.0
      %607 = vmatmul.mubr.f32.gmra.mrb[0].mxu0 %v399
      %v608 = vpop.f32.mrb[0].mxu0
      %v609 = vadd.f32 0.0, %v608
      %v610 = vpop.f32.mrb[0].mxu0
      %611 = vmatprep.mubr.f32.mxu0 0.0
      %612 = vmatmul.mubr.f32.gmra.mrb[0].mxu0 %v510
      %v613 = vpop.f32.mrb[0].mxu0
      %v614 = vadd.f32 0.0, %v613
      %v615 = vpop.f32.mrb[0].mxu0
      %616 = vdwg.mxu0
      %v617 = vadd.f32 %v468, %v579
      %v618 = vadd.f32 %v473, %v584
      %v619 = vadd.f32 %v478, %v589
      %v620 = vadd.f32 %v483, %v594
      %v621 = vadd.f32 %v488, %v599
      %v622 = vadd.f32 %v493, %v604
      %v623 = vadd.f32 %v498, %v609
      %v624 = vadd.f32 %v503, %v614
      %v626 = vrot.slane %v215, 1
      %v627 = vrot.slane %v216, 1
      %v628 = vsel %vm235, %v626, %v627
      %s629 = scalar_lea.vmem %s1, 48
      %v630 = vld [vmem:[%s629] sm:$0xff]
      %v631 = vld [vmem:[%s629 + $0x8] sm:$0xff]
      %v632 = vsel %vm263, %v628, 0
      %634 = vmatprep.subr.mxu0 0.0
      %635 = vmatpush1.msra.mxu0 %v630
      %636 = vmatprep.subr.mxu0 0.0
      %637 = vmatpush1.msra.mxu0 %v631
      %638 = vmatprep.subr.mxu0 0.0
      %639 = vmatpush1.msra.mxu0 0.0
      %640 = vmatprep.subr.mxu0 0.0
      %641 = vmatpush1.msra.mxu0 0.0
      %642 = vmatprep.subr.mxu0 0.0
      %643 = vmatpush1.msra.mxu0 0.0
      %644 = vmatprep.subr.mxu0 0.0
      %645 = vmatpush1.msra.mxu0 0.0
      %646 = vmatprep.subr.mxu0 0.0
      %647 = vmatpush1.msra.mxu0 0.0
      %648 = vmatprep.subr.mxu0 0.0
      %649 = vmatpush1.msra.mxu0 0.0
      %650 = vmatprep.subr.mxu0 0.0
      %651 = vmatpush1.msra.mxu0 0.0
      %652 = vmatprep.subr.mxu0 0.0
      %653 = vmatpush1.msra.mxu0 0.0
      %654 = vmatprep.subr.mxu0 0.0
      %655 = vmatpush1.msra.mxu0 0.0
      %656 = vmatprep.subr.mxu0 0.0
      %657 = vmatpush1.msra.mxu0 0.0
      %658 = vmatprep.subr.mxu0 0.0
      %659 = vmatpush1.msra.mxu0 0.0
      %660 = vmatprep.subr.mxu0 0.0
      %661 = vmatpush1.msra.mxu0 0.0
      %662 = vmatprep.subr.mxu0 0.0
      %663 = vmatpush1.msra.mxu0 0.0
      %664 = vmatprep.subr.mxu0 0.0
      %665 = vmatpush1.msra.mxu0 0.0
      %666 = vmatprep.subr.mxu0 0.0
      %667 = vmatpush1.msra.mxu0 0.0
      %668 = vmatprep.subr.mxu0 0.0
      %669 = vmatpush1.msra.mxu0 0.0
      %670 = vmatprep.subr.mxu0 0.0
      %671 = vmatpush1.msra.mxu0 0.0
      %672 = vmatprep.subr.mxu0 0.0
      %673 = vmatpush1.msra.mxu0 0.0
      %674 = vmatprep.subr.mxu0 0.0
      %675 = vmatpush1.msra.mxu0 0.0
      %676 = vmatprep.subr.mxu0 0.0
      %677 = vmatpush1.msra.mxu0 0.0
      %678 = vmatprep.subr.mxu0 0.0
      %679 = vmatpush1.msra.mxu0 0.0
      %680 = vmatprep.subr.mxu0 0.0
      %681 = vmatpush1.msra.mxu0 0.0
      %682 = vmatprep.subr.mxu0 0.0
      %683 = vmatpush1.msra.mxu0 0.0
      %684 = vmatprep.subr.mxu0 0.0
      %685 = vmatpush1.msra.mxu0 0.0
      %686 = vmatprep.subr.mxu0 0.0
      %687 = vmatpush1.msra.mxu0 0.0
      %688 = vmatprep.subr.mxu0 0.0
      %689 = vmatpush1.msra.mxu0 0.0
      %690 = vmatprep.subr.mxu0 0.0
      %691 = vmatpush1.msra.mxu0 0.0
      %692 = vmatprep.subr.mxu0 0.0
      %693 = vmatpush1.msra.mxu0 0.0
      %694 = vmatprep.subr.mxu0 0.0
      %695 = vmatpush1.msra.mxu0 0.0
      %696 = vmatprep.subr.mxu0 0.0
      %697 = vmatpush1.msra.mxu0 0.0
      %698 = vmatprep.mubr.f32.mxu0 0.0
      %699 = vmatmul.mubr.f32.gmra.mrb[0].mxu0 %v266
      %v700 = vpop.f32.mrb[0].mxu0
      %v701 = vadd.f32 0.0, %v700
      %v702 = vpop.f32.mrb[0].mxu0
      %703 = vmatprep.mubr.f32.mxu0 0.0
      %704 = vmatmul.mubr.f32.gmra.mrb[0].mxu0 %v268
      %v705 = vpop.f32.mrb[0].mxu0
      %v706 = vadd.f32 0.0, %v705
      %v707 = vpop.f32.mrb[0].mxu0
      %708 = vmatprep.mubr.f32.mxu0 0.0
      %709 = vmatmul.mubr.f32.gmra.mrb[0].mxu0 %v270
      %v710 = vpop.f32.mrb[0].mxu0
      %v711 = vadd.f32 0.0, %v710
      %v712 = vpop.f32.mrb[0].mxu0
      %713 = vmatprep.mubr.f32.mxu0 0.0
      %714 = vmatmul.mubr.f32.gmra.mrb[0].mxu0 %v272
      %v715 = vpop.f32.mrb[0].mxu0
      %v716 = vadd.f32 0.0, %v715
      %v717 = vpop.f32.mrb[0].mxu0
      %718 = vmatprep.mubr.f32.mxu0 0.0
      %719 = vmatmul.mubr.f32.gmra.mrb[0].mxu0 %v274
      %v720 = vpop.f32.mrb[0].mxu0
      %v721 = vadd.f32 0.0, %v720
      %v722 = vpop.f32.mrb[0].mxu0
      %723 = vmatprep.mubr.f32.mxu0 0.0
      %724 = vmatmul.mubr.f32.gmra.mrb[0].mxu0 %v276
      %v725 = vpop.f32.mrb[0].mxu0
      %v726 = vadd.f32 0.0, %v725
      %v727 = vpop.f32.mrb[0].mxu0
      %728 = vmatprep.mubr.f32.mxu0 0.0
      %729 = vmatmul.mubr.f32.gmra.mrb[0].mxu0 %v278
      %v730 = vpop.f32.mrb[0].mxu0
      %v731 = vadd.f32 0.0, %v730
      %v732 = vpop.f32.mrb[0].mxu0
      %733 = vmatprep.mubr.f32.mxu0 0.0
      %734 = vmatmul.mubr.f32.gmra.mrb[0].mxu0 %v632
      %v735 = vpop.f32.mrb[0].mxu0
      %v736 = vadd.f32 0.0, %v735
      %v737 = vpop.f32.mrb[0].mxu0
      %738 = vdwg.mxu0
      %v739 = vadd.f32 %v617, %v701
      %v740 = vadd.f32 %v618, %v706
      %v741 = vadd.f32 %v619, %v711
      %v742 = vadd.f32 %v620, %v716
      %v743 = vadd.f32 %v621, %v721
      %v744 = vadd.f32 %v622, %v726
      %v745 = vadd.f32 %v623, %v731
      %v746 = vadd.f32 %v624, %v736
      %747 = vst [vmem:[%s192] sm:$0xff] %v739
      %748 = vst [vmem:[%s192 + $0x8] sm:$0xff] %v740
      %749 = vst [vmem:[%s192 + $0x10] sm:$0xff] %v741
      %750 = vst [vmem:[%s192 + $0x18] sm:$0xff] %v742
      %751 = vst [vmem:[%s192 + $0x20] sm:$0xff] %v743
      %752 = vst [vmem:[%s192 + $0x28] sm:$0xff] %v744
      %753 = vst [vmem:[%s192 + $0x30] sm:$0xff] %v745
      %754 = vst [vmem:[%s192 + $0x38] sm:$0xff] %v746
      %v755 = vld [vmem:[%s3] sm:$0x1]
      %v756 = vadd.f32 %v739, %v740
      %v757 = vadd.f32 %v756, %v741
      %v758 = vadd.f32 %v757, %v742
      %v759 = vadd.f32 %v758, %v743
      %v760 = vadd.f32 %v759, %v744
      %v761 = vadd.f32 %v760, %v745
      %v762 = vadd.f32 %v761, %v746
      %v763 = vrot.slane %v762, 4
      %v764 = vadd.f32 %v762, %v763
      %v765 = vrot.slane %v764, 2
      %v766 = vadd.f32 %v764, %v765
      %v767 = vrot.slane %v766, 1
      %v768 = vadd.f32 %v766, %v767
      %v769 = vadd.f32 %v755, %v768
      %770 = vst [vmem:[%s3] sm:$0x1] %v769
      %v771 = vld [vmem:[%s4] sm:$0x1]
      %v772 = vmul.f32 %v739, %v739
      %v773 = vmul.f32 %v740, %v740
      %v774 = vmul.f32 %v741, %v741
      %v775 = vmul.f32 %v742, %v742
      %v776 = vmul.f32 %v743, %v743
      %v777 = vmul.f32 %v744, %v744
      %v778 = vmul.f32 %v745, %v745
      %v779 = vmul.f32 %v746, %v746
      %v780 = vadd.f32 %v772, %v773
      %v781 = vadd.f32 %v780, %v774
      %v782 = vadd.f32 %v781, %v775
      %v783 = vadd.f32 %v782, %v776
      %v784 = vadd.f32 %v783, %v777
      %v785 = vadd.f32 %v784, %v778
      %v786 = vadd.f32 %v785, %v779
      %v787 = vrot.slane %v786, 4
      %v788 = vadd.f32 %v786, %v787
      %v789 = vrot.slane %v788, 2
      %v790 = vadd.f32 %v788, %v789
      %v791 = vrot.slane %v790, 1
      %v792 = vadd.f32 %v790, %v791
      %v793 = vadd.f32 %v771, %v792
      %794 = vst [vmem:[%s4] sm:$0x1] %v793
      %p795 = scmp.lt.s32.totalorder %s16, 1
      %s796 = scalar_select %p795, %s16, 1
      %s797 = smul.addr %s796, 8
      %s798 = smul.addr %s797, 8
      %s799 = scalar_lea.vmem %s2, %s798
      // Predicated region
      $region33: #{down_conv_forward.10} parent=27 // pred_check
        %p800 = pneg %p81
      $region34: #{down_conv_forward.10} parent=27 // pred_check_branch
        %802 = sbr.rel (%p800) target = $region36
      $region35: #{down_conv_forward.10} parent=27 // pred_region
        _
      $region36: #{down_conv_forward.10} parent=27 // pred_fallthru
        _
      // Predicated region
      $region37: #{down_conv_forward.10} parent=27 // pred_check
        %p803 = pneg %p102
      $region38: #{down_conv_forward.10} parent=27 // pred_check_branch
        %805 = sbr.rel (%p803) target = $region40
      $region39: #{down_conv_forward.10} parent=27 // pred_region
        _
      $region40: #{down_conv_forward.10} parent=27 // pred_fallthru
        _
      // Predicated region
      $region41: #{down_conv_forward.10} parent=27 // pred_check
        %p806 = pneg %p123
      $region42: #{down_conv_forward.10} parent=27 // pred_check_branch
        %808 = sbr.rel (%p806) target = $region44
      $region43: #{down_conv_forward.10} parent=27 // pred_region
        _
      $region44: #{down_conv_forward.10} parent=27 // pred_fallthru
        _
      // Predicated region
      $region45: #{down_conv_forward.10} parent=27 // pred_check
        %p809 = pneg %p102
      $region46: #{down_conv_forward.10} parent=27 // pred_check_branch
        %811 = sbr.rel (%p809) target = $region48
      $region47: #{down_conv_forward.10} parent=27 // pred_region
        _
      $region48: #{down_conv_forward.10} parent=27 // pred_fallthru
        _
      // Predicated region
      $region49: #{down_conv_forward.10} parent=27 // pred_check
        %p812 = pneg %p123
      $region50: #{down_conv_forward.10} parent=27 // pred_check_branch
        %814 = sbr.rel (%p812) target = $region52
      $region51: #{down_conv_forward.10} parent=27 // pred_region
        _
      $region52: #{down_conv_forward.10} parent=27 // pred_fallthru
        _
    $region28: #{down_conv_forward.10} parent=5 // pred_fallthru
      _
    %p815 = scmp.le.s32.totalorder 2, %s11
    // Predicated region
    $region53: #{down_conv_forward.10} parent=5 // pred_check
      %p816 = pneg %p815
    $region54: #{down_conv_forward.10} parent=5 // pred_check_branch
      %818 = sbr.rel (%p816) target = $region56
    $region55: #{down_conv_forward.10} parent=5 // pred_region
      %s819 = ssub.s32 %s11, 2
      // Predicated region
      $region57: #{down_conv_forward.10} parent=55 // pred_check
        %p820 = pneg %p87
      $region58: #{down_conv_forward.10} parent=55 // pred_check_branch
        %822 = sbr.rel (%p820) target = $region60
      $region59: #{down_conv_forward.10} parent=55 // pred_region
        %p823 = scmp.lt.s32.totalorder %s17, 1
        %s824 = scalar_select %p823, %s17, 1
        %s825 = smul.addr %s824, 8
        %s826 = smul.addr %s825, 8
        %s827 = scalar_lea.vmem %s2, %s826
      $region60: #{down_conv_forward.10} parent=55 // pred_fallthru
        _
    $region56: #{down_conv_forward.10} parent=5 // pred_fallthru
      _
  $region6: #{down_conv_forward.10} parent=0 // loop_footer
    %s15 = sadd.s32 1, %s11
  $region7: #{down_conv_forward.10} parent=0 // loop_footer_branch
    %10 = sbr.rel target = $region3
  $region8: #{down_conv_forward.10} parent=0 // loop_exit
    _

// kernel: down_conv_forward.11
$region0: #{down_conv_forward.11}
  #allocation0 [shape = 'u32[]', space=smem, size = 0x4, offset = 0x4, fixed_abs, tag = 'smem constant byte address 0x4 - core index']
  #allocation1 [shape = 'u32[144,128]{1,0:T(1,128)}', space=vmem, size = 0x12000, scoped, tag = 'internal scratch']
  %s0 = inlined_call_operand.vmem [shape: f32[128,128], index: 0, kind: input, shape index: {}]
  %s1 = inlined_call_operand.vmem [shape: f32[1,128], index: 1, kind: input, shape index: {}]
  %s2 = inlined_call_operand.vmem [shape: f32[1,128], index: 2, kind: input, shape index: {}]
  %s3 = inlined_call_operand.vmem [shape: f32[128,128], index: 3, kind: output, shape index: {}]
  %s4 = sld [smem:[#allocation0]]
  $region22: #{down_conv_forward.11} parent=0
    _
  %s6 = ssub.s32 1, %s4
  %s7 = scalar_select 0, %s6, %s4
  // Predicated region
  $region2: #{down_conv_forward.11} parent=0 // pred_check
    _
  $region3: #{down_conv_forward.11} parent=0 // pred_check_branch
    %9 = sbr.rel (0) target = $region5
  $region4: #{down_conv_forward.11} parent=0 // pred_region
    _
  $region5: #{down_conv_forward.11} parent=0 // pred_fallthru
    _
  // Predicated region
  $region6: #{down_conv_forward.11} parent=0 // pred_check
    _
  $region7: #{down_conv_forward.11} parent=0 // pred_check_branch
    %11 = sbr.rel (0) target = $region9
  $region8: #{down_conv_forward.11} parent=0 // pred_region
    _
  $region9: #{down_conv_forward.11} parent=0 // pred_fallthru
    _
  // Predicated region
  $region10: #{down_conv_forward.11} parent=0 // pred_check
    _
  $region11: #{down_conv_forward.11} parent=0 // pred_check_branch
    %13 = sbr.rel (0) target = $region13
  $region12: #{down_conv_forward.11} parent=0 // pred_region
    _
  $region13: #{down_conv_forward.11} parent=0 // pred_fallthru
    _
  %v14 = vld [vmem:[%s0] sm:$0xff]
  %v15 = vld [vmem:[%s0 + $0x8] sm:$0xff]
  %v16 = vld [vmem:[%s0 + $0x10] sm:$0xff]
  %v17 = vld [vmem:[%s0 + $0x18] sm:$0xff]
  %v18 = vld [vmem:[%s0 + $0x20] sm:$0xff]
  %v19 = vld [vmem:[%s0 + $0x28] sm:$0xff]
  %v20 = vld [vmem:[%s0 + $0x30] sm:$0xff]
  %v21 = vld [vmem:[%s0 + $0x38] sm:$0xff]
  %v22 = vld [vmem:[%s0 + $0x40] sm:$0xff]
  %v23 = vld [vmem:[%s0 + $0x48] sm:$0xff]
  %v24 = vld [vmem:[%s0 + $0x50] sm:$0xff]
  %v25 = vld [vmem:[%s0 + $0x58] sm:$0xff]
  %v26 = vld [vmem:[%s0 + $0x60] sm:$0xff]
  %v27 = vld [vmem:[%s0 + $0x68] sm:$0xff]
  %v28 = vld [vmem:[%s0 + $0x70] sm:$0xff]
  %v29 = vld [vmem:[%s0 + $0x78] sm:$0xff]
  %v30 = vld [vmem:[%s1] sm:$0x1]
  %v32 = vlaneseq
  %v33 = vshrl.u32 %v32, 7
  %v34 = vsub.s32 0, %v33
  %v35 = vrot.slane %v30, %v34
  %v37 = vmul.f32 %v14, %v35
  %v38 = vmul.f32 %v15, %v35
  %v39 = vmul.f32 %v16, %v35
  %v40 = vmul.f32 %v17, %v35
  %v41 = vmul.f32 %v18, %v35
  %v42 = vmul.f32 %v19, %v35
  %v43 = vmul.f32 %v20, %v35
  %v44 = vmul.f32 %v21, %v35
  %v45 = vmul.f32 %v22, %v35
  %v46 = vmul.f32 %v23, %v35
  %v47 = vmul.f32 %v24, %v35
  %v48 = vmul.f32 %v25, %v35
  %v49 = vmul.f32 %v26, %v35
  %v50 = vmul.f32 %v27, %v35
  %v51 = vmul.f32 %v28, %v35
  %v52 = vmul.f32 %v29, %v35
  %v53 = vld [vmem:[%s2] sm:$0x1]
  %v55 = vlaneseq
  %v56 = vshrl.u32 %v55, 7
  %v57 = vsub.s32 0, %v56
  %v58 = vrot.slane %v53, %v57
  %v60 = vadd.f32 %v37, %v58
  %v61 = vadd.f32 %v38, %v58
  %v62 = vadd.f32 %v39, %v58
  %v63 = vadd.f32 %v40, %v58
  %v64 = vadd.f32 %v41, %v58
  %v65 = vadd.f32 %v42, %v58
  %v66 = vadd.f32 %v43, %v58
  %v67 = vadd.f32 %v44, %v58
  %v68 = vadd.f32 %v45, %v58
  %v69 = vadd.f32 %v46, %v58
  %v70 = vadd.f32 %v47, %v58
  %v71 = vadd.f32 %v48, %v58
  %v72 = vadd.f32 %v49, %v58
  %v73 = vadd.f32 %v50, %v58
  %v74 = vadd.f32 %v51, %v58
  %v75 = vadd.f32 %v52, %v58
  %v76 = vmax.f32 %v60, 0.0
  %v77 = vmax.f32 %v61, 0.0
  %v78 = vmax.f32 %v62, 0.0
  %v79 = vmax.f32 %v63, 0.0
  %v80 = vmax.f32 %v64, 0.0
  %v81 = vmax.f32 %v65, 0.0
  %v82 = vmax.f32 %v66, 0.0
  %v83 = vmax.f32 %v67, 0.0
  %v84 = vmax.f32 %v68, 0.0
  %v85 = vmax.f32 %v69, 0.0
  %v86 = vmax.f32 %v70, 0.0
  %v87 = vmax.f32 %v71, 0.0
  %v88 = vmax.f32 %v72, 0.0
  %v89 = vmax.f32 %v73, 0.0
  %v90 = vmax.f32 %v74, 0.0
  %v91 = vmax.f32 %v75, 0.0
  %92 = vst [vmem:[%s3] sm:$0xff] %v76
  %93 = vst [vmem:[%s3 + $0x8] sm:$0xff] %v77
  %94 = vst [vmem:[%s3 + $0x10] sm:$0xff] %v78
  %95 = vst [vmem:[%s3 + $0x18] sm:$0xff] %v79
  %96 = vst [vmem:[%s3 + $0x20] sm:$0xff] %v80
  %97 = vst [vmem:[%s3 + $0x28] sm:$0xff] %v81
  %98 = vst [vmem:[%s3 + $0x30] sm:$0xff] %v82
  %99 = vst [vmem:[%s3 + $0x38] sm:$0xff] %v83
  %100 = vst [vmem:[%s3 + $0x40] sm:$0xff] %v84
  %101 = vst [vmem:[%s3 + $0x48] sm:$0xff] %v85
  %102 = vst [vmem:[%s3 + $0x50] sm:$0xff] %v86
  %103 = vst [vmem:[%s3 + $0x58] sm:$0xff] %v87
  %104 = vst [vmem:[%s3 + $0x60] sm:$0xff] %v88
  %105 = vst [vmem:[%s3 + $0x68] sm:$0xff] %v89
  %106 = vst [vmem:[%s3 + $0x70] sm:$0xff] %v90
  %107 = vst [vmem:[%s3 + $0x78] sm:$0xff] %v91
  // Predicated region
  $region14: #{down_conv_forward.11} parent=0 // pred_check
    _
  $region15: #{down_conv_forward.11} parent=0 // pred_check_branch
    %109 = sbr.rel (0) target = $region17
  $region16: #{down_conv_forward.11} parent=0 // pred_region
    _
  $region17: #{down_conv_forward.11} parent=0 // pred_fallthru
    _
  // Predicated region
  $region18: #{down_conv_forward.11} parent=0 // pred_check
    _
  $region19: #{down_conv_forward.11} parent=0 // pred_check_branch
    %111 = sbr.rel (0) target = $region21
  $region20: #{down_conv_forward.11} parent=0 // pred_region
    _
  $region21: #{down_conv_forward.11} parent=0 // pred_fallthru
    _

</llo_original>
